<compile_context>
chip_gen: v6e
topology: v6e:2x2x1
jax: 0.10.0
libtpu: 0.0.40
codegen_flags: <defaults>
</compile_context>

<pallas_src>
import math
import functools

import jax
import jax.numpy as jnp
import numpy as np
from jax.experimental import pallas as pl
from jax.experimental.pallas import tpu as pltpu


# ----------------------------------------------------------------------------
# Small helpers
# ----------------------------------------------------------------------------
def _layernorm(v, g, b, eps=1e-5):
    mu = jnp.mean(v, axis=-1, keepdims=True)
    var = jnp.mean(jnp.square(v - mu), axis=-1, keepdims=True)
    return (v - mu) * jax.lax.rsqrt(var + eps) * g + b


def _const_spec(shape):
    """BlockSpec for an array that is fully resident (same block every step)."""
    zeros = (0,) * len(shape)
    return pl.BlockSpec(shape, lambda *_, _z=zeros: _z)


def make_pos_encoding(seq_len, d_model):
    """Mirror of PositionalEncoding.make_pos_encodng (interleaved sin/cos)."""
    d_half = d_model // 2
    f = np.power(10000.0, -2.0 * np.arange(d_half) / d_model)[None, :]
    p = np.arange(seq_len)[:, None]
    angle = p @ f
    pe = np.dstack((np.sin(angle), np.cos(angle))).reshape(seq_len, d_model)
    return jnp.asarray(pe, jnp.float32)


# ----------------------------------------------------------------------------
# Encoder layer kernel
# ----------------------------------------------------------------------------
def encoder_layer_kernel(x_ref,
                         wq_ref, bq_ref, wk_ref, bk_ref, wv_ref, bv_ref,
                         wo_ref, bo_ref,
                         g1_ref, be1_ref, g2_ref, be2_ref,
                         w1_ref, bf1_ref, w2_ref, bf2_ref,
                         o_ref, *, n_heads, d_k, tq):
    T = x_ref.shape[1]
    qi = pl.program_id(1)
    row0 = pl.multiple_of(qi * tq, tq)

    # ---- norm_1 over the full sequence (needed for K/V) ----
    x_all = x_ref[0].astype(jnp.float32)                     # (T, D)
    xn_all = _layernorm(x_all, g1_ref[...], be1_ref[...])
    xn_all_bf = xn_all.astype(jnp.bfloat16)

    # Full-width K / V projections: single (T, D) @ (D, D) bf16 MXU matmuls.
    k = jnp.dot(xn_all_bf, wk_ref[...],
                preferred_element_type=jnp.float32) + bk_ref[...]
    v = jnp.dot(xn_all_bf, wv_ref[...],
                preferred_element_type=jnp.float32) + bv_ref[...]

    # ---- query tile ----
    x_q = x_ref[0, pl.ds(row0, tq), :].astype(jnp.float32)   # (tq, D)
    xn_q = _layernorm(x_q, g1_ref[...], be1_ref[...])
    # 1/sqrt(d_k) is folded into wq / bq on the host.
    q = jnp.dot(xn_q.astype(jnp.bfloat16), wq_ref[...],
                preferred_element_type=jnp.float32) + bq_ref[...]

    # ---- causal multi-head self-attention ----
    rows = row0 + jax.lax.broadcasted_iota(jnp.int32, (tq, T), 0)
    cols = jax.lax.broadcasted_iota(jnp.int32, (tq, T), 1)
    allowed = rows >= cols           # causal: query i attends to keys j <= i

    # Per-head score/context matmuls use static lane slices of the full-width
    # Q/K/V; contexts are concatenated so the output projection is one
    # (tq, D) @ (D, D) matmul.  (For large n_heads switch this short unrolled
    # loop to a head-batched dot_general / lax.fori_loop to bound live ranges.)
    ctx_heads = []
    for h in range(n_heads):
        sl = slice(h * d_k, (h + 1) * d_k)
        qh = q[:, sl].astype(jnp.bfloat16)                   # (tq, d_k)
        kh = k[:, sl].astype(jnp.bfloat16)                   # (T,  d_k)
        vh = v[:, sl].astype(jnp.bfloat16)                   # (T,  d_k)
        s = jax.lax.dot_general(qh, kh, (((1,), (1,)), ((), ())),
                                preferred_element_type=jnp.float32)  # (tq, T)
        s = jnp.where(allowed, s, -1e9)      # masked_fill_(mask == 0, -1e9)
        m = jnp.max(s, axis=-1, keepdims=True)
        e = jnp.exp(s - m)
        p = e * pl.reciprocal(jnp.sum(e, axis=-1, keepdims=True), approx=True)
        ctx_heads.append(jnp.dot(p.astype(jnp.bfloat16), vh,
                                 preferred_element_type=jnp.float32))
    ctx = jnp.concatenate(ctx_heads, axis=-1).astype(jnp.bfloat16)   # (tq, D)

    attn = jnp.dot(ctx, wo_ref[...],
                   preferred_element_type=jnp.float32) + bo_ref[...]

    # ---- residual 1 (module adds attention to the *normed* x) + norm_2 ----
    x1 = xn_q + attn
    x2 = _layernorm(x1, g2_ref[...], be2_ref[...])

    # ---- position-wise feed-forward (full-width bf16 matmuls) ----
    h1 = jnp.dot(x2.astype(jnp.bfloat16), w1_ref[...],
                 preferred_element_type=jnp.float32) + bf1_ref[...]
    h1 = jnp.maximum(h1, 0.0)                                 # ReLU in f32
    ff = jnp.dot(h1.astype(jnp.bfloat16), w2_ref[...],
                 preferred_element_type=jnp.float32) + bf2_ref[...]

    # ---- residual 2 ----
    o_ref[0] = (x2 + ff).astype(o_ref.dtype)


def encoder_layer(x, lp, n_heads, tq):
    B, T, D = x.shape
    assert D % n_heads == 0 and T % tq == 0 and D % 128 == 0 and tq % 8 == 0
    d_k = D // n_heads
    d_ff = lp["w1"].shape[1]
    scale = 1.0 / math.sqrt(d_k)
    bf16 = jnp.bfloat16

    # Host-side glue: fold the attention scale into Wq/bq, cast weights to bf16
    # (halves weight DMA), reshape biases / norm params to lane-dense (1, D).
    wq = (lp["wq"] * scale).astype(bf16)
    bq = (lp["bq"] * scale).reshape(1, D)
    wk = lp["wk"].astype(bf16); bk = lp["bk"].reshape(1, D)
    wv = lp["wv"].astype(bf16); bv = lp["bv"].reshape(1, D)
    wo = lp["wo"].astype(bf16); bo = lp["bo"].reshape(1, D)
    g1 = lp["g1"].reshape(1, D); be1 = lp["be1"].reshape(1, D)
    g2 = lp["g2"].reshape(1, D); be2 = lp["be2"].reshape(1, D)
    w1 = lp["w1"].astype(bf16); bf1 = lp["bf1"].reshape(1, d_ff)
    w2 = lp["w2"].astype(bf16); bf2 = lp["bf2"].reshape(1, D)

    weights = (wq, bq, wk, bk, wv, bv, wo, bo,
               g1, be1, g2, be2, w1, bf1, w2, bf2)

    # Rough VMEM budget: double-buffered bf16 weights + f32 activation blocks
    # + in-kernel intermediates, with generous headroom, capped at 64 MiB.
    est = 2 * ((4 * D * D + 2 * D * d_ff) * 2 + (T * D + tq * D) * 4) \
        + (4 * T * D + tq * (2 * T + d_ff + 8 * D)) * 4
    vmem_limit = int(min(max(4 * est, 16 * 2 ** 20), 64 * 2 ** 20))

    kernel = functools.partial(encoder_layer_kernel,
                               n_heads=n_heads, d_k=d_k, tq=tq)
    return pl.pallas_call(
        kernel,
        out_shape=jax.ShapeDtypeStruct((B, T, D), x.dtype),
        grid_spec=pltpu.PrefetchScalarGridSpec(
            num_scalar_prefetch=0,
            grid=(B, T // tq),
            in_specs=[pl.BlockSpec((1, T, D), lambda b, qi: (b, 0, 0))]
                     + [_const_spec(w.shape) for w in weights],
            out_specs=pl.BlockSpec((1, tq, D), lambda b, qi: (b, qi, 0)),
        ),
        compiler_params=pltpu.CompilerParams(
            dimension_semantics=("parallel", "parallel"),
            vmem_limit_bytes=vmem_limit),
    )(x, *weights)


# ----------------------------------------------------------------------------
# Final LayerNorm + vocab projection kernel
# ----------------------------------------------------------------------------
def final_proj_kernel(x_ref, g_ref, b_ref, w_ref, bo_ref, o_ref):
    x = x_ref[0].astype(jnp.float32)                          # (tq, D)
    xn = _layernorm(x, g_ref[...], b_ref[...])
    logits = jnp.dot(xn.astype(jnp.bfloat16), w_ref[...],
                     preferred_element_type=jnp.float32) + bo_ref[...]
    o_ref[0] = logits.astype(o_ref.dtype)


def final_projection(x, params, tq):
    B, T, D = x.shape
    wout = params["wout"].astype(jnp.bfloat16)
    V = wout.shape[1]
    args = (x,
            params["gf"].reshape(1, D), params["bf"].reshape(1, D),
            wout, params["bout"].reshape(1, V))
    return pl.pallas_call(
        final_proj_kernel,
        out_shape=jax.ShapeDtypeStruct((B, T, V), jnp.float32),
        grid_spec=pltpu.PrefetchScalarGridSpec(
            num_scalar_prefetch=0,
            grid=(B, T // tq),
            in_specs=[pl.BlockSpec((1, tq, D), lambda b, qi: (b, qi, 0))]
                     + [_const_spec(a.shape) for a in args[1:]],
            out_specs=pl.BlockSpec((1, tq, V), lambda b, qi: (b, qi, 0)),
        ),
        compiler_params=pltpu.CompilerParams(
            dimension_semantics=("parallel", "parallel")),
    )(*args)


# ----------------------------------------------------------------------------
# Full model forward
# ----------------------------------------------------------------------------
def lm_transformer_forward(tokens, params, n_heads, tq):
    d_model = params["emb"].shape[1]
    seq_len = tokens.shape[1]
    # TODO(synk): token-embedding gather + positional-encoding add are left to
    # XLA (a scalar-prefetch pl.Element gather kernel could fuse them).
    x = params["emb"][tokens] / math.sqrt(d_model)
    x = x + params["pos"][None, :seq_len, :]
    for lp in params["layers"]:
        x = encoder_layer(x, lp, n_heads, tq)
    return final_projection(x, params, tq)


# ----------------------------------------------------------------------------
# Pure-JAX reference (mirror of the PyTorch forward, eval mode, f32)
# ----------------------------------------------------------------------------
def reference_forward(tokens, params, n_heads):
    D = params["emb"].shape[1]
    B, T = tokens.shape
    dk = D // n_heads

    def ln(v, g, b):
        mu = v.mean(-1, keepdims=True)
        var = ((v - mu) ** 2).mean(-1, keepdims=True)
        return (v - mu) / jnp.sqrt(var + 1e-5) * g + b

    x = params["emb"][tokens] / math.sqrt(D)
    x = x + params["pos"][None, :T, :]
    mask = jnp.tril(jnp.ones((T, T), dtype=bool))             # causal mask
    for lp in params["layers"]:
        xn = ln(x, lp["g1"], lp["be1"])
        q = xn @ lp["wq"] + lp["bq"]
        k = xn @ lp["wk"] + lp["bk"]
        v = xn @ lp["wv"] + lp["bv"]
        q = q.reshape(B, T, n_heads, dk).transpose(0, 2, 1, 3)
        k = k.reshape(B, T, n_heads, dk).transpose(0, 2, 1, 3)
        v = v.reshape(B, T, n_heads, dk).transpose(0, 2, 1, 3)
        s = (q @ k.transpose(0, 1, 3, 2)) / math.sqrt(dk)
        s = jnp.where(mask[None, None], s, -1e9)
        p = jax.nn.softmax(s, axis=-1)
        o = (p @ v).transpose(0, 2, 1, 3).reshape(B, T, D)
        attn = o @ lp["wo"] + lp["bo"]
        x1 = xn + attn
        x2 = ln(x1, lp["g2"], lp["be2"])
        ff = jnp.maximum(x2 @ lp["w1"] + lp["bf1"], 0.0) @ lp["w2"] + lp["bf2"]
        x = x2 + ff
    x = ln(x, params["gf"], params["bf"])
    return x @ params["wout"] + params["bout"]


# ----------------------------------------------------------------------------
# Parameter init (weights stored (in, out) so kernels compute x @ W + b)
# ----------------------------------------------------------------------------
def init_params(key, vocab, d_model, d_ff, n_layers, max_seq_len):
    keys = iter(jax.random.split(key, 10 * n_layers + 4))

    def xavier(shape):
        std = math.sqrt(2.0 / (shape[0] + shape[1]))
        return (std * jax.random.normal(next(keys), shape)).astype(jnp.float32)

    def small(shape):
        return (0.02 * jax.random.normal(next(keys), shape)).astype(jnp.float32)

    layers = []
    for _ in range(n_layers):
        layers.append({
            "wq": xavier((d_model, d_model)), "bq": small((d_model,)),
            "wk": xavier((d_model, d_model)), "bk": small((d_model,)),
            "wv": xavier((d_model, d_model)), "bv": small((d_model,)),
            "wo": xavier((d_model, d_model)), "bo": small((d_model,)),
            "g1": jnp.ones((d_model,), jnp.float32),
            "be1": jnp.zeros((d_model,), jnp.float32),
            "g2": jnp.ones((d_model,), jnp.float32),
            "be2": jnp.zeros((d_model,), jnp.float32),
            "w1": xavier((d_model, d_ff)),
            "bf1": jnp.zeros((d_ff,), jnp.float32),
            "w2": xavier((d_ff, d_model)),
            "bf2": jnp.zeros((d_model,), jnp.float32),
        })
    return {
        "emb": jax.random.normal(next(keys), (vocab, d_model), jnp.float32),
        "pos": make_pos_encoding(max_seq_len, d_model),
        "layers": layers,
        "gf": jnp.ones((d_model,), jnp.float32),
        "bf": jnp.zeros((d_model,), jnp.float32),
        "wout": xavier((d_model, vocab)),
        "bout": jnp.zeros((vocab,), jnp.float32),
    }


if __name__ == "__main__":
    # Small, lane-dense config consistent with the module
    # (module defaults d_model=512, 8 heads, 12 layers, d_ff=4*d_model).
    VOCAB, D_MODEL, N_HEADS, N_LAYERS = 256, 128, 4, 2
    D_FF = 4 * D_MODEL
    B, T, TQ = 2, 32, 16
    MAX_SEQ = 64

    key = jax.random.PRNGKey(0)
    kp, kt = jax.random.split(key)
    params = init_params(kp, VOCAB, D_MODEL, D_FF, N_LAYERS, MAX_SEQ)
    tokens = jax.random.randint(kt, (B, T), 0, VOCAB, dtype=jnp.int32)

    fwd = jax.jit(functools.partial(lm_transformer_forward,
                                    n_heads=N_HEADS, tq=TQ))
    logits = jax.block_until_ready(fwd(tokens, params))

    # Relaxed tolerance: kernel uses bf16 matmul operands (f32 accumulate) and
    # an approximate-reciprocal softmax; reference is pure f32.
    ref = reference_forward(tokens, params, N_HEADS)
    np.testing.assert_allclose(np.asarray(logits), np.asarray(ref),
                               rtol=5e-2, atol=1e-1)
    print("KERNEL_OK")
</pallas_src>

<mosaic_0001>
module attributes {stable_mosaic.version = 11 : i64} {
  func.func @encoder_layer_kernel(%arg0: i32, %arg1: i32, %arg2: memref<1x32x128xf32, #tpu.memory_space<vmem>>, %arg3: memref<128x128xbf16, #tpu.memory_space<vmem>>, %arg4: memref<1x128xf32, #tpu.memory_space<vmem>>, %arg5: memref<128x128xbf16, #tpu.memory_space<vmem>>, %arg6: memref<1x128xf32, #tpu.memory_space<vmem>>, %arg7: memref<128x128xbf16, #tpu.memory_space<vmem>>, %arg8: memref<1x128xf32, #tpu.memory_space<vmem>>, %arg9: memref<128x128xbf16, #tpu.memory_space<vmem>>, %arg10: memref<1x128xf32, #tpu.memory_space<vmem>>, %arg11: memref<1x128xf32, #tpu.memory_space<vmem>>, %arg12: memref<1x128xf32, #tpu.memory_space<vmem>>, %arg13: memref<1x128xf32, #tpu.memory_space<vmem>>, %arg14: memref<1x128xf32, #tpu.memory_space<vmem>>, %arg15: memref<128x512xbf16, #tpu.memory_space<vmem>>, %arg16: memref<1x512xf32, #tpu.memory_space<vmem>>, %arg17: memref<512x128xbf16, #tpu.memory_space<vmem>>, %arg18: memref<1x128xf32, #tpu.memory_space<vmem>>, %arg19: memref<1x16x128xf32, #tpu.memory_space<vmem>>) attributes {dimension_semantics = [#tpu.dimension_semantics<parallel>, #tpu.dimension_semantics<parallel>], iteration_bounds = array<i64: 2, 2>, scalar_prefetch = 0 : i64, scratch_operands = 0 : i64, tpu.core_type = #tpu.core_type<tc>, window_params = [{transform_indices = @transform_0, window_bounds = array<i64: 1, 32, 128>}, {pipeline_mode = #tpu.pipeline_mode<synchronous>, transform_indices = @transform_1, window_bounds = array<i64: 128, 128>}, {pipeline_mode = #tpu.pipeline_mode<synchronous>, transform_indices = @transform_2, window_bounds = array<i64: 1, 128>}, {pipeline_mode = #tpu.pipeline_mode<synchronous>, transform_indices = @transform_3, window_bounds = array<i64: 128, 128>}, {pipeline_mode = #tpu.pipeline_mode<synchronous>, transform_indices = @transform_4, window_bounds = array<i64: 1, 128>}, {pipeline_mode = #tpu.pipeline_mode<synchronous>, transform_indices = @transform_5, window_bounds = array<i64: 128, 128>}, {pipeline_mode = #tpu.pipeline_mode<synchronous>, transform_indices = @transform_6, window_bounds = array<i64: 1, 128>}, {pipeline_mode = #tpu.pipeline_mode<synchronous>, transform_indices = @transform_7, window_bounds = array<i64: 128, 128>}, {pipeline_mode = #tpu.pipeline_mode<synchronous>, transform_indices = @transform_8, window_bounds = array<i64: 1, 128>}, {pipeline_mode = #tpu.pipeline_mode<synchronous>, transform_indices = @transform_9, window_bounds = array<i64: 1, 128>}, {pipeline_mode = #tpu.pipeline_mode<synchronous>, transform_indices = @transform_10, window_bounds = array<i64: 1, 128>}, {pipeline_mode = #tpu.pipeline_mode<synchronous>, transform_indices = @transform_11, window_bounds = array<i64: 1, 128>}, {pipeline_mode = #tpu.pipeline_mode<synchronous>, transform_indices = @transform_12, window_bounds = array<i64: 1, 128>}, {pipeline_mode = #tpu.pipeline_mode<synchronous>, transform_indices = @transform_13, window_bounds = array<i64: 128, 512>}, {pipeline_mode = #tpu.pipeline_mode<synchronous>, transform_indices = @transform_14, window_bounds = array<i64: 1, 512>}, {pipeline_mode = #tpu.pipeline_mode<synchronous>, transform_indices = @transform_15, window_bounds = array<i64: 512, 128>}, {pipeline_mode = #tpu.pipeline_mode<synchronous>, transform_indices = @transform_16, window_bounds = array<i64: 1, 128>}, {transform_indices = @transform_17, window_bounds = array<i64: 1, 16, 128>}]} {
    %c16_i32 = arith.constant 16 : i32
    %0 = arith.muli %arg1, %c16_i32 : i32
    %1 = tpu.assume_multiple %0, 16 : i32
    %c0 = arith.constant 0 : index
    %c0_0 = arith.constant 0 : index
    %c0_1 = arith.constant 0 : index
    %2 = vector.load %arg2[%c0, %c0_0, %c0_1] : memref<1x32x128xf32, #tpu.memory_space<vmem>>, vector<1x32x128xf32>
    %3 = vector.shape_cast %2 : vector<1x32x128xf32> to vector<32x128xf32>
    %c0_2 = arith.constant 0 : index
    %c0_3 = arith.constant 0 : index
    %4 = vector.load %arg11[%c0_2, %c0_3] : memref<1x128xf32, #tpu.memory_space<vmem>>, vector<1x128xf32>
    %c0_4 = arith.constant 0 : index
    %c0_5 = arith.constant 0 : index
    %5 = vector.load %arg12[%c0_4, %c0_5] : memref<1x128xf32, #tpu.memory_space<vmem>>, vector<1x128xf32>
    %cst = arith.constant dense<0.000000e+00> : vector<32xf32>
    %6 = vector.multi_reduction <add>, %3, %cst [1] : vector<32x128xf32> to vector<32xf32>
    %7 = vector.shape_cast %6 : vector<32xf32> to vector<32x1xf32>
    %cst_6 = arith.constant 1.280000e+02 : f32
    %8 = vector.broadcast %cst_6 : f32 to vector<32x1xf32>
    %9 = arith.divf %7, %8 : vector<32x1xf32>
    %10 = vector.broadcast %9 : vector<32x1xf32> to vector<32x128xf32>
    %11 = arith.subf %3, %10 : vector<32x128xf32>
    %12 = arith.mulf %11, %11 : vector<32x128xf32>
    %cst_7 = arith.constant dense<0.000000e+00> : vector<32xf32>
    %13 = vector.multi_reduction <add>, %12, %cst_7 [1] : vector<32x128xf32> to vector<32xf32>
    %14 = vector.shape_cast %13 : vector<32xf32> to vector<32x1xf32>
    %cst_8 = arith.constant 1.280000e+02 : f32
    %15 = vector.broadcast %cst_8 : f32 to vector<32x1xf32>
    %16 = arith.divf %14, %15 : vector<32x1xf32>
    %17 = vector.broadcast %9 : vector<32x1xf32> to vector<32x128xf32>
    %18 = arith.subf %3, %17 : vector<32x128xf32>
    %cst_9 = arith.constant 9.99999974E-6 : f32
    %19 = vector.broadcast %cst_9 : f32 to vector<32x1xf32>
    %20 = arith.addf %16, %19 : vector<32x1xf32>
    %21 = math.rsqrt %20 : vector<32x1xf32>
    %22 = vector.broadcast %21 : vector<32x1xf32> to vector<32x128xf32>
    %23 = arith.mulf %18, %22 : vector<32x128xf32>
    %24 = vector.broadcast %4 : vector<1x128xf32> to vector<32x128xf32>
    %25 = arith.mulf %23, %24 : vector<32x128xf32>
    %26 = vector.broadcast %5 : vector<1x128xf32> to vector<32x128xf32>
    %27 = arith.addf %25, %26 : vector<32x128xf32>
    %28 = arith.truncf %27 : vector<32x128xf32> to vector<32x128xbf16>
    %c0_10 = arith.constant 0 : index
    %c0_11 = arith.constant 0 : index
    %29 = vector.load %arg5[%c0_10, %c0_11] : memref<128x128xbf16, #tpu.memory_space<vmem>>, vector<128x128xbf16>
    %cst_12 = arith.constant dense<0.000000e+00> : vector<32x128xf32>
    %30 = tpu.matmul %28, %29, %cst_12 {dimension_numbers = #tpu.dot_dimension_numbers<[1], [0], [0], [1], [0, 0, 1, 1], [], []>} : vector<32x128xbf16>, vector<128x128xbf16>, vector<32x128xf32> -> vector<32x128xf32>
    %c0_13 = arith.constant 0 : index
    %c0_14 = arith.constant 0 : index
    %31 = vector.load %arg6[%c0_13, %c0_14] : memref<1x128xf32, #tpu.memory_space<vmem>>, vector<1x128xf32>
    %32 = vector.broadcast %31 : vector<1x128xf32> to vector<32x128xf32>
    %33 = arith.addf %30, %32 : vector<32x128xf32>
    %c0_15 = arith.constant 0 : index
    %c0_16 = arith.constant 0 : index
    %34 = vector.load %arg7[%c0_15, %c0_16] : memref<128x128xbf16, #tpu.memory_space<vmem>>, vector<128x128xbf16>
    %cst_17 = arith.constant dense<0.000000e+00> : vector<32x128xf32>
    %35 = tpu.matmul %28, %34, %cst_17 {dimension_numbers = #tpu.dot_dimension_numbers<[1], [0], [0], [1], [0, 0, 1, 1], [], []>} : vector<32x128xbf16>, vector<128x128xbf16>, vector<32x128xf32> -> vector<32x128xf32>
    %c0_18 = arith.constant 0 : index
    %c0_19 = arith.constant 0 : index
    %36 = vector.load %arg8[%c0_18, %c0_19] : memref<1x128xf32, #tpu.memory_space<vmem>>, vector<1x128xf32>
    %37 = vector.broadcast %36 : vector<1x128xf32> to vector<32x128xf32>
    %38 = arith.addf %35, %37 : vector<32x128xf32>
    %c0_20 = arith.constant 0 : index
    %39 = arith.index_cast %1 : i32 to index
    %c0_21 = arith.constant 0 : index
    %40 = vector.load %arg2[%c0_20, %39, %c0_21] : memref<1x32x128xf32, #tpu.memory_space<vmem>>, vector<1x16x128xf32>
    %41 = vector.shape_cast %40 : vector<1x16x128xf32> to vector<16x128xf32>
    %c0_22 = arith.constant 0 : index
    %c0_23 = arith.constant 0 : index
    %42 = vector.load %arg11[%c0_22, %c0_23] : memref<1x128xf32, #tpu.memory_space<vmem>>, vector<1x128xf32>
    %c0_24 = arith.constant 0 : index
    %c0_25 = arith.constant 0 : index
    %43 = vector.load %arg12[%c0_24, %c0_25] : memref<1x128xf32, #tpu.memory_space<vmem>>, vector<1x128xf32>
    %cst_26 = arith.constant dense<0.000000e+00> : vector<16xf32>
    %44 = vector.multi_reduction <add>, %41, %cst_26 [1] : vector<16x128xf32> to vector<16xf32>
    %45 = vector.shape_cast %44 : vector<16xf32> to vector<16x1xf32>
    %cst_27 = arith.constant 1.280000e+02 : f32
    %46 = vector.broadcast %cst_27 : f32 to vector<16x1xf32>
    %47 = arith.divf %45, %46 : vector<16x1xf32>
    %48 = vector.broadcast %47 : vector<16x1xf32> to vector<16x128xf32>
    %49 = arith.subf %41, %48 : vector<16x128xf32>
    %50 = arith.mulf %49, %49 : vector<16x128xf32>
    %cst_28 = arith.constant dense<0.000000e+00> : vector<16xf32>
    %51 = vector.multi_reduction <add>, %50, %cst_28 [1] : vector<16x128xf32> to vector<16xf32>
    %52 = vector.shape_cast %51 : vector<16xf32> to vector<16x1xf32>
    %cst_29 = arith.constant 1.280000e+02 : f32
    %53 = vector.broadcast %cst_29 : f32 to vector<16x1xf32>
    %54 = arith.divf %52, %53 : vector<16x1xf32>
    %55 = vector.broadcast %47 : vector<16x1xf32> to vector<16x128xf32>
    %56 = arith.subf %41, %55 : vector<16x128xf32>
    %cst_30 = arith.constant 9.99999974E-6 : f32
    %57 = vector.broadcast %cst_30 : f32 to vector<16x1xf32>
    %58 = arith.addf %54, %57 : vector<16x1xf32>
    %59 = math.rsqrt %58 : vector<16x1xf32>
    %60 = vector.broadcast %59 : vector<16x1xf32> to vector<16x128xf32>
    %61 = arith.mulf %56, %60 : vector<16x128xf32>
    %62 = vector.broadcast %42 : vector<1x128xf32> to vector<16x128xf32>
    %63 = arith.mulf %61, %62 : vector<16x128xf32>
    %64 = vector.broadcast %43 : vector<1x128xf32> to vector<16x128xf32>
    %65 = arith.addf %63, %64 : vector<16x128xf32>
    %66 = arith.truncf %65 : vector<16x128xf32> to vector<16x128xbf16>
    %c0_31 = arith.constant 0 : index
    %c0_32 = arith.constant 0 : index
    %67 = vector.load %arg3[%c0_31, %c0_32] : memref<128x128xbf16, #tpu.memory_space<vmem>>, vector<128x128xbf16>
    %cst_33 = arith.constant dense<0.000000e+00> : vector<16x128xf32>
    %68 = tpu.matmul %66, %67, %cst_33 {dimension_numbers = #tpu.dot_dimension_numbers<[1], [0], [0], [1], [0, 0, 1, 1], [], []>} : vector<16x128xbf16>, vector<128x128xbf16>, vector<16x128xf32> -> vector<16x128xf32>
    %c0_34 = arith.constant 0 : index
    %c0_35 = arith.constant 0 : index
    %69 = vector.load %arg4[%c0_34, %c0_35] : memref<1x128xf32, #tpu.memory_space<vmem>>, vector<1x128xf32>
    %70 = vector.broadcast %69 : vector<1x128xf32> to vector<16x128xf32>
    %71 = arith.addf %68, %70 : vector<16x128xf32>
    %72 = tpu.iota {dimensions = array<i32: 0>} : vector<16x32xi32>
    %73 = vector.broadcast %1 : i32 to vector<16x32xi32>
    %74 = arith.addi %73, %72 : vector<16x32xi32>
    %75 = tpu.iota {dimensions = array<i32: 1>} : vector<16x32xi32>
    %76 = arith.cmpi sge, %74, %75 : vector<16x32xi32>
    %77 = vector.extract_strided_slice %71 {offsets = [0, 0], sizes = [16, 32], strides = [1, 1]} : vector<16x128xf32> to vector<16x32xf32>
    %78 = arith.truncf %77 : vector<16x32xf32> to vector<16x32xbf16>
    %79 = vector.extract_strided_slice %33 {offsets = [0, 0], sizes = [32, 32], strides = [1, 1]} : vector<32x128xf32> to vector<32x32xf32>
    %80 = arith.truncf %79 : vector<32x32xf32> to vector<32x32xbf16>
    %81 = vector.extract_strided_slice %38 {offsets = [0, 0], sizes = [32, 32], strides = [1, 1]} : vector<32x128xf32> to vector<32x32xf32>
    %82 = arith.truncf %81 : vector<32x32xf32> to vector<32x32xbf16>
    %cst_36 = arith.constant dense<0.000000e+00> : vector<16x32xf32>
    %83 = tpu.matmul %78, %80, %cst_36 {dimension_numbers = #tpu.dot_dimension_numbers<[1], [1], [0], [0], [0, 0, 1, 0], [], []>} : vector<16x32xbf16>, vector<32x32xbf16>, vector<16x32xf32> -> vector<16x32xf32>
    %cst_37 = arith.constant -1.000000e+09 : f32
    %84 = vector.broadcast %cst_37 : f32 to vector<16x32xf32>
    %85 = arith.select %76, %83, %84 : vector<16x32xi1>, vector<16x32xf32>
    %cst_38 = arith.constant dense<0xFF800000> : vector<16xf32>
    %86 = vector.multi_reduction <maximumf>, %85, %cst_38 [1] : vector<16x32xf32> to vector<16xf32>
    %87 = vector.shape_cast %86 : vector<16xf32> to vector<16x1xf32>
    %88 = vector.broadcast %87 : vector<16x1xf32> to vector<16x32xf32>
    %89 = arith.subf %85, %88 : vector<16x32xf32>
    %90 = math.exp %89 : vector<16x32xf32>
    %cst_39 = arith.constant dense<0.000000e+00> : vector<16xf32>
    %91 = vector.multi_reduction <add>, %90, %cst_39 [1] : vector<16x32xf32> to vector<16xf32>
    %92 = vector.shape_cast %91 : vector<16xf32> to vector<16x1xf32>
    %93 = tpu.reciprocal %92 {approx = true} : vector<16x1xf32> -> vector<16x1xf32>
    %94 = vector.broadcast %93 : vector<16x1xf32> to vector<16x32xf32>
    %95 = arith.mulf %90, %94 : vector<16x32xf32>
    %96 = arith.truncf %95 : vector<16x32xf32> to vector<16x32xbf16>
    %cst_40 = arith.constant dense<0.000000e+00> : vector<16x32xf32>
    %97 = tpu.matmul %96, %82, %cst_40 {dimension_numbers = #tpu.dot_dimension_numbers<[1], [0], [0], [1], [0, 0, 1, 1], [], []>} : vector<16x32xbf16>, vector<32x32xbf16>, vector<16x32xf32> -> vector<16x32xf32>
    %98 = vector.extract_strided_slice %71 {offsets = [0, 32], sizes = [16, 32], strides = [1, 1]} : vector<16x128xf32> to vector<16x32xf32>
    %99 = arith.truncf %98 : vector<16x32xf32> to vector<16x32xbf16>
    %100 = vector.extract_strided_slice %33 {offsets = [0, 32], sizes = [32, 32], strides = [1, 1]} : vector<32x128xf32> to vector<32x32xf32>
    %101 = arith.truncf %100 : vector<32x32xf32> to vector<32x32xbf16>
    %102 = vector.extract_strided_slice %38 {offsets = [0, 32], sizes = [32, 32], strides = [1, 1]} : vector<32x128xf32> to vector<32x32xf32>
    %103 = arith.truncf %102 : vector<32x32xf32> to vector<32x32xbf16>
    %cst_41 = arith.constant dense<0.000000e+00> : vector<16x32xf32>
    %104 = tpu.matmul %99, %101, %cst_41 {dimension_numbers = #tpu.dot_dimension_numbers<[1], [1], [0], [0], [0, 0, 1, 0], [], []>} : vector<16x32xbf16>, vector<32x32xbf16>, vector<16x32xf32> -> vector<16x32xf32>
    %cst_42 = arith.constant -1.000000e+09 : f32
    %105 = vector.broadcast %cst_42 : f32 to vector<16x32xf32>
    %106 = arith.select %76, %104, %105 : vector<16x32xi1>, vector<16x32xf32>
    %cst_43 = arith.constant dense<0xFF800000> : vector<16xf32>
    %107 = vector.multi_reduction <maximumf>, %106, %cst_43 [1] : vector<16x32xf32> to vector<16xf32>
    %108 = vector.shape_cast %107 : vector<16xf32> to vector<16x1xf32>
    %109 = vector.broadcast %108 : vector<16x1xf32> to vector<16x32xf32>
    %110 = arith.subf %106, %109 : vector<16x32xf32>
    %111 = math.exp %110 : vector<16x32xf32>
    %cst_44 = arith.constant dense<0.000000e+00> : vector<16xf32>
    %112 = vector.multi_reduction <add>, %111, %cst_44 [1] : vector<16x32xf32> to vector<16xf32>
    %113 = vector.shape_cast %112 : vector<16xf32> to vector<16x1xf32>
    %114 = tpu.reciprocal %113 {approx = true} : vector<16x1xf32> -> vector<16x1xf32>
    %115 = vector.broadcast %114 : vector<16x1xf32> to vector<16x32xf32>
    %116 = arith.mulf %111, %115 : vector<16x32xf32>
    %117 = arith.truncf %116 : vector<16x32xf32> to vector<16x32xbf16>
    %cst_45 = arith.constant dense<0.000000e+00> : vector<16x32xf32>
    %118 = tpu.matmul %117, %103, %cst_45 {dimension_numbers = #tpu.dot_dimension_numbers<[1], [0], [0], [1], [0, 0, 1, 1], [], []>} : vector<16x32xbf16>, vector<32x32xbf16>, vector<16x32xf32> -> vector<16x32xf32>
    %119 = vector.extract_strided_slice %71 {offsets = [0, 64], sizes = [16, 32], strides = [1, 1]} : vector<16x128xf32> to vector<16x32xf32>
    %120 = arith.truncf %119 : vector<16x32xf32> to vector<16x32xbf16>
    %121 = vector.extract_strided_slice %33 {offsets = [0, 64], sizes = [32, 32], strides = [1, 1]} : vector<32x128xf32> to vector<32x32xf32>
    %122 = arith.truncf %121 : vector<32x32xf32> to vector<32x32xbf16>
    %123 = vector.extract_strided_slice %38 {offsets = [0, 64], sizes = [32, 32], strides = [1, 1]} : vector<32x128xf32> to vector<32x32xf32>
    %124 = arith.truncf %123 : vector<32x32xf32> to vector<32x32xbf16>
    %cst_46 = arith.constant dense<0.000000e+00> : vector<16x32xf32>
    %125 = tpu.matmul %120, %122, %cst_46 {dimension_numbers = #tpu.dot_dimension_numbers<[1], [1], [0], [0], [0, 0, 1, 0], [], []>} : vector<16x32xbf16>, vector<32x32xbf16>, vector<16x32xf32> -> vector<16x32xf32>
    %cst_47 = arith.constant -1.000000e+09 : f32
    %126 = vector.broadcast %cst_47 : f32 to vector<16x32xf32>
    %127 = arith.select %76, %125, %126 : vector<16x32xi1>, vector<16x32xf32>
    %cst_48 = arith.constant dense<0xFF800000> : vector<16xf32>
    %128 = vector.multi_reduction <maximumf>, %127, %cst_48 [1] : vector<16x32xf32> to vector<16xf32>
    %129 = vector.shape_cast %128 : vector<16xf32> to vector<16x1xf32>
    %130 = vector.broadcast %129 : vector<16x1xf32> to vector<16x32xf32>
    %131 = arith.subf %127, %130 : vector<16x32xf32>
    %132 = math.exp %131 : vector<16x32xf32>
    %cst_49 = arith.constant dense<0.000000e+00> : vector<16xf32>
    %133 = vector.multi_reduction <add>, %132, %cst_49 [1] : vector<16x32xf32> to vector<16xf32>
    %134 = vector.shape_cast %133 : vector<16xf32> to vector<16x1xf32>
    %135 = tpu.reciprocal %134 {approx = true} : vector<16x1xf32> -> vector<16x1xf32>
    %136 = vector.broadcast %135 : vector<16x1xf32> to vector<16x32xf32>
    %137 = arith.mulf %132, %136 : vector<16x32xf32>
    %138 = arith.truncf %137 : vector<16x32xf32> to vector<16x32xbf16>
    %cst_50 = arith.constant dense<0.000000e+00> : vector<16x32xf32>
    %139 = tpu.matmul %138, %124, %cst_50 {dimension_numbers = #tpu.dot_dimension_numbers<[1], [0], [0], [1], [0, 0, 1, 1], [], []>} : vector<16x32xbf16>, vector<32x32xbf16>, vector<16x32xf32> -> vector<16x32xf32>
    %140 = vector.extract_strided_slice %71 {offsets = [0, 96], sizes = [16, 32], strides = [1, 1]} : vector<16x128xf32> to vector<16x32xf32>
    %141 = arith.truncf %140 : vector<16x32xf32> to vector<16x32xbf16>
    %142 = vector.extract_strided_slice %33 {offsets = [0, 96], sizes = [32, 32], strides = [1, 1]} : vector<32x128xf32> to vector<32x32xf32>
    %143 = arith.truncf %142 : vector<32x32xf32> to vector<32x32xbf16>
    %144 = vector.extract_strided_slice %38 {offsets = [0, 96], sizes = [32, 32], strides = [1, 1]} : vector<32x128xf32> to vector<32x32xf32>
    %145 = arith.truncf %144 : vector<32x32xf32> to vector<32x32xbf16>
    %cst_51 = arith.constant dense<0.000000e+00> : vector<16x32xf32>
    %146 = tpu.matmul %141, %143, %cst_51 {dimension_numbers = #tpu.dot_dimension_numbers<[1], [1], [0], [0], [0, 0, 1, 0], [], []>} : vector<16x32xbf16>, vector<32x32xbf16>, vector<16x32xf32> -> vector<16x32xf32>
    %cst_52 = arith.constant -1.000000e+09 : f32
    %147 = vector.broadcast %cst_52 : f32 to vector<16x32xf32>
    %148 = arith.select %76, %146, %147 : vector<16x32xi1>, vector<16x32xf32>
    %cst_53 = arith.constant dense<0xFF800000> : vector<16xf32>
    %149 = vector.multi_reduction <maximumf>, %148, %cst_53 [1] : vector<16x32xf32> to vector<16xf32>
    %150 = vector.shape_cast %149 : vector<16xf32> to vector<16x1xf32>
    %151 = vector.broadcast %150 : vector<16x1xf32> to vector<16x32xf32>
    %152 = arith.subf %148, %151 : vector<16x32xf32>
    %153 = math.exp %152 : vector<16x32xf32>
    %cst_54 = arith.constant dense<0.000000e+00> : vector<16xf32>
    %154 = vector.multi_reduction <add>, %153, %cst_54 [1] : vector<16x32xf32> to vector<16xf32>
    %155 = vector.shape_cast %154 : vector<16xf32> to vector<16x1xf32>
    %156 = tpu.reciprocal %155 {approx = true} : vector<16x1xf32> -> vector<16x1xf32>
    %157 = vector.broadcast %156 : vector<16x1xf32> to vector<16x32xf32>
    %158 = arith.mulf %153, %157 : vector<16x32xf32>
    %159 = arith.truncf %158 : vector<16x32xf32> to vector<16x32xbf16>
    %cst_55 = arith.constant dense<0.000000e+00> : vector<16x32xf32>
    %160 = tpu.matmul %159, %145, %cst_55 {dimension_numbers = #tpu.dot_dimension_numbers<[1], [0], [0], [1], [0, 0, 1, 1], [], []>} : vector<16x32xbf16>, vector<32x32xbf16>, vector<16x32xf32> -> vector<16x32xf32>
    %161 = tpu.concatenate %97, %118, %139, %160 in 1 : vector<16x32xf32>, vector<16x32xf32>, vector<16x32xf32>, vector<16x32xf32> -> vector<16x128xf32>
    %162 = arith.truncf %161 : vector<16x128xf32> to vector<16x128xbf16>
    %c0_56 = arith.constant 0 : index
    %c0_57 = arith.constant 0 : index
    %163 = vector.load %arg9[%c0_56, %c0_57] : memref<128x128xbf16, #tpu.memory_space<vmem>>, vector<128x128xbf16>
    %cst_58 = arith.constant dense<0.000000e+00> : vector<16x128xf32>
    %164 = tpu.matmul %162, %163, %cst_58 {dimension_numbers = #tpu.dot_dimension_numbers<[1], [0], [0], [1], [0, 0, 1, 1], [], []>} : vector<16x128xbf16>, vector<128x128xbf16>, vector<16x128xf32> -> vector<16x128xf32>
    %c0_59 = arith.constant 0 : index
    %c0_60 = arith.constant 0 : index
    %165 = vector.load %arg10[%c0_59, %c0_60] : memref<1x128xf32, #tpu.memory_space<vmem>>, vector<1x128xf32>
    %166 = vector.broadcast %165 : vector<1x128xf32> to vector<16x128xf32>
    %167 = arith.addf %164, %166 : vector<16x128xf32>
    %168 = arith.addf %65, %167 : vector<16x128xf32>
    %c0_61 = arith.constant 0 : index
    %c0_62 = arith.constant 0 : index
    %169 = vector.load %arg13[%c0_61, %c0_62] : memref<1x128xf32, #tpu.memory_space<vmem>>, vector<1x128xf32>
    %c0_63 = arith.constant 0 : index
    %c0_64 = arith.constant 0 : index
    %170 = vector.load %arg14[%c0_63, %c0_64] : memref<1x128xf32, #tpu.memory_space<vmem>>, vector<1x128xf32>
    %cst_65 = arith.constant dense<0.000000e+00> : vector<16xf32>
    %171 = vector.multi_reduction <add>, %168, %cst_65 [1] : vector<16x128xf32> to vector<16xf32>
    %172 = vector.shape_cast %171 : vector<16xf32> to vector<16x1xf32>
    %cst_66 = arith.constant 1.280000e+02 : f32
    %173 = vector.broadcast %cst_66 : f32 to vector<16x1xf32>
    %174 = arith.divf %172, %173 : vector<16x1xf32>
    %175 = vector.broadcast %174 : vector<16x1xf32> to vector<16x128xf32>
    %176 = arith.subf %168, %175 : vector<16x128xf32>
    %177 = arith.mulf %176, %176 : vector<16x128xf32>
    %cst_67 = arith.constant dense<0.000000e+00> : vector<16xf32>
    %178 = vector.multi_reduction <add>, %177, %cst_67 [1] : vector<16x128xf32> to vector<16xf32>
    %179 = vector.shape_cast %178 : vector<16xf32> to vector<16x1xf32>
    %cst_68 = arith.constant 1.280000e+02 : f32
    %180 = vector.broadcast %cst_68 : f32 to vector<16x1xf32>
    %181 = arith.divf %179, %180 : vector<16x1xf32>
    %182 = vector.broadcast %174 : vector<16x1xf32> to vector<16x128xf32>
    %183 = arith.subf %168, %182 : vector<16x128xf32>
    %cst_69 = arith.constant 9.99999974E-6 : f32
    %184 = vector.broadcast %cst_69 : f32 to vector<16x1xf32>
    %185 = arith.addf %181, %184 : vector<16x1xf32>
    %186 = math.rsqrt %185 : vector<16x1xf32>
    %187 = vector.broadcast %186 : vector<16x1xf32> to vector<16x128xf32>
    %188 = arith.mulf %183, %187 : vector<16x128xf32>
    %189 = vector.broadcast %169 : vector<1x128xf32> to vector<16x128xf32>
    %190 = arith.mulf %188, %189 : vector<16x128xf32>
    %191 = vector.broadcast %170 : vector<1x128xf32> to vector<16x128xf32>
    %192 = arith.addf %190, %191 : vector<16x128xf32>
    %193 = arith.truncf %192 : vector<16x128xf32> to vector<16x128xbf16>
    %c0_70 = arith.constant 0 : index
    %c0_71 = arith.constant 0 : index
    %194 = vector.load %arg15[%c0_70, %c0_71] : memref<128x512xbf16, #tpu.memory_space<vmem>>, vector<128x512xbf16>
    %cst_72 = arith.constant dense<0.000000e+00> : vector<16x512xf32>
    %195 = tpu.matmul %193, %194, %cst_72 {dimension_numbers = #tpu.dot_dimension_numbers<[1], [0], [0], [1], [0, 0, 1, 1], [], []>} : vector<16x128xbf16>, vector<128x512xbf16>, vector<16x512xf32> -> vector<16x512xf32>
    %c0_73 = arith.constant 0 : index
    %c0_74 = arith.constant 0 : index
    %196 = vector.load %arg16[%c0_73, %c0_74] : memref<1x512xf32, #tpu.memory_space<vmem>>, vector<1x512xf32>
    %197 = vector.broadcast %196 : vector<1x512xf32> to vector<16x512xf32>
    %198 = arith.addf %195, %197 : vector<16x512xf32>
    %cst_75 = arith.constant 0.000000e+00 : f32
    %199 = vector.broadcast %cst_75 : f32 to vector<16x512xf32>
    %200 = arith.maximumf %198, %199 : vector<16x512xf32>
    %201 = arith.truncf %200 : vector<16x512xf32> to vector<16x512xbf16>
    %c0_76 = arith.constant 0 : index
    %c0_77 = arith.constant 0 : index
    %202 = vector.load %arg17[%c0_76, %c0_77] : memref<512x128xbf16, #tpu.memory_space<vmem>>, vector<512x128xbf16>
    %cst_78 = arith.constant dense<0.000000e+00> : vector<16x128xf32>
    %203 = tpu.matmul %201, %202, %cst_78 {dimension_numbers = #tpu.dot_dimension_numbers<[1], [0], [0], [1], [0, 0, 1, 1], [], []>} : vector<16x512xbf16>, vector<512x128xbf16>, vector<16x128xf32> -> vector<16x128xf32>
    %c0_79 = arith.constant 0 : index
    %c0_80 = arith.constant 0 : index
    %204 = vector.load %arg18[%c0_79, %c0_80] : memref<1x128xf32, #tpu.memory_space<vmem>>, vector<1x128xf32>
    %205 = vector.broadcast %204 : vector<1x128xf32> to vector<16x128xf32>
    %206 = arith.addf %203, %205 : vector<16x128xf32>
    %207 = arith.addf %192, %206 : vector<16x128xf32>
    %c0_81 = arith.constant 0 : index
    %c0_82 = arith.constant 0 : index
    %c0_83 = arith.constant 0 : index
    %208 = vector.load %arg19[%c0_81, %c0_82, %c0_83] : memref<1x16x128xf32, #tpu.memory_space<vmem>>, vector<1x16x128xf32>
    %209 = vector.shape_cast %208 : vector<1x16x128xf32> to vector<16x128xf32>
    %210 = vector.shape_cast %207 : vector<16x128xf32> to vector<1x16x128xf32>
    tpu.vector_store %arg19[%c0_81, %c0_82, %c0_83], %210 {strides = array<i32>} : memref<1x16x128xf32, #tpu.memory_space<vmem>>, vector<1x16x128xf32>,
    return
  }
  func.func @transform_0(%arg0: i32, %arg1: i32) -> (i32, i32, i32) {
    %c0_i32 = arith.constant 0 : i32
    %c0_i32_0 = arith.constant 0 : i32
    %c0_i32_1 = arith.constant 0 : i32
    return %arg0, %c0_i32, %c0_i32_0 : i32, i32, i32
  }
  func.func @transform_1(%arg0: i32, %arg1: i32) -> (i32, i32) {
    %c0_i32 = arith.constant 0 : i32
    %c0_i32_0 = arith.constant 0 : i32
    %c0_i32_1 = arith.constant 0 : i32
    return %c0_i32, %c0_i32_0 : i32, i32
  }
  func.func @transform_2(%arg0: i32, %arg1: i32) -> (i32, i32) {
    %c0_i32 = arith.constant 0 : i32
    %c0_i32_0 = arith.constant 0 : i32
    %c0_i32_1 = arith.constant 0 : i32
    return %c0_i32, %c0_i32_0 : i32, i32
  }
  func.func @transform_3(%arg0: i32, %arg1: i32) -> (i32, i32) {
    %c0_i32 = arith.constant 0 : i32
    %c0_i32_0 = arith.constant 0 : i32
    %c0_i32_1 = arith.constant 0 : i32
    return %c0_i32, %c0_i32_0 : i32, i32
  }
  func.func @transform_4(%arg0: i32, %arg1: i32) -> (i32, i32) {
    %c0_i32 = arith.constant 0 : i32
    %c0_i32_0 = arith.constant 0 : i32
    %c0_i32_1 = arith.constant 0 : i32
    return %c0_i32, %c0_i32_0 : i32, i32
  }
  func.func @transform_5(%arg0: i32, %arg1: i32) -> (i32, i32) {
    %c0_i32 = arith.constant 0 : i32
    %c0_i32_0 = arith.constant 0 : i32
    %c0_i32_1 = arith.constant 0 : i32
    return %c0_i32, %c0_i32_0 : i32, i32
  }
  func.func @transform_6(%arg0: i32, %arg1: i32) -> (i32, i32) {
    %c0_i32 = arith.constant 0 : i32
    %c0_i32_0 = arith.constant 0 : i32
    %c0_i32_1 = arith.constant 0 : i32
    return %c0_i32, %c0_i32_0 : i32, i32
  }
  func.func @transform_7(%arg0: i32, %arg1: i32) -> (i32, i32) {
    %c0_i32 = arith.constant 0 : i32
    %c0_i32_0 = arith.constant 0 : i32
    %c0_i32_1 = arith.constant 0 : i32
    return %c0_i32, %c0_i32_0 : i32, i32
  }
  func.func @transform_8(%arg0: i32, %arg1: i32) -> (i32, i32) {
    %c0_i32 = arith.constant 0 : i32
    %c0_i32_0 = arith.constant 0 : i32
    %c0_i32_1 = arith.constant 0 : i32
    return %c0_i32, %c0_i32_0 : i32, i32
  }
  func.func @transform_9(%arg0: i32, %arg1: i32) -> (i32, i32) {
    %c0_i32 = arith.constant 0 : i32
    %c0_i32_0 = arith.constant 0 : i32
    %c0_i32_1 = arith.constant 0 : i32
    return %c0_i32, %c0_i32_0 : i32, i32
  }
  func.func @transform_10(%arg0: i32, %arg1: i32) -> (i32, i32) {
    %c0_i32 = arith.constant 0 : i32
    %c0_i32_0 = arith.constant 0 : i32
    %c0_i32_1 = arith.constant 0 : i32
    return %c0_i32, %c0_i32_0 : i32, i32
  }
  func.func @transform_11(%arg0: i32, %arg1: i32) -> (i32, i32) {
    %c0_i32 = arith.constant 0 : i32
    %c0_i32_0 = arith.constant 0 : i32
    %c0_i32_1 = arith.constant 0 : i32
    return %c0_i32, %c0_i32_0 : i32, i32
  }
  func.func @transform_12(%arg0: i32, %arg1: i32) -> (i32, i32) {
    %c0_i32 = arith.constant 0 : i32
    %c0_i32_0 = arith.constant 0 : i32
    %c0_i32_1 = arith.constant 0 : i32
    return %c0_i32, %c0_i32_0 : i32, i32
  }
  func.func @transform_13(%arg0: i32, %arg1: i32) -> (i32, i32) {
    %c0_i32 = arith.constant 0 : i32
    %c0_i32_0 = arith.constant 0 : i32
    %c0_i32_1 = arith.constant 0 : i32
    return %c0_i32, %c0_i32_0 : i32, i32
  }
  func.func @transform_14(%arg0: i32, %arg1: i32) -> (i32, i32) {
    %c0_i32 = arith.constant 0 : i32
    %c0_i32_0 = arith.constant 0 : i32
    %c0_i32_1 = arith.constant 0 : i32
    return %c0_i32, %c0_i32_0 : i32, i32
  }
  func.func @transform_15(%arg0: i32, %arg1: i32) -> (i32, i32) {
    %c0_i32 = arith.constant 0 : i32
    %c0_i32_0 = arith.constant 0 : i32
    %c0_i32_1 = arith.constant 0 : i32
    return %c0_i32, %c0_i32_0 : i32, i32
  }
  func.func @transform_16(%arg0: i32, %arg1: i32) -> (i32, i32) {
    %c0_i32 = arith.constant 0 : i32
    %c0_i32_0 = arith.constant 0 : i32
    %c0_i32_1 = arith.constant 0 : i32
    return %c0_i32, %c0_i32_0 : i32, i32
  }
  func.func @transform_17(%arg0: i32, %arg1: i32) -> (i32, i32, i32) {
    %c0_i32 = arith.constant 0 : i32
    %c0_i32_0 = arith.constant 0 : i32
    return %arg0, %arg1, %c0_i32 : i32, i32, i32
  }
}

module attributes {stable_mosaic.version = 11 : i64} {
  func.func @final_proj_kernel(%arg0: i32, %arg1: i32, %arg2: memref<1x16x128xf32, #tpu.memory_space<vmem>>, %arg3: memref<1x128xf32, #tpu.memory_space<vmem>>, %arg4: memref<1x128xf32, #tpu.memory_space<vmem>>, %arg5: memref<128x256xbf16, #tpu.memory_space<vmem>>, %arg6: memref<1x256xf32, #tpu.memory_space<vmem>>, %arg7: memref<1x16x256xf32, #tpu.memory_space<vmem>>) attributes {dimension_semantics = [#tpu.dimension_semantics<parallel>, #tpu.dimension_semantics<parallel>], iteration_bounds = array<i64: 2, 2>, scalar_prefetch = 0 : i64, scratch_operands = 0 : i64, tpu.core_type = #tpu.core_type<tc>, window_params = [{transform_indices = @transform_0, window_bounds = array<i64: 1, 16, 128>}, {pipeline_mode = #tpu.pipeline_mode<synchronous>, transform_indices = @transform_1, window_bounds = array<i64: 1, 128>}, {pipeline_mode = #tpu.pipeline_mode<synchronous>, transform_indices = @transform_2, window_bounds = array<i64: 1, 128>}, {pipeline_mode = #tpu.pipeline_mode<synchronous>, transform_indices = @transform_3, window_bounds = array<i64: 128, 256>}, {pipeline_mode = #tpu.pipeline_mode<synchronous>, transform_indices = @transform_4, window_bounds = array<i64: 1, 256>}, {transform_indices = @transform_5, window_bounds = array<i64: 1, 16, 256>}]} {
    %c0 = arith.constant 0 : index
    %c0_0 = arith.constant 0 : index
    %c0_1 = arith.constant 0 : index
    %0 = vector.load %arg2[%c0, %c0_0, %c0_1] : memref<1x16x128xf32, #tpu.memory_space<vmem>>, vector<1x16x128xf32>
    %1 = vector.shape_cast %0 : vector<1x16x128xf32> to vector<16x128xf32>
    %c0_2 = arith.constant 0 : index
    %c0_3 = arith.constant 0 : index
    %2 = vector.load %arg3[%c0_2, %c0_3] : memref<1x128xf32, #tpu.memory_space<vmem>>, vector<1x128xf32>
    %c0_4 = arith.constant 0 : index
    %c0_5 = arith.constant 0 : index
    %3 = vector.load %arg4[%c0_4, %c0_5] : memref<1x128xf32, #tpu.memory_space<vmem>>, vector<1x128xf32>
    %cst = arith.constant dense<0.000000e+00> : vector<16xf32>
    %4 = vector.multi_reduction <add>, %1, %cst [1] : vector<16x128xf32> to vector<16xf32>
    %5 = vector.shape_cast %4 : vector<16xf32> to vector<16x1xf32>
    %cst_6 = arith.constant 1.280000e+02 : f32
    %6 = vector.broadcast %cst_6 : f32 to vector<16x1xf32>
    %7 = arith.divf %5, %6 : vector<16x1xf32>
    %8 = vector.broadcast %7 : vector<16x1xf32> to vector<16x128xf32>
    %9 = arith.subf %1, %8 : vector<16x128xf32>
    %10 = arith.mulf %9, %9 : vector<16x128xf32>
    %cst_7 = arith.constant dense<0.000000e+00> : vector<16xf32>
    %11 = vector.multi_reduction <add>, %10, %cst_7 [1] : vector<16x128xf32> to vector<16xf32>
    %12 = vector.shape_cast %11 : vector<16xf32> to vector<16x1xf32>
    %cst_8 = arith.constant 1.280000e+02 : f32
    %13 = vector.broadcast %cst_8 : f32 to vector<16x1xf32>
    %14 = arith.divf %12, %13 : vector<16x1xf32>
    %15 = vector.broadcast %7 : vector<16x1xf32> to vector<16x128xf32>
    %16 = arith.subf %1, %15 : vector<16x128xf32>
    %cst_9 = arith.constant 9.99999974E-6 : f32
    %17 = vector.broadcast %cst_9 : f32 to vector<16x1xf32>
    %18 = arith.addf %14, %17 : vector<16x1xf32>
    %19 = math.rsqrt %18 : vector<16x1xf32>
    %20 = vector.broadcast %19 : vector<16x1xf32> to vector<16x128xf32>
    %21 = arith.mulf %16, %20 : vector<16x128xf32>
    %22 = vector.broadcast %2 : vector<1x128xf32> to vector<16x128xf32>
    %23 = arith.mulf %21, %22 : vector<16x128xf32>
    %24 = vector.broadcast %3 : vector<1x128xf32> to vector<16x128xf32>
    %25 = arith.addf %23, %24 : vector<16x128xf32>
    %26 = arith.truncf %25 : vector<16x128xf32> to vector<16x128xbf16>
    %c0_10 = arith.constant 0 : index
    %c0_11 = arith.constant 0 : index
    %27 = vector.load %arg5[%c0_10, %c0_11] : memref<128x256xbf16, #tpu.memory_space<vmem>>, vector<128x256xbf16>
    %cst_12 = arith.constant dense<0.000000e+00> : vector<16x256xf32>
    %28 = tpu.matmul %26, %27, %cst_12 {dimension_numbers = #tpu.dot_dimension_numbers<[1], [0], [0], [1], [0, 0, 1, 1], [], []>} : vector<16x128xbf16>, vector<128x256xbf16>, vector<16x256xf32> -> vector<16x256xf32>
    %c0_13 = arith.constant 0 : index
    %c0_14 = arith.constant 0 : index
    %29 = vector.load %arg6[%c0_13, %c0_14] : memref<1x256xf32, #tpu.memory_space<vmem>>, vector<1x256xf32>
    %30 = vector.broadcast %29 : vector<1x256xf32> to vector<16x256xf32>
    %31 = arith.addf %28, %30 : vector<16x256xf32>
    %c0_15 = arith.constant 0 : index
    %c0_16 = arith.constant 0 : index
    %c0_17 = arith.constant 0 : index
    %32 = vector.load %arg7[%c0_15, %c0_16, %c0_17] : memref<1x16x256xf32, #tpu.memory_space<vmem>>, vector<1x16x256xf32>
    %33 = vector.shape_cast %32 : vector<1x16x256xf32> to vector<16x256xf32>
    %34 = vector.shape_cast %31 : vector<16x256xf32> to vector<1x16x256xf32>
    tpu.vector_store %arg7[%c0_15, %c0_16, %c0_17], %34 {strides = array<i32>} : memref<1x16x256xf32, #tpu.memory_space<vmem>>, vector<1x16x256xf32>,
    return
  }
  func.func @transform_0(%arg0: i32, %arg1: i32) -> (i32, i32, i32) {
    %c0_i32 = arith.constant 0 : i32
    %c0_i32_0 = arith.constant 0 : i32
    return %arg0, %arg1, %c0_i32 : i32, i32, i32
  }
  func.func @transform_1(%arg0: i32, %arg1: i32) -> (i32, i32) {
    %c0_i32 = arith.constant 0 : i32
    %c0_i32_0 = arith.constant 0 : i32
    %c0_i32_1 = arith.constant 0 : i32
    return %c0_i32, %c0_i32_0 : i32, i32
  }
  func.func @transform_2(%arg0: i32, %arg1: i32) -> (i32, i32) {
    %c0_i32 = arith.constant 0 : i32
    %c0_i32_0 = arith.constant 0 : i32
    %c0_i32_1 = arith.constant 0 : i32
    return %c0_i32, %c0_i32_0 : i32, i32
  }
  func.func @transform_3(%arg0: i32, %arg1: i32) -> (i32, i32) {
    %c0_i32 = arith.constant 0 : i32
    %c0_i32_0 = arith.constant 0 : i32
    %c0_i32_1 = arith.constant 0 : i32
    return %c0_i32, %c0_i32_0 : i32, i32
  }
  func.func @transform_4(%arg0: i32, %arg1: i32) -> (i32, i32) {
    %c0_i32 = arith.constant 0 : i32
    %c0_i32_0 = arith.constant 0 : i32
    %c0_i32_1 = arith.constant 0 : i32
    return %c0_i32, %c0_i32_0 : i32, i32
  }
  func.func @transform_5(%arg0: i32, %arg1: i32) -> (i32, i32, i32) {
    %c0_i32 = arith.constant 0 : i32
    %c0_i32_0 = arith.constant 0 : i32
    return %arg0, %arg1, %c0_i32 : i32, i32, i32
  }
}

</mosaic_0001>

<llo_original>
// kernel: lm_transformer_forward.5
$region0: #{lm_transformer_forward.5}
  #allocation0 [shape = 'u32[]', space=smem, size = 0x4, offset = 0x4, fixed_abs, tag = 'smem constant byte address 0x4 - core index']
  #allocation1 [shape = 'u32[144,128]{1,0:T(1,128)}', space=vmem, size = 0x12000, scoped, tag = 'internal scratch']
  %s0 = inlined_call_operand.vmem [shape: f32[2,32,128], index: 0, kind: input, shape index: {}]
  %s1 = inlined_call_operand.vmem [shape: f32[1,128], index: 1, kind: input, shape index: {}]
  %s2 = inlined_call_operand.vmem [shape: f32[1,128], index: 2, kind: input, shape index: {}]
  %s3 = inlined_call_operand.vmem [shape: bf16[128,256], index: 3, kind: input, shape index: {}]
  %s4 = inlined_call_operand.vmem [shape: f32[1,256], index: 4, kind: input, shape index: {}]
  %s5 = inlined_call_operand.hbm [shape: f32[2,32,256], index: 5, kind: output, shape index: {}]
  %s6 = sld [smem:[#allocation0]]
  $region53: #{lm_transformer_forward.5} parent=0
    _
  %s8 = ssub.s32 1, %s6
  %s9 = scalar_select 0, %s8, %s6
  $region1: #{lm_transformer_forward.5} parent=0
    #allocation2 [shape = 'u8[32768]{0}', space=vmem, size = 0x8000, scoped, tag = 'output window, operand 0']
    #allocation3 [shape = 's32[2]{0}', space=sflag, size = 0x8, scoped, tag = 'scoped memory for lm_transformer_forward.5']
    %10 = vsyncpa [#allocation3], 0
    %s11 = scalar_lea.sflag [#allocation3], 1
    %12 = vsyncpa %s11, 0
    loop: start=0, step=1, limit=6
    $region2: #{lm_transformer_forward.5} parent=1 // loop_pre_header
      _
    $region3: #{lm_transformer_forward.5} parent=1 // loop_header
      %s14 = sphi 0, %s18
      %p15 = scmp.ge.s32.totalorder %s14, 6
      %s21 = sphi 0, %s33
      %s22 = sphi 0, %s29
      %s23 = sphi 0, %s21
      %s24 = sphi 0, %s22
      %s25 = sphi 0, %s23
      %s26 = sphi 0, %s24
      %s38 = sphi 0, %s40
      %s41 = sphi 0, %s38
      %s42 = sphi 0, %s41
      %s58 = sphi 0, %s42
      %s62 = sphi 0, %s62
      %s64 = sphi 0, %s62
      %s65 = sphi 0, %s64
      %s79 = sphi 0, %s65
      %s83 = sphi 0, %s83
      %s85 = sphi 0, %s83
      %s86 = sphi 0, %s85
      %s100 = sphi 0, %s86
      %s104 = sphi 0, %s104
      %s106 = sphi 0, %s104
      %s107 = sphi 0, %s106
      %s121 = sphi 0, %s107
      %s125 = sphi 0, %s125
      %s127 = sphi 0, %s125
      %s128 = sphi 0, %s127
      %s142 = sphi 0, %s128
      %s150 = sphi 0, %s152
      %s153 = sphi 0, %s150
      %s154 = sphi 0, %s153
      %s170 = sphi 0, %s154
    $region4: #{lm_transformer_forward.5} parent=1 // loop_header_branch
      %17 = sbr.rel (%p15) target = $region8
    $region5: #{lm_transformer_forward.5} parent=1 // loop_body
      %s19 = ssub.s32 %s14, 1
      %s20 = ssub.s32 %s14, 2
      %s27 = sadd.s32 1, %s22
      %p28 = scmp.ge.s32.totalorder %s27, 2
      %s29 = scalar_select %p28, 0, %s27
      %s30 = sadd.s32 1, %s21
      %s31 = scalar_select %p28, %s30, %s21
      %p32 = scmp.ge.s32.totalorder %s31, 2
      %s33 = scalar_select %p32, 0, %s31
      %s34 = ssub.s32 %s21, %s33
      %s35 = ssub.s32 %s22, %s29
      %s36 = sor.u32 %s34, %s35
      %p37 = scmp.eq.s32.totalorder %s36, 0
      %s39 = sadd.s32 %s38, 1
      %s40 = scalar_select %p37, %s38, %s39
      %p43 = pneg %p37
      %p44 = scmp.eq.s32.totalorder %s14, 3
      %p45 = por %p43, %p44
      %p46 = scmp.ne.s32.totalorder %s38, %s41
      %p47 = scmp.eq.s32.totalorder %s14, 0
      %p48 = por %p46, %p47
      %p49 = scmp.ne.s32.totalorder %s38, %s41
      %p50 = scmp.eq.s32.totalorder %s19, 3
      %p51 = por %p49, %p50
      %p52 = scmp.ne.s32.totalorder %s41, %s42
      %p53 = scmp.eq.s32.totalorder %s19, 0
      %p54 = por %p52, %p53
      %p55 = scmp.ne.s32.totalorder %s41, %s42
      %p56 = scmp.eq.s32.totalorder %s20, 3
      %p57 = por %p55, %p56
      %p59 = scmp.ne.s32.totalorder %s42, %s58
      %p60 = scmp.eq.s32.totalorder %s20, 0
      %p61 = por %p59, %p60
      %s63 = sadd.s32 %s62, 1
      %p66 = scmp.eq.s32.totalorder %s14, 3
      %p67 = scmp.ne.s32.totalorder %s62, %s64
      %p68 = scmp.eq.s32.totalorder %s14, 0
      %p69 = por %p67, %p68
      %p70 = scmp.ne.s32.totalorder %s62, %s64
      %p71 = scmp.eq.s32.totalorder %s19, 3
      %p72 = por %p70, %p71
      %p73 = scmp.ne.s32.totalorder %s64, %s65
      %p74 = scmp.eq.s32.totalorder %s19, 0
      %p75 = por %p73, %p74
      %p76 = scmp.ne.s32.totalorder %s64, %s65
      %p77 = scmp.eq.s32.totalorder %s20, 3
      %p78 = por %p76, %p77
      %p80 = scmp.ne.s32.totalorder %s65, %s79
      %p81 = scmp.eq.s32.totalorder %s20, 0
      %p82 = por %p80, %p81
      %s84 = sadd.s32 %s83, 1
      %p87 = scmp.eq.s32.totalorder %s14, 3
      %p88 = scmp.ne.s32.totalorder %s83, %s85
      %p89 = scmp.eq.s32.totalorder %s14, 0
      %p90 = por %p88, %p89
      %p91 = scmp.ne.s32.totalorder %s83, %s85
      %p92 = scmp.eq.s32.totalorder %s19, 3
      %p93 = por %p91, %p92
      %p94 = scmp.ne.s32.totalorder %s85, %s86
      %p95 = scmp.eq.s32.totalorder %s19, 0
      %p96 = por %p94, %p95
      %p97 = scmp.ne.s32.totalorder %s85, %s86
      %p98 = scmp.eq.s32.totalorder %s20, 3
      %p99 = por %p97, %p98
      %p101 = scmp.ne.s32.totalorder %s86, %s100
      %p102 = scmp.eq.s32.totalorder %s20, 0
      %p103 = por %p101, %p102
      %s105 = sadd.s32 %s104, 1
      %p108 = scmp.eq.s32.totalorder %s14, 3
      %p109 = scmp.ne.s32.totalorder %s104, %s106
      %p110 = scmp.eq.s32.totalorder %s14, 0
      %p111 = por %p109, %p110
      %p112 = scmp.ne.s32.totalorder %s104, %s106
      %p113 = scmp.eq.s32.totalorder %s19, 3
      %p114 = por %p112, %p113
      %p115 = scmp.ne.s32.totalorder %s106, %s107
      %p116 = scmp.eq.s32.totalorder %s19, 0
      %p117 = por %p115, %p116
      %p118 = scmp.ne.s32.totalorder %s106, %s107
      %p119 = scmp.eq.s32.totalorder %s20, 3
      %p120 = por %p118, %p119
      %p122 = scmp.ne.s32.totalorder %s107, %s121
      %p123 = scmp.eq.s32.totalorder %s20, 0
      %p124 = por %p122, %p123
      %s126 = sadd.s32 %s125, 1
      %p129 = scmp.eq.s32.totalorder %s14, 3
      %p130 = scmp.ne.s32.totalorder %s125, %s127
      %p131 = scmp.eq.s32.totalorder %s14, 0
      %p132 = por %p130, %p131
      %p133 = scmp.ne.s32.totalorder %s125, %s127
      %p134 = scmp.eq.s32.totalorder %s19, 3
      %p135 = por %p133, %p134
      %p136 = scmp.ne.s32.totalorder %s127, %s128
      %p137 = scmp.eq.s32.totalorder %s19, 0
      %p138 = por %p136, %p137
      %p139 = scmp.ne.s32.totalorder %s127, %s128
      %p140 = scmp.eq.s32.totalorder %s20, 3
      %p141 = por %p139, %p140
      %p143 = scmp.ne.s32.totalorder %s128, %s142
      %p144 = scmp.eq.s32.totalorder %s20, 0
      %p145 = por %p143, %p144
      %s146 = ssub.s32 %s21, %s33
      %s147 = ssub.s32 %s22, %s29
      %s148 = sor.u32 %s146, %s147
      %p149 = scmp.eq.s32.totalorder %s148, 0
      %s151 = sadd.s32 %s150, 1
      %s152 = scalar_select %p149, %s150, %s151
      %p155 = pneg %p149
      %p156 = scmp.eq.s32.totalorder %s14, 3
      %p157 = por %p155, %p156
      %p158 = scmp.ne.s32.totalorder %s150, %s153
      %p159 = scmp.eq.s32.totalorder %s14, 0
      %p160 = por %p158, %p159
      %p161 = scmp.ne.s32.totalorder %s150, %s153
      %p162 = scmp.eq.s32.totalorder %s19, 3
      %p163 = por %p161, %p162
      %p164 = scmp.ne.s32.totalorder %s153, %s154
      %p165 = scmp.eq.s32.totalorder %s19, 0
      %p166 = por %p164, %p165
      %p167 = scmp.ne.s32.totalorder %s153, %s154
      %p168 = scmp.eq.s32.totalorder %s20, 3
      %p169 = por %p167, %p168
      %p171 = scmp.ne.s32.totalorder %s154, %s170
      %p172 = scmp.eq.s32.totalorder %s20, 0
      %p173 = por %p171, %p172
      %p174 = scmp.le.s32.totalorder 1, %s14
      %p175 = scmp.lt.s32.totalorder %s14, 5
      %p176 = pnand %p174, %p175
      %p177 = pneg %p176
      // Predicated region
      $region9: #{lm_transformer_forward.5} parent=5 // pred_check
        _
      $region10: #{lm_transformer_forward.5} parent=5 // pred_check_branch
        %179 = sbr.rel (%p176) target = $region12
      $region11: #{lm_transformer_forward.5} parent=5 // pred_region
        %s180 = ssub.s32 %s14, 1
        // Predicated region
        $region13: #{lm_transformer_forward.5} parent=11 // pred_check
          %p181 = pneg %p75
        $region14: #{lm_transformer_forward.5} parent=11 // pred_check_branch
          %183 = sbr.rel (%p181) target = $region16
        $region15: #{lm_transformer_forward.5} parent=11 // pred_region
          _
        $region16: #{lm_transformer_forward.5} parent=11 // pred_fallthru
          _
        // Predicated region
        $region17: #{lm_transformer_forward.5} parent=11 // pred_check
          %p184 = pneg %p96
        $region18: #{lm_transformer_forward.5} parent=11 // pred_check_branch
          %186 = sbr.rel (%p184) target = $region20
        $region19: #{lm_transformer_forward.5} parent=11 // pred_region
          _
        $region20: #{lm_transformer_forward.5} parent=11 // pred_fallthru
          _
        // Predicated region
        $region21: #{lm_transformer_forward.5} parent=11 // pred_check
          %p187 = pneg %p117
        $region22: #{lm_transformer_forward.5} parent=11 // pred_check_branch
          %189 = sbr.rel (%p187) target = $region24
        $region23: #{lm_transformer_forward.5} parent=11 // pred_region
          _
        $region24: #{lm_transformer_forward.5} parent=11 // pred_fallthru
          _
        // Predicated region
        $region25: #{lm_transformer_forward.5} parent=11 // pred_check
          %p190 = pneg %p138
        $region26: #{lm_transformer_forward.5} parent=11 // pred_check_branch
          %192 = sbr.rel (%p190) target = $region28
        $region27: #{lm_transformer_forward.5} parent=11 // pred_region
          _
        $region28: #{lm_transformer_forward.5} parent=11 // pred_fallthru
          _
      $region12: #{lm_transformer_forward.5} parent=5 // pred_fallthru
        _
      %p193 = scmp.lt.s32.totalorder %s14, 4
      // Predicated region
      $region29: #{lm_transformer_forward.5} parent=5 // pred_check
        %p194 = pneg %p193
      $region30: #{lm_transformer_forward.5} parent=5 // pred_check_branch
        %196 = sbr.rel (%p194) target = $region32
      $region31: #{lm_transformer_forward.5} parent=5 // pred_region
        // Predicated region
        $region33: #{lm_transformer_forward.5} parent=31 // pred_check
          %p197 = pneg %p48
        $region34: #{lm_transformer_forward.5} parent=31 // pred_check_branch
          %199 = sbr.rel (%p197) target = $region36
        $region35: #{lm_transformer_forward.5} parent=31 // pred_region
          %s200 = smul.u32 2, %s22
          %p201 = scmp.lt.s32.totalorder %s21, 1
          %s202 = scalar_select %p201, %s21, 1
          %p203 = scmp.lt.s32.totalorder %s200, 3
          %s204 = scalar_select %p203, %s200, 3
          %s205 = smul.addr %s202, 4
          %s206 = sadd.s32 %s204, %s205
          %s207 = smul.addr %s206, 8
          %s208 = scalar_lea.vmem %s0, %s207
          %s209 = smul.u32 2, %s22
        $region36: #{lm_transformer_forward.5} parent=31 // pred_fallthru
          _
      $region32: #{lm_transformer_forward.5} parent=5 // pred_fallthru
        _
      %p210 = scmp.le.s32.totalorder 1, %s14
      %p211 = scmp.lt.s32.totalorder %s14, 5
      %p212 = pnand %p210, %p211
      %p213 = pneg %p212
      // Predicated region
      $region37: #{lm_transformer_forward.5} parent=5 // pred_check
        _
      $region38: #{lm_transformer_forward.5} parent=5 // pred_check_branch
        %215 = sbr.rel (%p212) target = $region40
      $region39: #{lm_transformer_forward.5} parent=5 // pred_region
        %s216 = ssub.s32 %s14, 1
        %s217 = smul.u32 2, %s24
        %p218 = scmp.lt.s32.totalorder %s23, 1
        %s219 = scalar_select %p218, %s23, 1
        %p220 = scmp.lt.s32.totalorder %s217, 3
        %s221 = scalar_select %p220, %s217, 3
        %s222 = smul.addr %s219, 4
        %s223 = sadd.s32 %s221, %s222
        %s224 = smul.addr %s223, 8
        %s225 = scalar_lea.vmem %s0, %s224
        %p226 = pneg %p54
        %p227 = pneg %p51
        %p228 = pneg %p75
        %p229 = pneg %p72
        %p230 = pneg %p96
        %p231 = pneg %p93
        %p232 = pneg %p117
        %p233 = pneg %p114
        %p234 = pneg %p138
        %p235 = pneg %p135
        %p236 = pneg %p166
        %p237 = pneg %p163
        %s238 = sand.u32 %s153, 1
        %s239 = scalar_lea.sflag [#allocation3], %s238
        %s240 = sand.u32 %s153, 1
        %s241 = smul.addr %s240, 32
        %s242 = scalar_lea.vmem [#allocation2], %s241
        %s243 = smul.u32 2, %s24
        %p244 = scmp.lt.s32.totalorder %s23, 1
        %s245 = scalar_select %p244, %s23, 1
        %p246 = scmp.lt.s32.totalorder %s243, 3
        %s247 = scalar_select %p246, %s243, 3
        %s248 = smul.addr %s245, 4
        %s249 = sadd.s32 %s247, %s248
        %s250 = smul.addr %s249, 8
        %s251 = scalar_lea.vmem %s0, %s250
        %s252 = smul.u32 2, %s24
        %s253 = smul.u32 2, %s24
        %v255 = vld [vmem:[%s251] sm:$0xff]
        %v256 = vld [vmem:[%s251 + $0x8] sm:$0xff]
        %v257 = vld [vmem:[%s1] sm:$0x1]
        %v258 = vld [vmem:[%s2] sm:$0x1]
        %259 = vadd.xlane.f32.xlu0 %v255
        %v260 = vpop.xlane.xlu0 %259
        %261 = vadd.xlane.f32.xlu0 %v256
        %v262 = vpop.xlane.xlu0 %261
        %v263 = vrcp.pop 128.0
        %v264 = vmul.f32 %v260, %v263
        %v265 = vmul.f32 %v262, %v263
        %v266 = vsub.f32 %v255, %v264
        %v267 = vsub.f32 %v256, %v265
        %v268 = vmul.f32 %v266, %v266
        %v269 = vmul.f32 %v267, %v267
        %270 = vadd.xlane.f32.xlu0 %v268
        %v271 = vpop.xlane.xlu0 %270
        %272 = vadd.xlane.f32.xlu0 %v269
        %v273 = vpop.xlane.xlu0 %272
        %v274 = vmul.f32 %v271, %v263
        %v275 = vmul.f32 %v273, %v263
        %v276 = vadd.f32 %v274, 1e-05
        %v277 = vadd.f32 %v275, 1e-05
        %v278 = vrsqrt.pop %v276
        %v279 = vrsqrt.pop %v277
        %v280 = vmul.f32 %v266, %v278
        %v281 = vmul.f32 %v267, %v279
        %v283 = vlaneseq
        %v284 = vshrl.u32 %v283, 7
        %v285 = vsub.s32 0, %v284
        %v286 = vrot.slane %v257, %v285
        %v288 = vmul.f32 %v280, %v286
        %v289 = vmul.f32 %v281, %v286
        %v291 = vlaneseq
        %v292 = vshrl.u32 %v291, 7
        %v293 = vsub.s32 0, %v292
        %v294 = vrot.slane %v258, %v293
        %v296 = vadd.f32 %v288, %v294
        %v297 = vadd.f32 %v289, %v294
        %v298 = vpack.c.bf16 %v297, %v296
        %v299 = vld [vmem:[%s3] sm:$0xff]
        %v300 = vld [vmem:[%s3 + $0x8] sm:$0xff]
        %v301 = vld [vmem:[%s3 + $0x10] sm:$0xff]
        %v302 = vld [vmem:[%s3 + $0x18] sm:$0xff]
        %v303 = vld [vmem:[%s3 + $0x20] sm:$0xff]
        %v304 = vld [vmem:[%s3 + $0x28] sm:$0xff]
        %v305 = vld [vmem:[%s3 + $0x30] sm:$0xff]
        %v306 = vld [vmem:[%s3 + $0x38] sm:$0xff]
        %v307 = vld [vmem:[%s3 + $0x40] sm:$0xff]
        %v308 = vld [vmem:[%s3 + $0x48] sm:$0xff]
        %v309 = vld [vmem:[%s3 + $0x50] sm:$0xff]
        %v310 = vld [vmem:[%s3 + $0x58] sm:$0xff]
        %v311 = vld [vmem:[%s3 + $0x60] sm:$0xff]
        %v312 = vld [vmem:[%s3 + $0x68] sm:$0xff]
        %v313 = vld [vmem:[%s3 + $0x70] sm:$0xff]
        %v314 = vld [vmem:[%s3 + $0x78] sm:$0xff]
        %v315 = vld [vmem:[%s4] sm:$0x3]
        %v317 = vlaneseq
        %v318 = vshrl.u32 %v317, 7
        %v319 = vsub.s32 0, %v318
        %v320 = vrot.slane %v315, %v319
        %v321 = vlaneseq
        %v322 = vshrl.u32 %v321, 7
        %v323 = vsub.s32 1, %v322
        %v324 = vrot.slane %v315, %v323
        %v343 = vunpack.c.l.b16 %v299
        %v344 = vunpack.c.h.b16 %v299
        %v345 = vunpack.c.l.b16 %v300
        %v346 = vunpack.c.h.b16 %v300
        %v347 = vunpack.c.l.b16 %v301
        %v348 = vunpack.c.h.b16 %v301
        %v349 = vunpack.c.l.b16 %v302
        %v350 = vunpack.c.h.b16 %v302
        %v351 = vunpack.c.l.b16 %v303
        %v352 = vunpack.c.h.b16 %v303
        %v353 = vunpack.c.l.b16 %v304
        %v354 = vunpack.c.h.b16 %v304
        %v355 = vunpack.c.l.b16 %v305
        %v356 = vunpack.c.h.b16 %v305
        %v357 = vunpack.c.l.b16 %v306
        %v358 = vunpack.c.h.b16 %v306
        %v359 = vunpack.c.l.b16 %v307
        %v360 = vunpack.c.h.b16 %v307
        %v361 = vunpack.c.l.b16 %v308
        %v362 = vunpack.c.h.b16 %v308
        %v363 = vunpack.c.l.b16 %v309
        %v364 = vunpack.c.h.b16 %v309
        %v365 = vunpack.c.l.b16 %v310
        %v366 = vunpack.c.h.b16 %v310
        %v367 = vunpack.c.l.b16 %v311
        %v368 = vunpack.c.h.b16 %v311
        %v369 = vunpack.c.l.b16 %v312
        %v370 = vunpack.c.h.b16 %v312
        %v371 = vunpack.c.l.b16 %v313
        %v372 = vunpack.c.h.b16 %v313
        %v373 = vunpack.c.l.b16 %v314
        %v374 = vunpack.c.h.b16 %v314
        %v375 = vpack.c.b16 %v345, %v343
        %v376 = vpack.c.b16 %v346, %v344
        %v377 = vpack.c.b16 %v349, %v347
        %v378 = vpack.c.b16 %v350, %v348
        %v379 = vpack.c.b16 %v353, %v351
        %v380 = vpack.c.b16 %v354, %v352
        %v381 = vpack.c.b16 %v357, %v355
        %v382 = vpack.c.b16 %v358, %v356
        %v383 = vpack.c.b16 %v361, %v359
        %v384 = vpack.c.b16 %v362, %v360
        %v385 = vpack.c.b16 %v365, %v363
        %v386 = vpack.c.b16 %v366, %v364
        %v387 = vpack.c.b16 %v369, %v367
        %v388 = vpack.c.b16 %v370, %v368
        %v389 = vpack.c.b16 %v373, %v371
        %v390 = vpack.c.b16 %v374, %v372
        %407 = vmatprep.subr.bf16.mxu0 %v390
        %408 = vmatpush1.bf16.msra.mxu0 %v389
        %409 = vmatprep.subr.bf16.mxu0 %v388
        %410 = vmatpush1.bf16.msra.mxu0 %v387
        %411 = vmatprep.subr.bf16.mxu0 %v386
        %412 = vmatpush1.bf16.msra.mxu0 %v385
        %413 = vmatprep.subr.bf16.mxu0 %v384
        %414 = vmatpush1.bf16.msra.mxu0 %v383
        %415 = vmatprep.subr.bf16.mxu0 %v382
        %416 = vmatpush1.bf16.msra.mxu0 %v381
        %417 = vmatprep.subr.bf16.mxu0 %v380
        %418 = vmatpush1.bf16.msra.mxu0 %v379
        %419 = vmatprep.subr.bf16.mxu0 %v378
        %420 = vmatpush1.bf16.msra.mxu0 %v377
        %421 = vmatprep.subr.bf16.mxu0 %v376
        %422 = vmatpush1.bf16.msra.mxu0 %v375
        %423 = vmatprep.subr.bf16.mxu0 0
        %424 = vmatpush2.bf16.msra.mxu0 0
        %425 = vmatprep.subr.bf16.mxu0 0
        %426 = vmatpush2.bf16.msra.mxu0 0
        %427 = vmatprep.subr.bf16.mxu0 0
        %428 = vmatpush2.bf16.msra.mxu0 0
        %429 = vmatprep.subr.bf16.mxu0 0
        %430 = vmatpush2.bf16.msra.mxu0 0
        %431 = vmatprep.subr.bf16.mxu0 0
        %432 = vmatpush2.bf16.msra.mxu0 0
        %433 = vmatprep.subr.bf16.mxu0 0
        %434 = vmatpush2.bf16.msra.mxu0 0
        %435 = vmatprep.subr.bf16.mxu0 0
        %436 = vmatpush2.bf16.msra.mxu0 0
        %437 = vmatprep.subr.bf16.mxu0 0
        %438 = vmatpush2.bf16.msra.mxu0 0
        %439 = vmatprep.mubr.bf16.mxu0 0
        %440 = vmatmul.mubr.bf16.gmra.mxu0 %v298
        %v441 = vpop.f32.mrf.mxu0
        %v442 = vadd.f32 %v320, %v441
        %v443 = vpop.f32.mrf.mxu0
        %v444 = vadd.f32 %v324, %v443
        %v445 = vpop.f32.mrf.mxu0
        %v446 = vadd.f32 %v320, %v445
        %v447 = vpop.f32.mrf.mxu0
        %v448 = vadd.f32 %v324, %v447
        %449 = vdwg.mxu0
        %450 = vst [vmem:[%s242] sm:$0xff] %v442
        %451 = vst [vmem:[%s242 + $0x8] sm:$0xff] %v444
        %452 = vst [vmem:[%s242 + $0x10] sm:$0xff] %v446
        %453 = vst [vmem:[%s242 + $0x18] sm:$0xff] %v448
        %s454 = sand.u32 %s153, 1
        %s455 = scalar_lea.sflag [#allocation3], %s454
        %s456 = sand.u32 %s153, 1
        %s457 = smul.addr %s456, 32
        %s458 = scalar_lea.vmem [#allocation2], %s457
        // Predicated region
        $region41: #{lm_transformer_forward.5} parent=39 // pred_check
          %p459 = pneg %p163
        $region42: #{lm_transformer_forward.5} parent=39 // pred_check_branch
          %461 = sbr.rel (%p459) target = $region44
        $region43: #{lm_transformer_forward.5} parent=39 // pred_region
          %s462 = smul.u32 2, %s24
          %s464 = ssub.s32 512, 512
          %465 = vsyncadd %s455, %s464
          %s466 = smul.addr %s462, 2
          %s467 = smul.addr %s23, 8
          %s468 = sadd.s32 %s466, %s467
          %s469 = smul.addr %s468, 128
          %s470 = scalar_lea.hbm %s5, %s469
          %s471 = sshll.u32 %s458, 4
          %s472 = int_to_ptr.vmem [resolvable:$true] %s471
          %477 = dma.vmem_to_hbm [thread:$0]  %s472, 512, %s470, %s455, 256, 256, 16
        $region44: #{lm_transformer_forward.5} parent=39 // pred_fallthru
          _
      $region40: #{lm_transformer_forward.5} parent=5 // pred_fallthru
        _
      %p478 = scmp.le.s32.totalorder 2, %s14
      // Predicated region
      $region45: #{lm_transformer_forward.5} parent=5 // pred_check
        %p479 = pneg %p478
      $region46: #{lm_transformer_forward.5} parent=5 // pred_check_branch
        %481 = sbr.rel (%p479) target = $region48
      $region47: #{lm_transformer_forward.5} parent=5 // pred_region
        %s482 = ssub.s32 %s14, 2
        // Predicated region
        $region49: #{lm_transformer_forward.5} parent=47 // pred_check
          %p483 = pneg %p169
        $region50: #{lm_transformer_forward.5} parent=47 // pred_check_branch
          %485 = sbr.rel (%p483) target = $region52
        $region51: #{lm_transformer_forward.5} parent=47 // pred_region
          %s486 = sand.u32 %s154, 1
          %s487 = scalar_lea.sflag [#allocation3], %s486
          %s488 = sand.u32 %s154, 1
          %s489 = smul.addr %s488, 32
          %s490 = scalar_lea.vmem [#allocation2], %s489
          %491 = dma.done %s487, 512
        $region52: #{lm_transformer_forward.5} parent=47 // pred_fallthru
          _
      $region48: #{lm_transformer_forward.5} parent=5 // pred_fallthru
        _
    $region6: #{lm_transformer_forward.5} parent=1 // loop_footer
      %s18 = sadd.s32 1, %s14
    $region7: #{lm_transformer_forward.5} parent=1 // loop_footer_branch
      %13 = sbr.rel target = $region3
    $region8: #{lm_transformer_forward.5} parent=1 // loop_exit
      _
    %492 = vsyncpa [#allocation3], 1
    %s493 = scalar_lea.sflag [#allocation3], 1
    %494 = vsyncpa %s493, 1

// kernel: lm_transformer_forward.3
$region0: #{lm_transformer_forward.3}
  #allocation0 [shape = 'u32[]', space=smem, size = 0x4, offset = 0x4, fixed_abs, tag = 'smem constant byte address 0x4 - core index']
  #allocation1 [shape = 'u32[144,128]{1,0:T(1,128)}', space=vmem, size = 0x12000, scoped, tag = 'internal scratch']
  %s0 = inlined_call_operand.vmem [shape: f32[2,32,128], index: 0, kind: input, shape index: {}]
  %s1 = inlined_call_operand.vmem [shape: bf16[128,128], index: 1, kind: input, shape index: {}]
  %s2 = inlined_call_operand.vmem [shape: f32[1,128], index: 2, kind: input, shape index: {}]
  %s3 = inlined_call_operand.vmem [shape: bf16[128,128], index: 3, kind: input, shape index: {}]
  %s4 = inlined_call_operand.vmem [shape: f32[1,128], index: 4, kind: input, shape index: {}]
  %s5 = inlined_call_operand.vmem [shape: bf16[128,128], index: 5, kind: input, shape index: {}]
  %s6 = inlined_call_operand.vmem [shape: f32[1,128], index: 6, kind: input, shape index: {}]
  %s7 = inlined_call_operand.vmem [shape: bf16[128,128], index: 7, kind: input, shape index: {}]
  %s8 = inlined_call_operand.vmem [shape: f32[1,128], index: 8, kind: input, shape index: {}]
  %s9 = inlined_call_operand.vmem [shape: f32[1,128], index: 9, kind: input, shape index: {}]
  %s10 = inlined_call_operand.vmem [shape: f32[1,128], index: 10, kind: input, shape index: {}]
  %s11 = inlined_call_operand.vmem [shape: f32[1,128], index: 11, kind: input, shape index: {}]
  %s12 = inlined_call_operand.vmem [shape: f32[1,128], index: 12, kind: input, shape index: {}]
  %s13 = inlined_call_operand.vmem [shape: bf16[128,512], index: 13, kind: input, shape index: {}]
  %s14 = inlined_call_operand.vmem [shape: f32[1,512], index: 14, kind: input, shape index: {}]
  %s15 = inlined_call_operand.vmem [shape: bf16[512,128], index: 15, kind: input, shape index: {}]
  %s16 = inlined_call_operand.vmem [shape: f32[1,128], index: 16, kind: input, shape index: {}]
  %s17 = inlined_call_operand.vmem [shape: f32[2,32,128], index: 17, kind: output, shape index: {}]
  %s18 = sld [smem:[#allocation0]]
  $region101: #{lm_transformer_forward.3} parent=0
    _
  %s20 = ssub.s32 1, %s18
  %s21 = scalar_select 0, %s20, %s18
  loop: start=0, step=1, limit=6
  $region2: #{lm_transformer_forward.3} parent=0 // loop_pre_header
    _
  $region3: #{lm_transformer_forward.3} parent=0 // loop_header
    %s23 = sphi 0, %s27
    %p24 = scmp.ge.s32.totalorder %s23, 6
    %s30 = sphi 0, %s42
    %s31 = sphi 0, %s38
    %s32 = sphi 0, %s30
    %s33 = sphi 0, %s31
    %s34 = sphi 0, %s32
    %s35 = sphi 0, %s33
    %s45 = sphi 0, %s47
    %s48 = sphi 0, %s45
    %s49 = sphi 0, %s48
    %s65 = sphi 0, %s49
    %s69 = sphi 0, %s69
    %s71 = sphi 0, %s69
    %s72 = sphi 0, %s71
    %s86 = sphi 0, %s72
    %s90 = sphi 0, %s90
    %s92 = sphi 0, %s90
    %s93 = sphi 0, %s92
    %s107 = sphi 0, %s93
    %s111 = sphi 0, %s111
    %s113 = sphi 0, %s111
    %s114 = sphi 0, %s113
    %s128 = sphi 0, %s114
    %s132 = sphi 0, %s132
    %s134 = sphi 0, %s132
    %s135 = sphi 0, %s134
    %s149 = sphi 0, %s135
    %s153 = sphi 0, %s153
    %s155 = sphi 0, %s153
    %s156 = sphi 0, %s155
    %s170 = sphi 0, %s156
    %s174 = sphi 0, %s174
    %s176 = sphi 0, %s174
    %s177 = sphi 0, %s176
    %s191 = sphi 0, %s177
    %s195 = sphi 0, %s195
    %s197 = sphi 0, %s195
    %s198 = sphi 0, %s197
    %s212 = sphi 0, %s198
    %s216 = sphi 0, %s216
    %s218 = sphi 0, %s216
    %s219 = sphi 0, %s218
    %s233 = sphi 0, %s219
    %s237 = sphi 0, %s237
    %s239 = sphi 0, %s237
    %s240 = sphi 0, %s239
    %s254 = sphi 0, %s240
    %s258 = sphi 0, %s258
    %s260 = sphi 0, %s258
    %s261 = sphi 0, %s260
    %s275 = sphi 0, %s261
    %s279 = sphi 0, %s279
    %s281 = sphi 0, %s279
    %s282 = sphi 0, %s281
    %s296 = sphi 0, %s282
    %s300 = sphi 0, %s300
    %s302 = sphi 0, %s300
    %s303 = sphi 0, %s302
    %s317 = sphi 0, %s303
    %s321 = sphi 0, %s321
    %s323 = sphi 0, %s321
    %s324 = sphi 0, %s323
    %s338 = sphi 0, %s324
    %s342 = sphi 0, %s342
    %s344 = sphi 0, %s342
    %s345 = sphi 0, %s344
    %s359 = sphi 0, %s345
    %s363 = sphi 0, %s363
    %s365 = sphi 0, %s363
    %s366 = sphi 0, %s365
    %s380 = sphi 0, %s366
    %s384 = sphi 0, %s384
    %s386 = sphi 0, %s384
    %s387 = sphi 0, %s386
    %s401 = sphi 0, %s387
    %s409 = sphi 0, %s411
    %s412 = sphi 0, %s409
    %s413 = sphi 0, %s412
    %s429 = sphi 0, %s413
  $region4: #{lm_transformer_forward.3} parent=0 // loop_header_branch
    %26 = sbr.rel (%p24) target = $region8
  $region5: #{lm_transformer_forward.3} parent=0 // loop_body
    %s28 = ssub.s32 %s23, 1
    %s29 = ssub.s32 %s23, 2
    %s36 = sadd.s32 1, %s31
    %p37 = scmp.ge.s32.totalorder %s36, 2
    %s38 = scalar_select %p37, 0, %s36
    %s39 = sadd.s32 1, %s30
    %s40 = scalar_select %p37, %s39, %s30
    %p41 = scmp.ge.s32.totalorder %s40, 2
    %s42 = scalar_select %p41, 0, %s40
    %s43 = ssub.s32 %s30, %s42
    %p44 = scmp.eq.s32.totalorder %s43, 0
    %s46 = sadd.s32 %s45, 1
    %s47 = scalar_select %p44, %s45, %s46
    %p50 = pneg %p44
    %p51 = scmp.eq.s32.totalorder %s23, 3
    %p52 = por %p50, %p51
    %p53 = scmp.ne.s32.totalorder %s45, %s48
    %p54 = scmp.eq.s32.totalorder %s23, 0
    %p55 = por %p53, %p54
    %p56 = scmp.ne.s32.totalorder %s45, %s48
    %p57 = scmp.eq.s32.totalorder %s28, 3
    %p58 = por %p56, %p57
    %p59 = scmp.ne.s32.totalorder %s48, %s49
    %p60 = scmp.eq.s32.totalorder %s28, 0
    %p61 = por %p59, %p60
    %p62 = scmp.ne.s32.totalorder %s48, %s49
    %p63 = scmp.eq.s32.totalorder %s29, 3
    %p64 = por %p62, %p63
    %p66 = scmp.ne.s32.totalorder %s49, %s65
    %p67 = scmp.eq.s32.totalorder %s29, 0
    %p68 = por %p66, %p67
    %s70 = sadd.s32 %s69, 1
    %p73 = scmp.eq.s32.totalorder %s23, 3
    %p74 = scmp.ne.s32.totalorder %s69, %s71
    %p75 = scmp.eq.s32.totalorder %s23, 0
    %p76 = por %p74, %p75
    %p77 = scmp.ne.s32.totalorder %s69, %s71
    %p78 = scmp.eq.s32.totalorder %s28, 3
    %p79 = por %p77, %p78
    %p80 = scmp.ne.s32.totalorder %s71, %s72
    %p81 = scmp.eq.s32.totalorder %s28, 0
    %p82 = por %p80, %p81
    %p83 = scmp.ne.s32.totalorder %s71, %s72
    %p84 = scmp.eq.s32.totalorder %s29, 3
    %p85 = por %p83, %p84
    %p87 = scmp.ne.s32.totalorder %s72, %s86
    %p88 = scmp.eq.s32.totalorder %s29, 0
    %p89 = por %p87, %p88
    %s91 = sadd.s32 %s90, 1
    %p94 = scmp.eq.s32.totalorder %s23, 3
    %p95 = scmp.ne.s32.totalorder %s90, %s92
    %p96 = scmp.eq.s32.totalorder %s23, 0
    %p97 = por %p95, %p96
    %p98 = scmp.ne.s32.totalorder %s90, %s92
    %p99 = scmp.eq.s32.totalorder %s28, 3
    %p100 = por %p98, %p99
    %p101 = scmp.ne.s32.totalorder %s92, %s93
    %p102 = scmp.eq.s32.totalorder %s28, 0
    %p103 = por %p101, %p102
    %p104 = scmp.ne.s32.totalorder %s92, %s93
    %p105 = scmp.eq.s32.totalorder %s29, 3
    %p106 = por %p104, %p105
    %p108 = scmp.ne.s32.totalorder %s93, %s107
    %p109 = scmp.eq.s32.totalorder %s29, 0
    %p110 = por %p108, %p109
    %s112 = sadd.s32 %s111, 1
    %p115 = scmp.eq.s32.totalorder %s23, 3
    %p116 = scmp.ne.s32.totalorder %s111, %s113
    %p117 = scmp.eq.s32.totalorder %s23, 0
    %p118 = por %p116, %p117
    %p119 = scmp.ne.s32.totalorder %s111, %s113
    %p120 = scmp.eq.s32.totalorder %s28, 3
    %p121 = por %p119, %p120
    %p122 = scmp.ne.s32.totalorder %s113, %s114
    %p123 = scmp.eq.s32.totalorder %s28, 0
    %p124 = por %p122, %p123
    %p125 = scmp.ne.s32.totalorder %s113, %s114
    %p126 = scmp.eq.s32.totalorder %s29, 3
    %p127 = por %p125, %p126
    %p129 = scmp.ne.s32.totalorder %s114, %s128
    %p130 = scmp.eq.s32.totalorder %s29, 0
    %p131 = por %p129, %p130
    %s133 = sadd.s32 %s132, 1
    %p136 = scmp.eq.s32.totalorder %s23, 3
    %p137 = scmp.ne.s32.totalorder %s132, %s134
    %p138 = scmp.eq.s32.totalorder %s23, 0
    %p139 = por %p137, %p138
    %p140 = scmp.ne.s32.totalorder %s132, %s134
    %p141 = scmp.eq.s32.totalorder %s28, 3
    %p142 = por %p140, %p141
    %p143 = scmp.ne.s32.totalorder %s134, %s135
    %p144 = scmp.eq.s32.totalorder %s28, 0
    %p145 = por %p143, %p144
    %p146 = scmp.ne.s32.totalorder %s134, %s135
    %p147 = scmp.eq.s32.totalorder %s29, 3
    %p148 = por %p146, %p147
    %p150 = scmp.ne.s32.totalorder %s135, %s149
    %p151 = scmp.eq.s32.totalorder %s29, 0
    %p152 = por %p150, %p151
    %s154 = sadd.s32 %s153, 1
    %p157 = scmp.eq.s32.totalorder %s23, 3
    %p158 = scmp.ne.s32.totalorder %s153, %s155
    %p159 = scmp.eq.s32.totalorder %s23, 0
    %p160 = por %p158, %p159
    %p161 = scmp.ne.s32.totalorder %s153, %s155
    %p162 = scmp.eq.s32.totalorder %s28, 3
    %p163 = por %p161, %p162
    %p164 = scmp.ne.s32.totalorder %s155, %s156
    %p165 = scmp.eq.s32.totalorder %s28, 0
    %p166 = por %p164, %p165
    %p167 = scmp.ne.s32.totalorder %s155, %s156
    %p168 = scmp.eq.s32.totalorder %s29, 3
    %p169 = por %p167, %p168
    %p171 = scmp.ne.s32.totalorder %s156, %s170
    %p172 = scmp.eq.s32.totalorder %s29, 0
    %p173 = por %p171, %p172
    %s175 = sadd.s32 %s174, 1
    %p178 = scmp.eq.s32.totalorder %s23, 3
    %p179 = scmp.ne.s32.totalorder %s174, %s176
    %p180 = scmp.eq.s32.totalorder %s23, 0
    %p181 = por %p179, %p180
    %p182 = scmp.ne.s32.totalorder %s174, %s176
    %p183 = scmp.eq.s32.totalorder %s28, 3
    %p184 = por %p182, %p183
    %p185 = scmp.ne.s32.totalorder %s176, %s177
    %p186 = scmp.eq.s32.totalorder %s28, 0
    %p187 = por %p185, %p186
    %p188 = scmp.ne.s32.totalorder %s176, %s177
    %p189 = scmp.eq.s32.totalorder %s29, 3
    %p190 = por %p188, %p189
    %p192 = scmp.ne.s32.totalorder %s177, %s191
    %p193 = scmp.eq.s32.totalorder %s29, 0
    %p194 = por %p192, %p193
    %s196 = sadd.s32 %s195, 1
    %p199 = scmp.eq.s32.totalorder %s23, 3
    %p200 = scmp.ne.s32.totalorder %s195, %s197
    %p201 = scmp.eq.s32.totalorder %s23, 0
    %p202 = por %p200, %p201
    %p203 = scmp.ne.s32.totalorder %s195, %s197
    %p204 = scmp.eq.s32.totalorder %s28, 3
    %p205 = por %p203, %p204
    %p206 = scmp.ne.s32.totalorder %s197, %s198
    %p207 = scmp.eq.s32.totalorder %s28, 0
    %p208 = por %p206, %p207
    %p209 = scmp.ne.s32.totalorder %s197, %s198
    %p210 = scmp.eq.s32.totalorder %s29, 3
    %p211 = por %p209, %p210
    %p213 = scmp.ne.s32.totalorder %s198, %s212
    %p214 = scmp.eq.s32.totalorder %s29, 0
    %p215 = por %p213, %p214
    %s217 = sadd.s32 %s216, 1
    %p220 = scmp.eq.s32.totalorder %s23, 3
    %p221 = scmp.ne.s32.totalorder %s216, %s218
    %p222 = scmp.eq.s32.totalorder %s23, 0
    %p223 = por %p221, %p222
    %p224 = scmp.ne.s32.totalorder %s216, %s218
    %p225 = scmp.eq.s32.totalorder %s28, 3
    %p226 = por %p224, %p225
    %p227 = scmp.ne.s32.totalorder %s218, %s219
    %p228 = scmp.eq.s32.totalorder %s28, 0
    %p229 = por %p227, %p228
    %p230 = scmp.ne.s32.totalorder %s218, %s219
    %p231 = scmp.eq.s32.totalorder %s29, 3
    %p232 = por %p230, %p231
    %p234 = scmp.ne.s32.totalorder %s219, %s233
    %p235 = scmp.eq.s32.totalorder %s29, 0
    %p236 = por %p234, %p235
    %s238 = sadd.s32 %s237, 1
    %p241 = scmp.eq.s32.totalorder %s23, 3
    %p242 = scmp.ne.s32.totalorder %s237, %s239
    %p243 = scmp.eq.s32.totalorder %s23, 0
    %p244 = por %p242, %p243
    %p245 = scmp.ne.s32.totalorder %s237, %s239
    %p246 = scmp.eq.s32.totalorder %s28, 3
    %p247 = por %p245, %p246
    %p248 = scmp.ne.s32.totalorder %s239, %s240
    %p249 = scmp.eq.s32.totalorder %s28, 0
    %p250 = por %p248, %p249
    %p251 = scmp.ne.s32.totalorder %s239, %s240
    %p252 = scmp.eq.s32.totalorder %s29, 3
    %p253 = por %p251, %p252
    %p255 = scmp.ne.s32.totalorder %s240, %s254
    %p256 = scmp.eq.s32.totalorder %s29, 0
    %p257 = por %p255, %p256
    %s259 = sadd.s32 %s258, 1
    %p262 = scmp.eq.s32.totalorder %s23, 3
    %p263 = scmp.ne.s32.totalorder %s258, %s260
    %p264 = scmp.eq.s32.totalorder %s23, 0
    %p265 = por %p263, %p264
    %p266 = scmp.ne.s32.totalorder %s258, %s260
    %p267 = scmp.eq.s32.totalorder %s28, 3
    %p268 = por %p266, %p267
    %p269 = scmp.ne.s32.totalorder %s260, %s261
    %p270 = scmp.eq.s32.totalorder %s28, 0
    %p271 = por %p269, %p270
    %p272 = scmp.ne.s32.totalorder %s260, %s261
    %p273 = scmp.eq.s32.totalorder %s29, 3
    %p274 = por %p272, %p273
    %p276 = scmp.ne.s32.totalorder %s261, %s275
    %p277 = scmp.eq.s32.totalorder %s29, 0
    %p278 = por %p276, %p277
    %s280 = sadd.s32 %s279, 1
    %p283 = scmp.eq.s32.totalorder %s23, 3
    %p284 = scmp.ne.s32.totalorder %s279, %s281
    %p285 = scmp.eq.s32.totalorder %s23, 0
    %p286 = por %p284, %p285
    %p287 = scmp.ne.s32.totalorder %s279, %s281
    %p288 = scmp.eq.s32.totalorder %s28, 3
    %p289 = por %p287, %p288
    %p290 = scmp.ne.s32.totalorder %s281, %s282
    %p291 = scmp.eq.s32.totalorder %s28, 0
    %p292 = por %p290, %p291
    %p293 = scmp.ne.s32.totalorder %s281, %s282
    %p294 = scmp.eq.s32.totalorder %s29, 3
    %p295 = por %p293, %p294
    %p297 = scmp.ne.s32.totalorder %s282, %s296
    %p298 = scmp.eq.s32.totalorder %s29, 0
    %p299 = por %p297, %p298
    %s301 = sadd.s32 %s300, 1
    %p304 = scmp.eq.s32.totalorder %s23, 3
    %p305 = scmp.ne.s32.totalorder %s300, %s302
    %p306 = scmp.eq.s32.totalorder %s23, 0
    %p307 = por %p305, %p306
    %p308 = scmp.ne.s32.totalorder %s300, %s302
    %p309 = scmp.eq.s32.totalorder %s28, 3
    %p310 = por %p308, %p309
    %p311 = scmp.ne.s32.totalorder %s302, %s303
    %p312 = scmp.eq.s32.totalorder %s28, 0
    %p313 = por %p311, %p312
    %p314 = scmp.ne.s32.totalorder %s302, %s303
    %p315 = scmp.eq.s32.totalorder %s29, 3
    %p316 = por %p314, %p315
    %p318 = scmp.ne.s32.totalorder %s303, %s317
    %p319 = scmp.eq.s32.totalorder %s29, 0
    %p320 = por %p318, %p319
    %s322 = sadd.s32 %s321, 1
    %p325 = scmp.eq.s32.totalorder %s23, 3
    %p326 = scmp.ne.s32.totalorder %s321, %s323
    %p327 = scmp.eq.s32.totalorder %s23, 0
    %p328 = por %p326, %p327
    %p329 = scmp.ne.s32.totalorder %s321, %s323
    %p330 = scmp.eq.s32.totalorder %s28, 3
    %p331 = por %p329, %p330
    %p332 = scmp.ne.s32.totalorder %s323, %s324
    %p333 = scmp.eq.s32.totalorder %s28, 0
    %p334 = por %p332, %p333
    %p335 = scmp.ne.s32.totalorder %s323, %s324
    %p336 = scmp.eq.s32.totalorder %s29, 3
    %p337 = por %p335, %p336
    %p339 = scmp.ne.s32.totalorder %s324, %s338
    %p340 = scmp.eq.s32.totalorder %s29, 0
    %p341 = por %p339, %p340
    %s343 = sadd.s32 %s342, 1
    %p346 = scmp.eq.s32.totalorder %s23, 3
    %p347 = scmp.ne.s32.totalorder %s342, %s344
    %p348 = scmp.eq.s32.totalorder %s23, 0
    %p349 = por %p347, %p348
    %p350 = scmp.ne.s32.totalorder %s342, %s344
    %p351 = scmp.eq.s32.totalorder %s28, 3
    %p352 = por %p350, %p351
    %p353 = scmp.ne.s32.totalorder %s344, %s345
    %p354 = scmp.eq.s32.totalorder %s28, 0
    %p355 = por %p353, %p354
    %p356 = scmp.ne.s32.totalorder %s344, %s345
    %p357 = scmp.eq.s32.totalorder %s29, 3
    %p358 = por %p356, %p357
    %p360 = scmp.ne.s32.totalorder %s345, %s359
    %p361 = scmp.eq.s32.totalorder %s29, 0
    %p362 = por %p360, %p361
    %s364 = sadd.s32 %s363, 1
    %p367 = scmp.eq.s32.totalorder %s23, 3
    %p368 = scmp.ne.s32.totalorder %s363, %s365
    %p369 = scmp.eq.s32.totalorder %s23, 0
    %p370 = por %p368, %p369
    %p371 = scmp.ne.s32.totalorder %s363, %s365
    %p372 = scmp.eq.s32.totalorder %s28, 3
    %p373 = por %p371, %p372
    %p374 = scmp.ne.s32.totalorder %s365, %s366
    %p375 = scmp.eq.s32.totalorder %s28, 0
    %p376 = por %p374, %p375
    %p377 = scmp.ne.s32.totalorder %s365, %s366
    %p378 = scmp.eq.s32.totalorder %s29, 3
    %p379 = por %p377, %p378
    %p381 = scmp.ne.s32.totalorder %s366, %s380
    %p382 = scmp.eq.s32.totalorder %s29, 0
    %p383 = por %p381, %p382
    %s385 = sadd.s32 %s384, 1
    %p388 = scmp.eq.s32.totalorder %s23, 3
    %p389 = scmp.ne.s32.totalorder %s384, %s386
    %p390 = scmp.eq.s32.totalorder %s23, 0
    %p391 = por %p389, %p390
    %p392 = scmp.ne.s32.totalorder %s384, %s386
    %p393 = scmp.eq.s32.totalorder %s28, 3
    %p394 = por %p392, %p393
    %p395 = scmp.ne.s32.totalorder %s386, %s387
    %p396 = scmp.eq.s32.totalorder %s28, 0
    %p397 = por %p395, %p396
    %p398 = scmp.ne.s32.totalorder %s386, %s387
    %p399 = scmp.eq.s32.totalorder %s29, 3
    %p400 = por %p398, %p399
    %p402 = scmp.ne.s32.totalorder %s387, %s401
    %p403 = scmp.eq.s32.totalorder %s29, 0
    %p404 = por %p402, %p403
    %s405 = ssub.s32 %s30, %s42
    %s406 = ssub.s32 %s31, %s38
    %s407 = sor.u32 %s405, %s406
    %p408 = scmp.eq.s32.totalorder %s407, 0
    %s410 = sadd.s32 %s409, 1
    %s411 = scalar_select %p408, %s409, %s410
    %p414 = pneg %p408
    %p415 = scmp.eq.s32.totalorder %s23, 3
    %p416 = por %p414, %p415
    %p417 = scmp.ne.s32.totalorder %s409, %s412
    %p418 = scmp.eq.s32.totalorder %s23, 0
    %p419 = por %p417, %p418
    %p420 = scmp.ne.s32.totalorder %s409, %s412
    %p421 = scmp.eq.s32.totalorder %s28, 3
    %p422 = por %p420, %p421
    %p423 = scmp.ne.s32.totalorder %s412, %s413
    %p424 = scmp.eq.s32.totalorder %s28, 0
    %p425 = por %p423, %p424
    %p426 = scmp.ne.s32.totalorder %s412, %s413
    %p427 = scmp.eq.s32.totalorder %s29, 3
    %p428 = por %p426, %p427
    %p430 = scmp.ne.s32.totalorder %s413, %s429
    %p431 = scmp.eq.s32.totalorder %s29, 0
    %p432 = por %p430, %p431
    %p433 = scmp.le.s32.totalorder 1, %s23
    %p434 = scmp.lt.s32.totalorder %s23, 5
    %p435 = pnand %p433, %p434
    %p436 = pneg %p435
    // Predicated region
    $region9: #{lm_transformer_forward.3} parent=5 // pred_check
      _
    $region10: #{lm_transformer_forward.3} parent=5 // pred_check_branch
      %438 = sbr.rel (%p435) target = $region12
    $region11: #{lm_transformer_forward.3} parent=5 // pred_region
      %s439 = ssub.s32 %s23, 1
      // Predicated region
      $region13: #{lm_transformer_forward.3} parent=11 // pred_check
        %p440 = pneg %p82
      $region14: #{lm_transformer_forward.3} parent=11 // pred_check_branch
        %442 = sbr.rel (%p440) target = $region16
      $region15: #{lm_transformer_forward.3} parent=11 // pred_region
        _
      $region16: #{lm_transformer_forward.3} parent=11 // pred_fallthru
        _
      // Predicated region
      $region17: #{lm_transformer_forward.3} parent=11 // pred_check
        %p443 = pneg %p103
      $region18: #{lm_transformer_forward.3} parent=11 // pred_check_branch
        %445 = sbr.rel (%p443) target = $region20
      $region19: #{lm_transformer_forward.3} parent=11 // pred_region
        _
      $region20: #{lm_transformer_forward.3} parent=11 // pred_fallthru
        _
      // Predicated region
      $region21: #{lm_transformer_forward.3} parent=11 // pred_check
        %p446 = pneg %p124
      $region22: #{lm_transformer_forward.3} parent=11 // pred_check_branch
        %448 = sbr.rel (%p446) target = $region24
      $region23: #{lm_transformer_forward.3} parent=11 // pred_region
        _
      $region24: #{lm_transformer_forward.3} parent=11 // pred_fallthru
        _
      // Predicated region
      $region25: #{lm_transformer_forward.3} parent=11 // pred_check
        %p449 = pneg %p145
      $region26: #{lm_transformer_forward.3} parent=11 // pred_check_branch
        %451 = sbr.rel (%p449) target = $region28
      $region27: #{lm_transformer_forward.3} parent=11 // pred_region
        _
      $region28: #{lm_transformer_forward.3} parent=11 // pred_fallthru
        _
      // Predicated region
      $region29: #{lm_transformer_forward.3} parent=11 // pred_check
        %p452 = pneg %p166
      $region30: #{lm_transformer_forward.3} parent=11 // pred_check_branch
        %454 = sbr.rel (%p452) target = $region32
      $region31: #{lm_transformer_forward.3} parent=11 // pred_region
        _
      $region32: #{lm_transformer_forward.3} parent=11 // pred_fallthru
        _
      // Predicated region
      $region33: #{lm_transformer_forward.3} parent=11 // pred_check
        %p455 = pneg %p187
      $region34: #{lm_transformer_forward.3} parent=11 // pred_check_branch
        %457 = sbr.rel (%p455) target = $region36
      $region35: #{lm_transformer_forward.3} parent=11 // pred_region
        _
      $region36: #{lm_transformer_forward.3} parent=11 // pred_fallthru
        _
      // Predicated region
      $region37: #{lm_transformer_forward.3} parent=11 // pred_check
        %p458 = pneg %p208
      $region38: #{lm_transformer_forward.3} parent=11 // pred_check_branch
        %460 = sbr.rel (%p458) target = $region40
      $region39: #{lm_transformer_forward.3} parent=11 // pred_region
        _
      $region40: #{lm_transformer_forward.3} parent=11 // pred_fallthru
        _
      // Predicated region
      $region41: #{lm_transformer_forward.3} parent=11 // pred_check
        %p461 = pneg %p229
      $region42: #{lm_transformer_forward.3} parent=11 // pred_check_branch
        %463 = sbr.rel (%p461) target = $region44
      $region43: #{lm_transformer_forward.3} parent=11 // pred_region
        _
      $region44: #{lm_transformer_forward.3} parent=11 // pred_fallthru
        _
      // Predicated region
      $region45: #{lm_transformer_forward.3} parent=11 // pred_check
        %p464 = pneg %p250
      $region46: #{lm_transformer_forward.3} parent=11 // pred_check_branch
        %466 = sbr.rel (%p464) target = $region48
      $region47: #{lm_transformer_forward.3} parent=11 // pred_region
        _
      $region48: #{lm_transformer_forward.3} parent=11 // pred_fallthru
        _
      // Predicated region
      $region49: #{lm_transformer_forward.3} parent=11 // pred_check
        %p467 = pneg %p271
      $region50: #{lm_transformer_forward.3} parent=11 // pred_check_branch
        %469 = sbr.rel (%p467) target = $region52
      $region51: #{lm_transformer_forward.3} parent=11 // pred_region
        _
      $region52: #{lm_transformer_forward.3} parent=11 // pred_fallthru
        _
      // Predicated region
      $region53: #{lm_transformer_forward.3} parent=11 // pred_check
        %p470 = pneg %p292
      $region54: #{lm_transformer_forward.3} parent=11 // pred_check_branch
        %472 = sbr.rel (%p470) target = $region56
      $region55: #{lm_transformer_forward.3} parent=11 // pred_region
        _
      $region56: #{lm_transformer_forward.3} parent=11 // pred_fallthru
        _
      // Predicated region
      $region57: #{lm_transformer_forward.3} parent=11 // pred_check
        %p473 = pneg %p313
      $region58: #{lm_transformer_forward.3} parent=11 // pred_check_branch
        %475 = sbr.rel (%p473) target = $region60
      $region59: #{lm_transformer_forward.3} parent=11 // pred_region
        _
      $region60: #{lm_transformer_forward.3} parent=11 // pred_fallthru
        _
      // Predicated region
      $region61: #{lm_transformer_forward.3} parent=11 // pred_check
        %p476 = pneg %p334
      $region62: #{lm_transformer_forward.3} parent=11 // pred_check_branch
        %478 = sbr.rel (%p476) target = $region64
      $region63: #{lm_transformer_forward.3} parent=11 // pred_region
        _
      $region64: #{lm_transformer_forward.3} parent=11 // pred_fallthru
        _
      // Predicated region
      $region65: #{lm_transformer_forward.3} parent=11 // pred_check
        %p479 = pneg %p355
      $region66: #{lm_transformer_forward.3} parent=11 // pred_check_branch
        %481 = sbr.rel (%p479) target = $region68
      $region67: #{lm_transformer_forward.3} parent=11 // pred_region
        _
      $region68: #{lm_transformer_forward.3} parent=11 // pred_fallthru
        _
      // Predicated region
      $region69: #{lm_transformer_forward.3} parent=11 // pred_check
        %p482 = pneg %p376
      $region70: #{lm_transformer_forward.3} parent=11 // pred_check_branch
        %484 = sbr.rel (%p482) target = $region72
      $region71: #{lm_transformer_forward.3} parent=11 // pred_region
        _
      $region72: #{lm_transformer_forward.3} parent=11 // pred_fallthru
        _
      // Predicated region
      $region73: #{lm_transformer_forward.3} parent=11 // pred_check
        %p485 = pneg %p397
      $region74: #{lm_transformer_forward.3} parent=11 // pred_check_branch
        %487 = sbr.rel (%p485) target = $region76
      $region75: #{lm_transformer_forward.3} parent=11 // pred_region
        _
      $region76: #{lm_transformer_forward.3} parent=11 // pred_fallthru
        _
    $region12: #{lm_transformer_forward.3} parent=5 // pred_fallthru
      _
    %p488 = scmp.lt.s32.totalorder %s23, 4
    // Predicated region
    $region77: #{lm_transformer_forward.3} parent=5 // pred_check
      %p489 = pneg %p488
    $region78: #{lm_transformer_forward.3} parent=5 // pred_check_branch
      %491 = sbr.rel (%p489) target = $region80
    $region79: #{lm_transformer_forward.3} parent=5 // pred_region
      // Predicated region
      $region81: #{lm_transformer_forward.3} parent=79 // pred_check
        %p492 = pneg %p55
      $region82: #{lm_transformer_forward.3} parent=79 // pred_check_branch
        %494 = sbr.rel (%p492) target = $region84
      $region83: #{lm_transformer_forward.3} parent=79 // pred_region
        %p495 = scmp.lt.s32.totalorder %s30, 1
        %s496 = scalar_select %p495, %s30, 1
        %s497 = smul.addr %s496, 4
        %s498 = smul.addr %s497, 8
        %s499 = scalar_lea.vmem %s0, %s498
      $region84: #{lm_transformer_forward.3} parent=79 // pred_fallthru
        _
    $region80: #{lm_transformer_forward.3} parent=5 // pred_fallthru
      _
    %p500 = scmp.le.s32.totalorder 1, %s23
    %p501 = scmp.lt.s32.totalorder %s23, 5
    %p502 = pnand %p500, %p501
    %p503 = pneg %p502
    // Predicated region
    $region85: #{lm_transformer_forward.3} parent=5 // pred_check
      _
    $region86: #{lm_transformer_forward.3} parent=5 // pred_check_branch
      %505 = sbr.rel (%p502) target = $region88
    $region87: #{lm_transformer_forward.3} parent=5 // pred_region
      %s506 = ssub.s32 %s23, 1
      %p507 = scmp.lt.s32.totalorder %s32, 1
      %s508 = scalar_select %p507, %s32, 1
      %s509 = smul.addr %s508, 4
      %s510 = smul.addr %s509, 8
      %s511 = scalar_lea.vmem %s0, %s510
      %p512 = pneg %p61
      %p513 = pneg %p58
      %p514 = pneg %p82
      %p515 = pneg %p79
      %p516 = pneg %p103
      %p517 = pneg %p100
      %p518 = pneg %p124
      %p519 = pneg %p121
      %p520 = pneg %p145
      %p521 = pneg %p142
      %p522 = pneg %p166
      %p523 = pneg %p163
      %p524 = pneg %p187
      %p525 = pneg %p184
      %p526 = pneg %p208
      %p527 = pneg %p205
      %p528 = pneg %p229
      %p529 = pneg %p226
      %p530 = pneg %p250
      %p531 = pneg %p247
      %p532 = pneg %p271
      %p533 = pneg %p268
      %p534 = pneg %p292
      %p535 = pneg %p289
      %p536 = pneg %p313
      %p537 = pneg %p310
      %p538 = pneg %p334
      %p539 = pneg %p331
      %p540 = pneg %p355
      %p541 = pneg %p352
      %p542 = pneg %p376
      %p543 = pneg %p373
      %p544 = pneg %p397
      %p545 = pneg %p394
      %p546 = pneg %p425
      %p547 = pneg %p422
      %s548 = smul.u32 2, %s33
      %p549 = scmp.lt.s32.totalorder %s32, 1
      %s550 = scalar_select %p549, %s32, 1
      %p551 = scmp.lt.s32.totalorder %s548, 3
      %s552 = scalar_select %p551, %s548, 3
      %s553 = smul.addr %s550, 4
      %s554 = sadd.s32 %s552, %s553
      %s555 = smul.addr %s554, 8
      %s556 = scalar_lea.vmem %s17, %s555
      %p557 = scmp.lt.s32.totalorder %s32, 1
      %s558 = scalar_select %p557, %s32, 1
      %s559 = smul.addr %s558, 4
      %s560 = smul.addr %s559, 8
      %s561 = scalar_lea.vmem %s0, %s560
      %s562 = smul.u32 2, %s33
      %p563 = scmp.lt.s32.totalorder %s32, 1
      %s564 = scalar_select %p563, %s32, 1
      %p565 = scmp.lt.s32.totalorder %s562, 3
      %s566 = scalar_select %p565, %s562, 3
      %s567 = smul.addr %s564, 4
      %s568 = sadd.s32 %s566, %s567
      %s569 = smul.addr %s568, 8
      %s570 = scalar_lea.vmem %s17, %s569
      %s571 = smul.u32 2, %s33
      %s573 = smul.u32 %s33, 16
      %v574 = vld [vmem:[%s561] sm:$0xff]
      %v575 = vld [vmem:[%s561 + $0x8] sm:$0xff]
      %v576 = vld [vmem:[%s561 + $0x10] sm:$0xff]
      %v577 = vld [vmem:[%s561 + $0x18] sm:$0xff]
      %v578 = vld [vmem:[%s9] sm:$0x1]
      %v579 = vld [vmem:[%s10] sm:$0x1]
      %580 = vadd.xlane.f32.xlu0 %v574
      %v581 = vpop.xlane.xlu0 %580
      %582 = vadd.xlane.f32.xlu0 %v575
      %v583 = vpop.xlane.xlu0 %582
      %584 = vadd.xlane.f32.xlu0 %v576
      %v585 = vpop.xlane.xlu0 %584
      %586 = vadd.xlane.f32.xlu0 %v577
      %v587 = vpop.xlane.xlu0 %586
      %v588 = vrcp.pop 128.0
      %v589 = vmul.f32 %v581, %v588
      %v590 = vmul.f32 %v583, %v588
      %v591 = vmul.f32 %v585, %v588
      %v592 = vmul.f32 %v587, %v588
      %v593 = vsub.f32 %v574, %v589
      %v594 = vsub.f32 %v575, %v590
      %v595 = vsub.f32 %v576, %v591
      %v596 = vsub.f32 %v577, %v592
      %v597 = vmul.f32 %v593, %v593
      %v598 = vmul.f32 %v594, %v594
      %v599 = vmul.f32 %v595, %v595
      %v600 = vmul.f32 %v596, %v596
      %601 = vadd.xlane.f32.xlu0 %v597
      %v602 = vpop.xlane.xlu0 %601
      %603 = vadd.xlane.f32.xlu0 %v598
      %v604 = vpop.xlane.xlu0 %603
      %605 = vadd.xlane.f32.xlu0 %v599
      %v606 = vpop.xlane.xlu0 %605
      %607 = vadd.xlane.f32.xlu0 %v600
      %v608 = vpop.xlane.xlu0 %607
      %v609 = vmul.f32 %v602, %v588
      %v610 = vmul.f32 %v604, %v588
      %v611 = vmul.f32 %v606, %v588
      %v612 = vmul.f32 %v608, %v588
      %v613 = vadd.f32 %v609, 1e-05
      %v614 = vadd.f32 %v610, 1e-05
      %v615 = vadd.f32 %v611, 1e-05
      %v616 = vadd.f32 %v612, 1e-05
      %v617 = vrsqrt.pop %v613
      %v618 = vrsqrt.pop %v614
      %v619 = vrsqrt.pop %v615
      %v620 = vrsqrt.pop %v616
      %v621 = vmul.f32 %v593, %v617
      %v622 = vmul.f32 %v594, %v618
      %v623 = vmul.f32 %v595, %v619
      %v624 = vmul.f32 %v596, %v620
      %v626 = vlaneseq
      %v627 = vshrl.u32 %v626, 7
      %v628 = vsub.s32 0, %v627
      %v629 = vrot.slane %v578, %v628
      %v631 = vmul.f32 %v621, %v629
      %v632 = vmul.f32 %v622, %v629
      %v633 = vmul.f32 %v623, %v629
      %v634 = vmul.f32 %v624, %v629
      %v636 = vlaneseq
      %v637 = vshrl.u32 %v636, 7
      %v638 = vsub.s32 0, %v637
      %v639 = vrot.slane %v579, %v638
      %v641 = vadd.f32 %v631, %v639
      %v642 = vadd.f32 %v632, %v639
      %v643 = vadd.f32 %v633, %v639
      %v644 = vadd.f32 %v634, %v639
      %v645 = vpack.c.bf16 %v642, %v641
      %v646 = vpack.c.bf16 %v644, %v643
      %v647 = vld [vmem:[%s3] sm:$0xf]
      %v648 = vld [vmem:[%s3 + $0x4] sm:$0xf]
      %v649 = vld [vmem:[%s3 + $0x8] sm:$0xf]
      %v650 = vld [vmem:[%s3 + $0xc] sm:$0xf]
      %v651 = vld [vmem:[%s3 + $0x10] sm:$0xf]
      %v652 = vld [vmem:[%s3 + $0x14] sm:$0xf]
      %v653 = vld [vmem:[%s3 + $0x18] sm:$0xf]
      %v654 = vld [vmem:[%s3 + $0x1c] sm:$0xf]
      %v655 = vld [vmem:[%s3 + $0x20] sm:$0xf]
      %v656 = vld [vmem:[%s3 + $0x24] sm:$0xf]
      %v657 = vld [vmem:[%s3 + $0x28] sm:$0xf]
      %v658 = vld [vmem:[%s3 + $0x2c] sm:$0xf]
      %v659 = vld [vmem:[%s3 + $0x30] sm:$0xf]
      %v660 = vld [vmem:[%s3 + $0x34] sm:$0xf]
      %v661 = vld [vmem:[%s3 + $0x38] sm:$0xf]
      %v662 = vld [vmem:[%s3 + $0x3c] sm:$0xf]
      %v663 = vld [vmem:[%s4] sm:$0x1]
      %v665 = vlaneseq
      %v666 = vshrl.u32 %v665, 7
      %v667 = vsub.s32 0, %v666
      %v668 = vrot.slane %v663, %v667
      %v686 = vunpack.c.l.b16 %v647
      %v687 = vunpack.c.l.b16 %v648
      %v688 = vunpack.c.l.b16 %v649
      %v689 = vunpack.c.l.b16 %v650
      %v690 = vunpack.c.l.b16 %v651
      %v691 = vunpack.c.l.b16 %v652
      %v692 = vunpack.c.l.b16 %v653
      %v693 = vunpack.c.l.b16 %v654
      %v694 = vunpack.c.l.b16 %v655
      %v695 = vunpack.c.l.b16 %v656
      %v696 = vunpack.c.l.b16 %v657
      %v697 = vunpack.c.l.b16 %v658
      %v698 = vunpack.c.l.b16 %v659
      %v699 = vunpack.c.l.b16 %v660
      %v700 = vunpack.c.l.b16 %v661
      %v701 = vunpack.c.l.b16 %v662
      %v702 = vpack.c.b16 %v687, %v686
      %v703 = vpack.c.b16 %v689, %v688
      %v704 = vpack.c.b16 %v691, %v690
      %v705 = vpack.c.b16 %v693, %v692
      %v706 = vpack.c.b16 %v695, %v694
      %v707 = vpack.c.b16 %v697, %v696
      %v708 = vpack.c.b16 %v699, %v698
      %v709 = vpack.c.b16 %v701, %v700
      %718 = vmatprep.subr.bf16.mxu0 0
      %719 = vmatpush1.bf16.msra.mxu0 %v709
      %720 = vmatprep.subr.bf16.mxu0 0
      %721 = vmatpush1.bf16.msra.mxu0 %v708
      %722 = vmatprep.subr.bf16.mxu0 0
      %723 = vmatpush1.bf16.msra.mxu0 %v707
      %724 = vmatprep.subr.bf16.mxu0 0
      %725 = vmatpush1.bf16.msra.mxu0 %v706
      %726 = vmatprep.subr.bf16.mxu0 0
      %727 = vmatpush1.bf16.msra.mxu0 %v705
      %728 = vmatprep.subr.bf16.mxu0 0
      %729 = vmatpush1.bf16.msra.mxu0 %v704
      %730 = vmatprep.subr.bf16.mxu0 0
      %731 = vmatpush1.bf16.msra.mxu0 %v703
      %732 = vmatprep.subr.bf16.mxu0 0
      %733 = vmatpush1.bf16.msra.mxu0 %v702
      %734 = vmatprep.subr.bf16.mxu0 0
      %735 = vmatpush2.bf16.msra.mxu0 0
      %736 = vmatprep.subr.bf16.mxu0 0
      %737 = vmatpush2.bf16.msra.mxu0 0
      %738 = vmatprep.subr.bf16.mxu0 0
      %739 = vmatpush2.bf16.msra.mxu0 0
      %740 = vmatprep.subr.bf16.mxu0 0
      %741 = vmatpush2.bf16.msra.mxu0 0
      %742 = vmatprep.subr.bf16.mxu0 0
      %743 = vmatpush2.bf16.msra.mxu0 0
      %744 = vmatprep.subr.bf16.mxu0 0
      %745 = vmatpush2.bf16.msra.mxu0 0
      %746 = vmatprep.subr.bf16.mxu0 0
      %747 = vmatpush2.bf16.msra.mxu0 0
      %748 = vmatprep.subr.bf16.mxu0 0
      %749 = vmatpush2.bf16.msra.mxu0 0
      %750 = vmatprep.mubr.bf16.mxu0 0
      %751 = vmatmul.mubr.bf16.gmra.mxu0 %v645
      %v752 = vpop.f32.mrf.mxu0
      %v753 = vadd.f32 %v668, %v752
      %v754 = vpop.f32.mrf.mxu0
      %v755 = vpop.f32.mrf.mxu0
      %v756 = vadd.f32 %v668, %v755
      %v757 = vpop.f32.mrf.mxu0
      %758 = vmatprep.mubr.bf16.mxu0 0
      %759 = vmatmul.mubr.bf16.gmra.mxu0 %v646
      %v760 = vpop.f32.mrf.mxu0
      %v761 = vadd.f32 %v668, %v760
      %v762 = vpop.f32.mrf.mxu0
      %v763 = vpop.f32.mrf.mxu0
      %v764 = vadd.f32 %v668, %v763
      %v765 = vpop.f32.mrf.mxu0
      %766 = vdwg.mxu0
      %v767 = vld [vmem:[%s5] sm:$0xf]
      %v768 = vld [vmem:[%s5 + $0x4] sm:$0xf]
      %v769 = vld [vmem:[%s5 + $0x8] sm:$0xf]
      %v770 = vld [vmem:[%s5 + $0xc] sm:$0xf]
      %v771 = vld [vmem:[%s5 + $0x10] sm:$0xf]
      %v772 = vld [vmem:[%s5 + $0x14] sm:$0xf]
      %v773 = vld [vmem:[%s5 + $0x18] sm:$0xf]
      %v774 = vld [vmem:[%s5 + $0x1c] sm:$0xf]
      %v775 = vld [vmem:[%s5 + $0x20] sm:$0xf]
      %v776 = vld [vmem:[%s5 + $0x24] sm:$0xf]
      %v777 = vld [vmem:[%s5 + $0x28] sm:$0xf]
      %v778 = vld [vmem:[%s5 + $0x2c] sm:$0xf]
      %v779 = vld [vmem:[%s5 + $0x30] sm:$0xf]
      %v780 = vld [vmem:[%s5 + $0x34] sm:$0xf]
      %v781 = vld [vmem:[%s5 + $0x38] sm:$0xf]
      %v782 = vld [vmem:[%s5 + $0x3c] sm:$0xf]
      %v783 = vld [vmem:[%s6] sm:$0x1]
      %v785 = vlaneseq
      %v786 = vshrl.u32 %v785, 7
      %v787 = vsub.s32 0, %v786
      %v788 = vrot.slane %v783, %v787
      %v806 = vunpack.c.l.b16 %v767
      %v807 = vunpack.c.l.b16 %v768
      %v808 = vunpack.c.l.b16 %v769
      %v809 = vunpack.c.l.b16 %v770
      %v810 = vunpack.c.l.b16 %v771
      %v811 = vunpack.c.l.b16 %v772
      %v812 = vunpack.c.l.b16 %v773
      %v813 = vunpack.c.l.b16 %v774
      %v814 = vunpack.c.l.b16 %v775
      %v815 = vunpack.c.l.b16 %v776
      %v816 = vunpack.c.l.b16 %v777
      %v817 = vunpack.c.l.b16 %v778
      %v818 = vunpack.c.l.b16 %v779
      %v819 = vunpack.c.l.b16 %v780
      %v820 = vunpack.c.l.b16 %v781
      %v821 = vunpack.c.l.b16 %v782
      %v822 = vpack.c.b16 %v807, %v806
      %v823 = vpack.c.b16 %v809, %v808
      %v824 = vpack.c.b16 %v811, %v810
      %v825 = vpack.c.b16 %v813, %v812
      %v826 = vpack.c.b16 %v815, %v814
      %v827 = vpack.c.b16 %v817, %v816
      %v828 = vpack.c.b16 %v819, %v818
      %v829 = vpack.c.b16 %v821, %v820
      %838 = vmatprep.subr.bf16.mxu0 0
      %839 = vmatpush1.bf16.msra.mxu0 %v829
      %840 = vmatprep.subr.bf16.mxu0 0
      %841 = vmatpush1.bf16.msra.mxu0 %v828
      %842 = vmatprep.subr.bf16.mxu0 0
      %843 = vmatpush1.bf16.msra.mxu0 %v827
      %844 = vmatprep.subr.bf16.mxu0 0
      %845 = vmatpush1.bf16.msra.mxu0 %v826
      %846 = vmatprep.subr.bf16.mxu0 0
      %847 = vmatpush1.bf16.msra.mxu0 %v825
      %848 = vmatprep.subr.bf16.mxu0 0
      %849 = vmatpush1.bf16.msra.mxu0 %v824
      %850 = vmatprep.subr.bf16.mxu0 0
      %851 = vmatpush1.bf16.msra.mxu0 %v823
      %852 = vmatprep.subr.bf16.mxu0 0
      %853 = vmatpush1.bf16.msra.mxu0 %v822
      %854 = vmatprep.subr.bf16.mxu0 0
      %855 = vmatpush2.bf16.msra.mxu0 0
      %856 = vmatprep.subr.bf16.mxu0 0
      %857 = vmatpush2.bf16.msra.mxu0 0
      %858 = vmatprep.subr.bf16.mxu0 0
      %859 = vmatpush2.bf16.msra.mxu0 0
      %860 = vmatprep.subr.bf16.mxu0 0
      %861 = vmatpush2.bf16.msra.mxu0 0
      %862 = vmatprep.subr.bf16.mxu0 0
      %863 = vmatpush2.bf16.msra.mxu0 0
      %864 = vmatprep.subr.bf16.mxu0 0
      %865 = vmatpush2.bf16.msra.mxu0 0
      %866 = vmatprep.subr.bf16.mxu0 0
      %867 = vmatpush2.bf16.msra.mxu0 0
      %868 = vmatprep.subr.bf16.mxu0 0
      %869 = vmatpush2.bf16.msra.mxu0 0
      %870 = vmatprep.mubr.bf16.mxu0 0
      %871 = vmatmul.mubr.bf16.gmra.mxu0 %v645
      %v872 = vpop.f32.mrf.mxu0
      %v873 = vadd.f32 %v788, %v872
      %v874 = vpop.f32.mrf.mxu0
      %v875 = vpop.f32.mrf.mxu0
      %v876 = vadd.f32 %v788, %v875
      %v877 = vpop.f32.mrf.mxu0
      %878 = vmatprep.mubr.bf16.mxu0 0
      %879 = vmatmul.mubr.bf16.gmra.mxu0 %v646
      %v880 = vpop.f32.mrf.mxu0
      %v881 = vadd.f32 %v788, %v880
      %v882 = vpop.f32.mrf.mxu0
      %v883 = vpop.f32.mrf.mxu0
      %v884 = vadd.f32 %v788, %v883
      %v885 = vpop.f32.mrf.mxu0
      %886 = vdwg.mxu0
      %s887 = scalar_lea.vmem %s561, %s573
      %v888 = vld [vmem:[%s887] sm:$0xff]
      %v889 = vld [vmem:[%s887 + $0x8] sm:$0xff]
      %890 = vadd.xlane.f32.xlu0 %v888
      %v891 = vpop.xlane.xlu0 %890
      %892 = vadd.xlane.f32.xlu0 %v889
      %v893 = vpop.xlane.xlu0 %892
      %v894 = vmul.f32 %v891, %v588
      %v895 = vmul.f32 %v893, %v588
      %v896 = vsub.f32 %v888, %v894
      %v897 = vsub.f32 %v889, %v895
      %v898 = vmul.f32 %v896, %v896
      %v899 = vmul.f32 %v897, %v897
      %900 = vadd.xlane.f32.xlu0 %v898
      %v901 = vpop.xlane.xlu0 %900
      %902 = vadd.xlane.f32.xlu0 %v899
      %v903 = vpop.xlane.xlu0 %902
      %v904 = vmul.f32 %v901, %v588
      %v905 = vmul.f32 %v903, %v588
      %v906 = vadd.f32 %v904, 1e-05
      %v907 = vadd.f32 %v905, 1e-05
      %v908 = vrsqrt.pop %v906
      %v909 = vrsqrt.pop %v907
      %v910 = vmul.f32 %v896, %v908
      %v911 = vmul.f32 %v897, %v909
      %v912 = vmul.f32 %v910, %v629
      %v913 = vmul.f32 %v911, %v629
      %v914 = vadd.f32 %v912, %v639
      %v915 = vadd.f32 %v913, %v639
      %v916 = vpack.c.bf16 %v915, %v914
      %v917 = vld [vmem:[%s1] sm:$0xf]
      %v918 = vld [vmem:[%s1 + $0x4] sm:$0xf]
      %v919 = vld [vmem:[%s1 + $0x8] sm:$0xf]
      %v920 = vld [vmem:[%s1 + $0xc] sm:$0xf]
      %v921 = vld [vmem:[%s1 + $0x10] sm:$0xf]
      %v922 = vld [vmem:[%s1 + $0x14] sm:$0xf]
      %v923 = vld [vmem:[%s1 + $0x18] sm:$0xf]
      %v924 = vld [vmem:[%s1 + $0x1c] sm:$0xf]
      %v925 = vld [vmem:[%s1 + $0x20] sm:$0xf]
      %v926 = vld [vmem:[%s1 + $0x24] sm:$0xf]
      %v927 = vld [vmem:[%s1 + $0x28] sm:$0xf]
      %v928 = vld [vmem:[%s1 + $0x2c] sm:$0xf]
      %v929 = vld [vmem:[%s1 + $0x30] sm:$0xf]
      %v930 = vld [vmem:[%s1 + $0x34] sm:$0xf]
      %v931 = vld [vmem:[%s1 + $0x38] sm:$0xf]
      %v932 = vld [vmem:[%s1 + $0x3c] sm:$0xf]
      %v933 = vld [vmem:[%s2] sm:$0x1]
      %v935 = vlaneseq
      %v936 = vshrl.u32 %v935, 7
      %v937 = vsub.s32 0, %v936
      %v938 = vrot.slane %v933, %v937
      %v956 = vunpack.c.l.b16 %v917
      %v957 = vunpack.c.l.b16 %v918
      %v958 = vunpack.c.l.b16 %v919
      %v959 = vunpack.c.l.b16 %v920
      %v960 = vunpack.c.l.b16 %v921
      %v961 = vunpack.c.l.b16 %v922
      %v962 = vunpack.c.l.b16 %v923
      %v963 = vunpack.c.l.b16 %v924
      %v964 = vunpack.c.l.b16 %v925
      %v965 = vunpack.c.l.b16 %v926
      %v966 = vunpack.c.l.b16 %v927
      %v967 = vunpack.c.l.b16 %v928
      %v968 = vunpack.c.l.b16 %v929
      %v969 = vunpack.c.l.b16 %v930
      %v970 = vunpack.c.l.b16 %v931
      %v971 = vunpack.c.l.b16 %v932
      %v972 = vpack.c.b16 %v957, %v956
      %v973 = vpack.c.b16 %v959, %v958
      %v974 = vpack.c.b16 %v961, %v960
      %v975 = vpack.c.b16 %v963, %v962
      %v976 = vpack.c.b16 %v965, %v964
      %v977 = vpack.c.b16 %v967, %v966
      %v978 = vpack.c.b16 %v969, %v968
      %v979 = vpack.c.b16 %v971, %v970
      %988 = vmatprep.subr.bf16.mxu0 0
      %989 = vmatpush1.bf16.msra.mxu0 %v979
      %990 = vmatprep.subr.bf16.mxu0 0
      %991 = vmatpush1.bf16.msra.mxu0 %v978
      %992 = vmatprep.subr.bf16.mxu0 0
      %993 = vmatpush1.bf16.msra.mxu0 %v977
      %994 = vmatprep.subr.bf16.mxu0 0
      %995 = vmatpush1.bf16.msra.mxu0 %v976
      %996 = vmatprep.subr.bf16.mxu0 0
      %997 = vmatpush1.bf16.msra.mxu0 %v975
      %998 = vmatprep.subr.bf16.mxu0 0
      %999 = vmatpush1.bf16.msra.mxu0 %v974
      %1000 = vmatprep.subr.bf16.mxu0 0
      %1001 = vmatpush1.bf16.msra.mxu0 %v973
      %1002 = vmatprep.subr.bf16.mxu0 0
      %1003 = vmatpush1.bf16.msra.mxu0 %v972
      %1004 = vmatprep.subr.bf16.mxu0 0
      %1005 = vmatpush2.bf16.msra.mxu0 0
      %1006 = vmatprep.subr.bf16.mxu0 0
      %1007 = vmatpush2.bf16.msra.mxu0 0
      %1008 = vmatprep.subr.bf16.mxu0 0
      %1009 = vmatpush2.bf16.msra.mxu0 0
      %1010 = vmatprep.subr.bf16.mxu0 0
      %1011 = vmatpush2.bf16.msra.mxu0 0
      %1012 = vmatprep.subr.bf16.mxu0 0
      %1013 = vmatpush2.bf16.msra.mxu0 0
      %1014 = vmatprep.subr.bf16.mxu0 0
      %1015 = vmatpush2.bf16.msra.mxu0 0
      %1016 = vmatprep.subr.bf16.mxu0 0
      %1017 = vmatpush2.bf16.msra.mxu0 0
      %1018 = vmatprep.subr.bf16.mxu0 0
      %1019 = vmatpush2.bf16.msra.mxu0 0
      %1020 = vmatprep.mubr.bf16.mxu0 0
      %1021 = vmatmul.mubr.bf16.gmra.mxu0 %v916
      %v1022 = vpop.f32.mrf.mxu0
      %v1023 = vadd.f32 %v938, %v1022
      %v1024 = vpop.f32.mrf.mxu0
      %v1025 = vpop.f32.mrf.mxu0
      %v1026 = vadd.f32 %v938, %v1025
      %v1027 = vpop.f32.mrf.mxu0
      %1028 = vdwg.mxu0
      %v1029 = vlaneseq
      %v1030 = vshrl.u32 %v1029, 7
      %v1031 = vadd.s32 %v1030, 8
      %v1032 = vstv %s573
      %v1033 = vadd.s32 %v1032, %v1030
      %v1034 = vadd.s32 %v1032, %v1031
      %v1035 = vlaneseq
      %v1036 = vand.u32 %v1035, 127
      %vm1037 = vcmp.ge.s32.totalorder %v1033, %v1036
      %vm1038 = vcmp.ge.s32.totalorder %v1034, %v1036
      %v1039 = vpack.c.bf16 %v1026, %v1023
      %v1040 = vpack.c.bf16 %v756, %v753
      %v1041 = vpack.c.bf16 %v764, %v761
      %v1042 = vpack.c.bf16 %v876, %v873
      %v1043 = vpack.c.bf16 %v884, %v881
      %vm1044 = vcmask 261120
      %v1046 = vsel %vm1044, %v1039, 0
      %v1049 = vsel %vm1044, %v1040, 0
      %v1052 = vsel %vm1044, %v1041, 0
      %1054 = vmatprep.subr.bf16.mxu0 0
      %1055 = vmatpush1.bf16.xpose.msra.mxu0 0
      %1056 = vmatprep.subr.bf16.mxu0 0
      %1057 = vmatpush1.bf16.xpose.msra.mxu0 0
      %1058 = vmatprep.subr.bf16.mxu0 0
      %1059 = vmatpush1.bf16.xpose.msra.mxu0 0
      %1060 = vmatprep.subr.bf16.mxu0 0
      %1061 = vmatpush1.bf16.xpose.msra.mxu0 0
      %1062 = vmatprep.subr.bf16.mxu0 0
      %1063 = vmatpush1.bf16.xpose.msra.mxu0 0
      %1064 = vmatprep.subr.bf16.mxu0 0
      %1065 = vmatpush1.bf16.xpose.msra.mxu0 0
      %1066 = vmatprep.subr.bf16.mxu0 0
      %1067 = vmatpush1.bf16.xpose.msra.mxu0 %v1052
      %1068 = vmatprep.subr.bf16.mxu0 0
      %1069 = vmatpush1.bf16.xpose.msra.mxu0 %v1049
      %1070 = vmatprep.subr.bf16.mxu0 0
      %1071 = vmatpush2.bf16.xpose.msra.mxu0 0
      %1072 = vmatprep.subr.bf16.mxu0 0
      %1073 = vmatpush2.bf16.xpose.msra.mxu0 0
      %1074 = vmatprep.subr.bf16.mxu0 0
      %1075 = vmatpush2.bf16.xpose.msra.mxu0 0
      %1076 = vmatprep.subr.bf16.mxu0 0
      %1077 = vmatpush2.bf16.xpose.msra.mxu0 0
      %1078 = vmatprep.subr.bf16.mxu0 0
      %1079 = vmatpush2.bf16.xpose.msra.mxu0 0
      %1080 = vmatprep.subr.bf16.mxu0 0
      %1081 = vmatpush2.bf16.xpose.msra.mxu0 0
      %1082 = vmatprep.subr.bf16.mxu0 0
      %1083 = vmatpush2.bf16.xpose.msra.mxu0 0
      %1084 = vmatprep.subr.bf16.mxu0 0
      %1085 = vmatpush2.bf16.xpose.msra.mxu0 0
      %1086 = vmatprep.mubr.bf16.mxu0 0
      %1087 = vmatmul.mubr.bf16.gmra.mxu0 %v1046
      %v1088 = vpop.f32.mrf.mxu0
      %v1089 = vadd.f32 0.0, %v1088
      %v1090 = vpop.f32.mrf.mxu0
      %v1091 = vpop.f32.mrf.mxu0
      %v1092 = vadd.f32 0.0, %v1091
      %v1093 = vpop.f32.mrf.mxu0
      %1094 = vdwg.mxu0
      %v1095 = vsel %vm1037, %v1089, -1e+09
      %v1096 = vsel %vm1038, %v1092, -1e+09
      %v1097 = vsel %vm1044, %v1095, -inf
      %1098 = vmax.xlane.f32.xlu0 %v1097
      %v1099 = vpop.xlane.xlu0 %1098
      %v1100 = vsel %vm1044, %v1096, -inf
      %1101 = vmax.xlane.f32.xlu0 %v1100
      %v1102 = vpop.xlane.xlu0 %1101
      %v1103 = vsub.f32 %v1095, %v1099
      %v1104 = vsub.f32 %v1096, %v1102
      %v1105 = vmul.f32 %v1103, 1.442695
      %v1106 = vpow.pop %v1105
      %v1107 = vmul.f32 %v1104, 1.442695
      %v1108 = vpow.pop %v1107
      %v1109 = vsel %vm1044, %v1106, 0.0
      %1110 = vadd.xlane.f32.xlu0 %v1109
      %v1111 = vpop.xlane.xlu0 %1110
      %v1112 = vsel %vm1044, %v1108, 0.0
      %1113 = vadd.xlane.f32.xlu0 %v1112
      %v1114 = vpop.xlane.xlu0 %1113
      %v1115 = vrcp.pop %v1111
      %v1116 = vrcp.pop %v1114
      %v1117 = vmul.f32 %v1106, %v1115
      %v1118 = vmul.f32 %v1108, %v1116
      %v1119 = vpack.c.bf16 %v1118, %v1117
      %v1121 = vsel %vm1044, %v1119, 0
      %1123 = vmatprep.subr.bf16.mxu0 0
      %1124 = vmatpush1.bf16.msra.mxu0 0
      %1125 = vmatprep.subr.bf16.mxu0 0
      %1126 = vmatpush1.bf16.msra.mxu0 0
      %1127 = vmatprep.subr.bf16.mxu0 0
      %1128 = vmatpush1.bf16.msra.mxu0 0
      %1129 = vmatprep.subr.bf16.mxu0 0
      %1130 = vmatpush1.bf16.msra.mxu0 0
      %1131 = vmatprep.subr.bf16.mxu0 0
      %1132 = vmatpush1.bf16.msra.mxu0 0
      %1133 = vmatprep.subr.bf16.mxu0 0
      %1134 = vmatpush1.bf16.msra.mxu0 0
      %1135 = vmatprep.subr.bf16.mxu0 0
      %1136 = vmatpush1.bf16.msra.mxu0 %v1043
      %1137 = vmatprep.subr.bf16.mxu0 0
      %1138 = vmatpush1.bf16.msra.mxu0 %v1042
      %1139 = vmatprep.subr.bf16.mxu0 0
      %1140 = vmatpush2.bf16.msra.mxu0 0
      %1141 = vmatprep.subr.bf16.mxu0 0
      %1142 = vmatpush2.bf16.msra.mxu0 0
      %1143 = vmatprep.subr.bf16.mxu0 0
      %1144 = vmatpush2.bf16.msra.mxu0 0
      %1145 = vmatprep.subr.bf16.mxu0 0
      %1146 = vmatpush2.bf16.msra.mxu0 0
      %1147 = vmatprep.subr.bf16.mxu0 0
      %1148 = vmatpush2.bf16.msra.mxu0 0
      %1149 = vmatprep.subr.bf16.mxu0 0
      %1150 = vmatpush2.bf16.msra.mxu0 0
      %1151 = vmatprep.subr.bf16.mxu0 0
      %1152 = vmatpush2.bf16.msra.mxu0 0
      %1153 = vmatprep.subr.bf16.mxu0 0
      %1154 = vmatpush2.bf16.msra.mxu0 0
      %1155 = vmatprep.mubr.bf16.mxu0 0
      %1156 = vmatmul.mubr.bf16.gmra.mxu0 %v1121
      %v1157 = vpop.f32.mrf.mxu0
      %v1158 = vadd.f32 0.0, %v1157
      %v1159 = vpop.f32.mrf.mxu0
      %v1160 = vpop.f32.mrf.mxu0
      %v1161 = vadd.f32 0.0, %v1160
      %v1162 = vpop.f32.mrf.mxu0
      %1163 = vdwg.mxu0
      %1165 = vrot.lane.b32.xlu0 %v1039, 96
      %v1166 = vpop.permute.xlu0 %1165
      %1169 = vrot.lane.b32.xlu0 %v1040, 96
      %v1170 = vpop.permute.xlu0 %1169
      %1171 = vrot.lane.b32.xlu0 %v1041, 96
      %v1172 = vpop.permute.xlu0 %1171
      %v1174 = vsel %vm1044, %v1166, 0
      %v1177 = vsel %vm1044, %v1170, 0
      %v1180 = vsel %vm1044, %v1172, 0
      %1182 = vmatprep.subr.bf16.mxu0 0
      %1183 = vmatpush1.bf16.xpose.msra.mxu0 0
      %1184 = vmatprep.subr.bf16.mxu0 0
      %1185 = vmatpush1.bf16.xpose.msra.mxu0 0
      %1186 = vmatprep.subr.bf16.mxu0 0
      %1187 = vmatpush1.bf16.xpose.msra.mxu0 0
      %1188 = vmatprep.subr.bf16.mxu0 0
      %1189 = vmatpush1.bf16.xpose.msra.mxu0 0
      %1190 = vmatprep.subr.bf16.mxu0 0
      %1191 = vmatpush1.bf16.xpose.msra.mxu0 0
      %1192 = vmatprep.subr.bf16.mxu0 0
      %1193 = vmatpush1.bf16.xpose.msra.mxu0 0
      %1194 = vmatprep.subr.bf16.mxu0 0
      %1195 = vmatpush1.bf16.xpose.msra.mxu0 %v1180
      %1196 = vmatprep.subr.bf16.mxu0 0
      %1197 = vmatpush1.bf16.xpose.msra.mxu0 %v1177
      %1198 = vmatprep.subr.bf16.mxu0 0
      %1199 = vmatpush2.bf16.xpose.msra.mxu0 0
      %1200 = vmatprep.subr.bf16.mxu0 0
      %1201 = vmatpush2.bf16.xpose.msra.mxu0 0
      %1202 = vmatprep.subr.bf16.mxu0 0
      %1203 = vmatpush2.bf16.xpose.msra.mxu0 0
      %1204 = vmatprep.subr.bf16.mxu0 0
      %1205 = vmatpush2.bf16.xpose.msra.mxu0 0
      %1206 = vmatprep.subr.bf16.mxu0 0
      %1207 = vmatpush2.bf16.xpose.msra.mxu0 0
      %1208 = vmatprep.subr.bf16.mxu0 0
      %1209 = vmatpush2.bf16.xpose.msra.mxu0 0
      %1210 = vmatprep.subr.bf16.mxu0 0
      %1211 = vmatpush2.bf16.xpose.msra.mxu0 0
      %1212 = vmatprep.subr.bf16.mxu0 0
      %1213 = vmatpush2.bf16.xpose.msra.mxu0 0
      %1214 = vmatprep.mubr.bf16.mxu0 0
      %1215 = vmatmul.mubr.bf16.gmra.mxu0 %v1174
      %v1216 = vpop.f32.mrf.mxu0
      %v1217 = vadd.f32 0.0, %v1216
      %v1218 = vpop.f32.mrf.mxu0
      %v1219 = vpop.f32.mrf.mxu0
      %v1220 = vadd.f32 0.0, %v1219
      %v1221 = vpop.f32.mrf.mxu0
      %1222 = vdwg.mxu0
      %v1223 = vsel %vm1037, %v1217, -1e+09
      %v1224 = vsel %vm1038, %v1220, -1e+09
      %v1225 = vsel %vm1044, %v1223, -inf
      %1226 = vmax.xlane.f32.xlu0 %v1225
      %v1227 = vpop.xlane.xlu0 %1226
      %v1228 = vsel %vm1044, %v1224, -inf
      %1229 = vmax.xlane.f32.xlu0 %v1228
      %v1230 = vpop.xlane.xlu0 %1229
      %v1231 = vsub.f32 %v1223, %v1227
      %v1232 = vsub.f32 %v1224, %v1230
      %v1233 = vmul.f32 %v1231, 1.442695
      %v1234 = vpow.pop %v1233
      %v1235 = vmul.f32 %v1232, 1.442695
      %v1236 = vpow.pop %v1235
      %v1237 = vsel %vm1044, %v1234, 0.0
      %1238 = vadd.xlane.f32.xlu0 %v1237
      %v1239 = vpop.xlane.xlu0 %1238
      %v1240 = vsel %vm1044, %v1236, 0.0
      %1241 = vadd.xlane.f32.xlu0 %v1240
      %v1242 = vpop.xlane.xlu0 %1241
      %v1243 = vrcp.pop %v1239
      %v1244 = vrcp.pop %v1242
      %v1245 = vmul.f32 %v1234, %v1243
      %v1246 = vmul.f32 %v1236, %v1244
      %v1247 = vpack.c.bf16 %v1246, %v1245
      %1250 = vrot.lane.b32.xlu0 %v1042, 96
      %v1251 = vpop.permute.xlu0 %1250
      %1252 = vrot.lane.b32.xlu0 %v1043, 96
      %v1253 = vpop.permute.xlu0 %1252
      %v1257 = vsel %vm1044, %v1247, 0
      %1259 = vmatprep.subr.bf16.mxu0 0
      %1260 = vmatpush1.bf16.msra.mxu0 0
      %1261 = vmatprep.subr.bf16.mxu0 0
      %1262 = vmatpush1.bf16.msra.mxu0 0
      %1263 = vmatprep.subr.bf16.mxu0 0
      %1264 = vmatpush1.bf16.msra.mxu0 0
      %1265 = vmatprep.subr.bf16.mxu0 0
      %1266 = vmatpush1.bf16.msra.mxu0 0
      %1267 = vmatprep.subr.bf16.mxu0 0
      %1268 = vmatpush1.bf16.msra.mxu0 0
      %1269 = vmatprep.subr.bf16.mxu0 0
      %1270 = vmatpush1.bf16.msra.mxu0 0
      %1271 = vmatprep.subr.bf16.mxu0 0
      %1272 = vmatpush1.bf16.msra.mxu0 %v1253
      %1273 = vmatprep.subr.bf16.mxu0 0
      %1274 = vmatpush1.bf16.msra.mxu0 %v1251
      %1275 = vmatprep.subr.bf16.mxu0 0
      %1276 = vmatpush2.bf16.msra.mxu0 0
      %1277 = vmatprep.subr.bf16.mxu0 0
      %1278 = vmatpush2.bf16.msra.mxu0 0
      %1279 = vmatprep.subr.bf16.mxu0 0
      %1280 = vmatpush2.bf16.msra.mxu0 0
      %1281 = vmatprep.subr.bf16.mxu0 0
      %1282 = vmatpush2.bf16.msra.mxu0 0
      %1283 = vmatprep.subr.bf16.mxu0 0
      %1284 = vmatpush2.bf16.msra.mxu0 0
      %1285 = vmatprep.subr.bf16.mxu0 0
      %1286 = vmatpush2.bf16.msra.mxu0 0
      %1287 = vmatprep.subr.bf16.mxu0 0
      %1288 = vmatpush2.bf16.msra.mxu0 0
      %1289 = vmatprep.subr.bf16.mxu0 0
      %1290 = vmatpush2.bf16.msra.mxu0 0
      %1291 = vmatprep.mubr.bf16.mxu0 0
      %1292 = vmatmul.mubr.bf16.gmra.mxu0 %v1257
      %v1293 = vpop.f32.mrf.mxu0
      %v1294 = vadd.f32 0.0, %v1293
      %v1295 = vpop.f32.mrf.mxu0
      %v1296 = vpop.f32.mrf.mxu0
      %v1297 = vadd.f32 0.0, %v1296
      %v1298 = vpop.f32.mrf.mxu0
      %1299 = vdwg.mxu0
      %1300 = vrot.lane.b32.xlu0 %v1039, 64
      %v1301 = vpop.permute.xlu0 %1300
      %1302 = vrot.lane.b32.xlu0 %v1040, 64
      %v1303 = vpop.permute.xlu0 %1302
      %1304 = vrot.lane.b32.xlu0 %v1041, 64
      %v1305 = vpop.permute.xlu0 %1304
      %v1307 = vsel %vm1044, %v1301, 0
      %v1310 = vsel %vm1044, %v1303, 0
      %v1313 = vsel %vm1044, %v1305, 0
      %1315 = vmatprep.subr.bf16.mxu0 0
      %1316 = vmatpush1.bf16.xpose.msra.mxu0 0
      %1317 = vmatprep.subr.bf16.mxu0 0
      %1318 = vmatpush1.bf16.xpose.msra.mxu0 0
      %1319 = vmatprep.subr.bf16.mxu0 0
      %1320 = vmatpush1.bf16.xpose.msra.mxu0 0
      %1321 = vmatprep.subr.bf16.mxu0 0
      %1322 = vmatpush1.bf16.xpose.msra.mxu0 0
      %1323 = vmatprep.subr.bf16.mxu0 0
      %1324 = vmatpush1.bf16.xpose.msra.mxu0 0
      %1325 = vmatprep.subr.bf16.mxu0 0
      %1326 = vmatpush1.bf16.xpose.msra.mxu0 0
      %1327 = vmatprep.subr.bf16.mxu0 0
      %1328 = vmatpush1.bf16.xpose.msra.mxu0 %v1313
      %1329 = vmatprep.subr.bf16.mxu0 0
      %1330 = vmatpush1.bf16.xpose.msra.mxu0 %v1310
      %1331 = vmatprep.subr.bf16.mxu0 0
      %1332 = vmatpush2.bf16.xpose.msra.mxu0 0
      %1333 = vmatprep.subr.bf16.mxu0 0
      %1334 = vmatpush2.bf16.xpose.msra.mxu0 0
      %1335 = vmatprep.subr.bf16.mxu0 0
      %1336 = vmatpush2.bf16.xpose.msra.mxu0 0
      %1337 = vmatprep.subr.bf16.mxu0 0
      %1338 = vmatpush2.bf16.xpose.msra.mxu0 0
      %1339 = vmatprep.subr.bf16.mxu0 0
      %1340 = vmatpush2.bf16.xpose.msra.mxu0 0
      %1341 = vmatprep.subr.bf16.mxu0 0
      %1342 = vmatpush2.bf16.xpose.msra.mxu0 0
      %1343 = vmatprep.subr.bf16.mxu0 0
      %1344 = vmatpush2.bf16.xpose.msra.mxu0 0
      %1345 = vmatprep.subr.bf16.mxu0 0
      %1346 = vmatpush2.bf16.xpose.msra.mxu0 0
      %1347 = vmatprep.mubr.bf16.mxu0 0
      %1348 = vmatmul.mubr.bf16.gmra.mxu0 %v1307
      %v1349 = vpop.f32.mrf.mxu0
      %v1350 = vadd.f32 0.0, %v1349
      %v1351 = vpop.f32.mrf.mxu0
      %v1352 = vpop.f32.mrf.mxu0
      %v1353 = vadd.f32 0.0, %v1352
      %v1354 = vpop.f32.mrf.mxu0
      %1355 = vdwg.mxu0
      %v1356 = vsel %vm1037, %v1350, -1e+09
      %v1357 = vsel %vm1038, %v1353, -1e+09
      %v1358 = vsel %vm1044, %v1356, -inf
      %1359 = vmax.xlane.f32.xlu0 %v1358
      %v1360 = vpop.xlane.xlu0 %1359
      %v1361 = vsel %vm1044, %v1357, -inf
      %1362 = vmax.xlane.f32.xlu0 %v1361
      %v1363 = vpop.xlane.xlu0 %1362
      %v1364 = vsub.f32 %v1356, %v1360
      %v1365 = vsub.f32 %v1357, %v1363
      %v1366 = vmul.f32 %v1364, 1.442695
      %v1367 = vpow.pop %v1366
      %v1368 = vmul.f32 %v1365, 1.442695
      %v1369 = vpow.pop %v1368
      %v1370 = vsel %vm1044, %v1367, 0.0
      %1371 = vadd.xlane.f32.xlu0 %v1370
      %v1372 = vpop.xlane.xlu0 %1371
      %v1373 = vsel %vm1044, %v1369, 0.0
      %1374 = vadd.xlane.f32.xlu0 %v1373
      %v1375 = vpop.xlane.xlu0 %1374
      %v1376 = vrcp.pop %v1372
      %v1377 = vrcp.pop %v1375
      %v1378 = vmul.f32 %v1367, %v1376
      %v1379 = vmul.f32 %v1369, %v1377
      %v1380 = vpack.c.bf16 %v1379, %v1378
      %1381 = vrot.lane.b32.xlu0 %v1042, 64
      %v1382 = vpop.permute.xlu0 %1381
      %1383 = vrot.lane.b32.xlu0 %v1043, 64
      %v1384 = vpop.permute.xlu0 %1383
      %v1388 = vsel %vm1044, %v1380, 0
      %1390 = vmatprep.subr.bf16.mxu0 0
      %1391 = vmatpush1.bf16.msra.mxu0 0
      %1392 = vmatprep.subr.bf16.mxu0 0
      %1393 = vmatpush1.bf16.msra.mxu0 0
      %1394 = vmatprep.subr.bf16.mxu0 0
      %1395 = vmatpush1.bf16.msra.mxu0 0
      %1396 = vmatprep.subr.bf16.mxu0 0
      %1397 = vmatpush1.bf16.msra.mxu0 0
      %1398 = vmatprep.subr.bf16.mxu0 0
      %1399 = vmatpush1.bf16.msra.mxu0 0
      %1400 = vmatprep.subr.bf16.mxu0 0
      %1401 = vmatpush1.bf16.msra.mxu0 0
      %1402 = vmatprep.subr.bf16.mxu0 0
      %1403 = vmatpush1.bf16.msra.mxu0 %v1384
      %1404 = vmatprep.subr.bf16.mxu0 0
      %1405 = vmatpush1.bf16.msra.mxu0 %v1382
      %1406 = vmatprep.subr.bf16.mxu0 0
      %1407 = vmatpush2.bf16.msra.mxu0 0
      %1408 = vmatprep.subr.bf16.mxu0 0
      %1409 = vmatpush2.bf16.msra.mxu0 0
      %1410 = vmatprep.subr.bf16.mxu0 0
      %1411 = vmatpush2.bf16.msra.mxu0 0
      %1412 = vmatprep.subr.bf16.mxu0 0
      %1413 = vmatpush2.bf16.msra.mxu0 0
      %1414 = vmatprep.subr.bf16.mxu0 0
      %1415 = vmatpush2.bf16.msra.mxu0 0
      %1416 = vmatprep.subr.bf16.mxu0 0
      %1417 = vmatpush2.bf16.msra.mxu0 0
      %1418 = vmatprep.subr.bf16.mxu0 0
      %1419 = vmatpush2.bf16.msra.mxu0 0
      %1420 = vmatprep.subr.bf16.mxu0 0
      %1421 = vmatpush2.bf16.msra.mxu0 0
      %1422 = vmatprep.mubr.bf16.mxu0 0
      %1423 = vmatmul.mubr.bf16.gmra.mxu0 %v1388
      %v1424 = vpop.f32.mrf.mxu0
      %v1425 = vadd.f32 0.0, %v1424
      %v1426 = vpop.f32.mrf.mxu0
      %v1427 = vpop.f32.mrf.mxu0
      %v1428 = vadd.f32 0.0, %v1427
      %v1429 = vpop.f32.mrf.mxu0
      %1430 = vdwg.mxu0
      %1431 = vrot.lane.b32.xlu0 %v1039, 32
      %v1432 = vpop.permute.xlu0 %1431
      %1433 = vrot.lane.b32.xlu0 %v1040, 32
      %v1434 = vpop.permute.xlu0 %1433
      %1435 = vrot.lane.b32.xlu0 %v1041, 32
      %v1436 = vpop.permute.xlu0 %1435
      %v1438 = vsel %vm1044, %v1432, 0
      %v1441 = vsel %vm1044, %v1434, 0
      %v1444 = vsel %vm1044, %v1436, 0
      %1446 = vmatprep.subr.bf16.mxu0 0
      %1447 = vmatpush1.bf16.xpose.msra.mxu0 0
      %1448 = vmatprep.subr.bf16.mxu0 0
      %1449 = vmatpush1.bf16.xpose.msra.mxu0 0
      %1450 = vmatprep.subr.bf16.mxu0 0
      %1451 = vmatpush1.bf16.xpose.msra.mxu0 0
      %1452 = vmatprep.subr.bf16.mxu0 0
      %1453 = vmatpush1.bf16.xpose.msra.mxu0 0
      %1454 = vmatprep.subr.bf16.mxu0 0
      %1455 = vmatpush1.bf16.xpose.msra.mxu0 0
      %1456 = vmatprep.subr.bf16.mxu0 0
      %1457 = vmatpush1.bf16.xpose.msra.mxu0 0
      %1458 = vmatprep.subr.bf16.mxu0 0
      %1459 = vmatpush1.bf16.xpose.msra.mxu0 %v1444
      %1460 = vmatprep.subr.bf16.mxu0 0
      %1461 = vmatpush1.bf16.xpose.msra.mxu0 %v1441
      %1462 = vmatprep.subr.bf16.mxu0 0
      %1463 = vmatpush2.bf16.xpose.msra.mxu0 0
      %1464 = vmatprep.subr.bf16.mxu0 0
      %1465 = vmatpush2.bf16.xpose.msra.mxu0 0
      %1466 = vmatprep.subr.bf16.mxu0 0
      %1467 = vmatpush2.bf16.xpose.msra.mxu0 0
      %1468 = vmatprep.subr.bf16.mxu0 0
      %1469 = vmatpush2.bf16.xpose.msra.mxu0 0
      %1470 = vmatprep.subr.bf16.mxu0 0
      %1471 = vmatpush2.bf16.xpose.msra.mxu0 0
      %1472 = vmatprep.subr.bf16.mxu0 0
      %1473 = vmatpush2.bf16.xpose.msra.mxu0 0
      %1474 = vmatprep.subr.bf16.mxu0 0
      %1475 = vmatpush2.bf16.xpose.msra.mxu0 0
      %1476 = vmatprep.subr.bf16.mxu0 0
      %1477 = vmatpush2.bf16.xpose.msra.mxu0 0
      %1478 = vmatprep.mubr.bf16.mxu0 0
      %1479 = vmatmul.mubr.bf16.gmra.mxu0 %v1438
      %v1480 = vpop.f32.mrf.mxu0
      %v1481 = vadd.f32 0.0, %v1480
      %v1482 = vpop.f32.mrf.mxu0
      %v1483 = vpop.f32.mrf.mxu0
      %v1484 = vadd.f32 0.0, %v1483
      %v1485 = vpop.f32.mrf.mxu0
      %1486 = vdwg.mxu0
      %v1487 = vsel %vm1037, %v1481, -1e+09
      %v1488 = vsel %vm1038, %v1484, -1e+09
      %v1489 = vsel %vm1044, %v1487, -inf
      %1490 = vmax.xlane.f32.xlu0 %v1489
      %v1491 = vpop.xlane.xlu0 %1490
      %v1492 = vsel %vm1044, %v1488, -inf
      %1493 = vmax.xlane.f32.xlu0 %v1492
      %v1494 = vpop.xlane.xlu0 %1493
      %v1495 = vsub.f32 %v1487, %v1491
      %v1496 = vsub.f32 %v1488, %v1494
      %v1497 = vmul.f32 %v1495, 1.442695
      %v1498 = vpow.pop %v1497
      %v1499 = vmul.f32 %v1496, 1.442695
      %v1500 = vpow.pop %v1499
      %v1501 = vsel %vm1044, %v1498, 0.0
      %1502 = vadd.xlane.f32.xlu0 %v1501
      %v1503 = vpop.xlane.xlu0 %1502
      %v1504 = vsel %vm1044, %v1500, 0.0
      %1505 = vadd.xlane.f32.xlu0 %v1504
      %v1506 = vpop.xlane.xlu0 %1505
      %v1507 = vrcp.pop %v1503
      %v1508 = vrcp.pop %v1506
      %v1509 = vmul.f32 %v1498, %v1507
      %v1510 = vmul.f32 %v1500, %v1508
      %v1511 = vpack.c.bf16 %v1510, %v1509
      %1512 = vrot.lane.b32.xlu0 %v1042, 32
      %v1513 = vpop.permute.xlu0 %1512
      %1514 = vrot.lane.b32.xlu0 %v1043, 32
      %v1515 = vpop.permute.xlu0 %1514
      %v1519 = vsel %vm1044, %v1511, 0
      %1521 = vmatprep.subr.bf16.mxu0 0
      %1522 = vmatpush1.bf16.msra.mxu0 0
      %1523 = vmatprep.subr.bf16.mxu0 0
      %1524 = vmatpush1.bf16.msra.mxu0 0
      %1525 = vmatprep.subr.bf16.mxu0 0
      %1526 = vmatpush1.bf16.msra.mxu0 0
      %1527 = vmatprep.subr.bf16.mxu0 0
      %1528 = vmatpush1.bf16.msra.mxu0 0
      %1529 = vmatprep.subr.bf16.mxu0 0
      %1530 = vmatpush1.bf16.msra.mxu0 0
      %1531 = vmatprep.subr.bf16.mxu0 0
      %1532 = vmatpush1.bf16.msra.mxu0 0
      %1533 = vmatprep.subr.bf16.mxu0 0
      %1534 = vmatpush1.bf16.msra.mxu0 %v1515
      %1535 = vmatprep.subr.bf16.mxu0 0
      %1536 = vmatpush1.bf16.msra.mxu0 %v1513
      %1537 = vmatprep.subr.bf16.mxu0 0
      %1538 = vmatpush2.bf16.msra.mxu0 0
      %1539 = vmatprep.subr.bf16.mxu0 0
      %1540 = vmatpush2.bf16.msra.mxu0 0
      %1541 = vmatprep.subr.bf16.mxu0 0
      %1542 = vmatpush2.bf16.msra.mxu0 0
      %1543 = vmatprep.subr.bf16.mxu0 0
      %1544 = vmatpush2.bf16.msra.mxu0 0
      %1545 = vmatprep.subr.bf16.mxu0 0
      %1546 = vmatpush2.bf16.msra.mxu0 0
      %1547 = vmatprep.subr.bf16.mxu0 0
      %1548 = vmatpush2.bf16.msra.mxu0 0
      %1549 = vmatprep.subr.bf16.mxu0 0
      %1550 = vmatpush2.bf16.msra.mxu0 0
      %1551 = vmatprep.subr.bf16.mxu0 0
      %1552 = vmatpush2.bf16.msra.mxu0 0
      %1553 = vmatprep.mubr.bf16.mxu0 0
      %1554 = vmatmul.mubr.bf16.gmra.mxu0 %v1519
      %v1555 = vpop.f32.mrf.mxu0
      %v1556 = vadd.f32 0.0, %v1555
      %v1557 = vpop.f32.mrf.mxu0
      %v1558 = vpop.f32.mrf.mxu0
      %v1559 = vadd.f32 0.0, %v1558
      %v1560 = vpop.f32.mrf.mxu0
      %1561 = vdwg.mxu0
      %1564 = vrot.lane.b32.xlu0 %v1294, 32
      %v1565 = vpop.permute.xlu0 %1564
      %1566 = vrot.lane.b32.xlu0 %v1297, 32
      %v1567 = vpop.permute.xlu0 %1566
      %1572 = vrot.lane.b32.xlu0 %v1425, 64
      %v1573 = vpop.permute.xlu0 %1572
      %1574 = vrot.lane.b32.xlu0 %v1428, 64
      %v1575 = vpop.permute.xlu0 %1574
      %1580 = vrot.lane.b32.xlu0 %v1556, 96
      %v1581 = vpop.permute.xlu0 %1580
      %1582 = vrot.lane.b32.xlu0 %v1559, 96
      %v1583 = vpop.permute.xlu0 %1582
      %v1586 = vsel %vm1044, %v1158, %v1565
      %v1587 = vsel %vm1044, %v1161, %v1567
      %vm1588 = vcmask 523264
      %v1589 = vsel %vm1588, %v1586, %v1573
      %v1590 = vsel %vm1588, %v1587, %v1575
      %vm1591 = vcmask 785408
      %v1592 = vsel %vm1591, %v1589, %v1581
      %v1593 = vsel %vm1591, %v1590, %v1583
      %v1594 = vpack.c.bf16 %v1593, %v1592
      %v1595 = vld [vmem:[%s7] sm:$0xf]
      %v1596 = vld [vmem:[%s7 + $0x4] sm:$0xf]
      %v1597 = vld [vmem:[%s7 + $0x8] sm:$0xf]
      %v1598 = vld [vmem:[%s7 + $0xc] sm:$0xf]
      %v1599 = vld [vmem:[%s7 + $0x10] sm:$0xf]
      %v1600 = vld [vmem:[%s7 + $0x14] sm:$0xf]
      %v1601 = vld [vmem:[%s7 + $0x18] sm:$0xf]
      %v1602 = vld [vmem:[%s7 + $0x1c] sm:$0xf]
      %v1603 = vld [vmem:[%s7 + $0x20] sm:$0xf]
      %v1604 = vld [vmem:[%s7 + $0x24] sm:$0xf]
      %v1605 = vld [vmem:[%s7 + $0x28] sm:$0xf]
      %v1606 = vld [vmem:[%s7 + $0x2c] sm:$0xf]
      %v1607 = vld [vmem:[%s7 + $0x30] sm:$0xf]
      %v1608 = vld [vmem:[%s7 + $0x34] sm:$0xf]
      %v1609 = vld [vmem:[%s7 + $0x38] sm:$0xf]
      %v1610 = vld [vmem:[%s7 + $0x3c] sm:$0xf]
      %v1611 = vld [vmem:[%s8] sm:$0x1]
      %v1613 = vlaneseq
      %v1614 = vshrl.u32 %v1613, 7
      %v1615 = vsub.s32 0, %v1614
      %v1616 = vrot.slane %v1611, %v1615
      %v1634 = vunpack.c.l.b16 %v1595
      %v1635 = vunpack.c.l.b16 %v1596
      %v1636 = vunpack.c.l.b16 %v1597
      %v1637 = vunpack.c.l.b16 %v1598
      %v1638 = vunpack.c.l.b16 %v1599
      %v1639 = vunpack.c.l.b16 %v1600
      %v1640 = vunpack.c.l.b16 %v1601
      %v1641 = vunpack.c.l.b16 %v1602
      %v1642 = vunpack.c.l.b16 %v1603
      %v1643 = vunpack.c.l.b16 %v1604
      %v1644 = vunpack.c.l.b16 %v1605
      %v1645 = vunpack.c.l.b16 %v1606
      %v1646 = vunpack.c.l.b16 %v1607
      %v1647 = vunpack.c.l.b16 %v1608
      %v1648 = vunpack.c.l.b16 %v1609
      %v1649 = vunpack.c.l.b16 %v1610
      %v1650 = vpack.c.b16 %v1635, %v1634
      %v1651 = vpack.c.b16 %v1637, %v1636
      %v1652 = vpack.c.b16 %v1639, %v1638
      %v1653 = vpack.c.b16 %v1641, %v1640
      %v1654 = vpack.c.b16 %v1643, %v1642
      %v1655 = vpack.c.b16 %v1645, %v1644
      %v1656 = vpack.c.b16 %v1647, %v1646
      %v1657 = vpack.c.b16 %v1649, %v1648
      %1666 = vmatprep.subr.bf16.mxu0 0
      %1667 = vmatpush1.bf16.msra.mxu0 %v1657
      %1668 = vmatprep.subr.bf16.mxu0 0
      %1669 = vmatpush1.bf16.msra.mxu0 %v1656
      %1670 = vmatprep.subr.bf16.mxu0 0
      %1671 = vmatpush1.bf16.msra.mxu0 %v1655
      %1672 = vmatprep.subr.bf16.mxu0 0
      %1673 = vmatpush1.bf16.msra.mxu0 %v1654
      %1674 = vmatprep.subr.bf16.mxu0 0
      %1675 = vmatpush1.bf16.msra.mxu0 %v1653
      %1676 = vmatprep.subr.bf16.mxu0 0
      %1677 = vmatpush1.bf16.msra.mxu0 %v1652
      %1678 = vmatprep.subr.bf16.mxu0 0
      %1679 = vmatpush1.bf16.msra.mxu0 %v1651
      %1680 = vmatprep.subr.bf16.mxu0 0
      %1681 = vmatpush1.bf16.msra.mxu0 %v1650
      %1682 = vmatprep.subr.bf16.mxu0 0
      %1683 = vmatpush2.bf16.msra.mxu0 0
      %1684 = vmatprep.subr.bf16.mxu0 0
      %1685 = vmatpush2.bf16.msra.mxu0 0
      %1686 = vmatprep.subr.bf16.mxu0 0
      %1687 = vmatpush2.bf16.msra.mxu0 0
      %1688 = vmatprep.subr.bf16.mxu0 0
      %1689 = vmatpush2.bf16.msra.mxu0 0
      %1690 = vmatprep.subr.bf16.mxu0 0
      %1691 = vmatpush2.bf16.msra.mxu0 0
      %1692 = vmatprep.subr.bf16.mxu0 0
      %1693 = vmatpush2.bf16.msra.mxu0 0
      %1694 = vmatprep.subr.bf16.mxu0 0
      %1695 = vmatpush2.bf16.msra.mxu0 0
      %1696 = vmatprep.subr.bf16.mxu0 0
      %1697 = vmatpush2.bf16.msra.mxu0 0
      %1698 = vmatprep.mubr.bf16.mxu0 0
      %1699 = vmatmul.mubr.bf16.gmra.mxu0 %v1594
      %v1700 = vpop.f32.mrf.mxu0
      %v1701 = vadd.f32 %v1616, %v1700
      %v1702 = vpop.f32.mrf.mxu0
      %v1703 = vpop.f32.mrf.mxu0
      %v1704 = vadd.f32 %v1616, %v1703
      %v1705 = vpop.f32.mrf.mxu0
      %1706 = vdwg.mxu0
      %v1707 = vadd.f32 %v914, %v1701
      %v1708 = vadd.f32 %v915, %v1704
      %v1709 = vld [vmem:[%s11] sm:$0x1]
      %v1710 = vld [vmem:[%s12] sm:$0x1]
      %1711 = vadd.xlane.f32.xlu0 %v1707
      %v1712 = vpop.xlane.xlu0 %1711
      %1713 = vadd.xlane.f32.xlu0 %v1708
      %v1714 = vpop.xlane.xlu0 %1713
      %v1715 = vmul.f32 %v1712, %v588
      %v1716 = vmul.f32 %v1714, %v588
      %v1717 = vsub.f32 %v1707, %v1715
      %v1718 = vsub.f32 %v1708, %v1716
      %v1719 = vmul.f32 %v1717, %v1717
      %v1720 = vmul.f32 %v1718, %v1718
      %1721 = vadd.xlane.f32.xlu0 %v1719
      %v1722 = vpop.xlane.xlu0 %1721
      %1723 = vadd.xlane.f32.xlu0 %v1720
      %v1724 = vpop.xlane.xlu0 %1723
      %v1725 = vmul.f32 %v1722, %v588
      %v1726 = vmul.f32 %v1724, %v588
      %v1727 = vadd.f32 %v1725, 1e-05
      %v1728 = vadd.f32 %v1726, 1e-05
      %v1729 = vrsqrt.pop %v1727
      %v1730 = vrsqrt.pop %v1728
      %v1731 = vmul.f32 %v1717, %v1729
      %v1732 = vmul.f32 %v1718, %v1730
      %v1734 = vlaneseq
      %v1735 = vshrl.u32 %v1734, 7
      %v1736 = vsub.s32 0, %v1735
      %v1737 = vrot.slane %v1709, %v1736
      %v1739 = vmul.f32 %v1731, %v1737
      %v1740 = vmul.f32 %v1732, %v1737
      %v1742 = vlaneseq
      %v1743 = vshrl.u32 %v1742, 7
      %v1744 = vsub.s32 0, %v1743
      %v1745 = vrot.slane %v1710, %v1744
      %v1747 = vadd.f32 %v1739, %v1745
      %v1748 = vadd.f32 %v1740, %v1745
      %v1749 = vpack.c.bf16 %v1748, %v1747
      %v1750 = vld [vmem:[%s13] sm:$0xff]
      %v1751 = vld [vmem:[%s13 + $0x8] sm:$0xff]
      %v1752 = vld [vmem:[%s13 + $0x10] sm:$0xff]
      %v1753 = vld [vmem:[%s13 + $0x18] sm:$0xff]
      %v1754 = vld [vmem:[%s13 + $0x20] sm:$0xff]
      %v1755 = vld [vmem:[%s13 + $0x28] sm:$0xff]
      %v1756 = vld [vmem:[%s13 + $0x30] sm:$0xff]
      %v1757 = vld [vmem:[%s13 + $0x38] sm:$0xff]
      %v1758 = vld [vmem:[%s13 + $0x40] sm:$0xff]
      %v1759 = vld [vmem:[%s13 + $0x48] sm:$0xff]
      %v1760 = vld [vmem:[%s13 + $0x50] sm:$0xff]
      %v1761 = vld [vmem:[%s13 + $0x58] sm:$0xff]
      %v1762 = vld [vmem:[%s13 + $0x60] sm:$0xff]
      %v1763 = vld [vmem:[%s13 + $0x68] sm:$0xff]
      %v1764 = vld [vmem:[%s13 + $0x70] sm:$0xff]
      %v1765 = vld [vmem:[%s13 + $0x78] sm:$0xff]
      %v1766 = vld [vmem:[%s13 + $0x80] sm:$0xff]
      %v1767 = vld [vmem:[%s13 + $0x88] sm:$0xff]
      %v1768 = vld [vmem:[%s13 + $0x90] sm:$0xff]
      %v1769 = vld [vmem:[%s13 + $0x98] sm:$0xff]
      %v1770 = vld [vmem:[%s13 + $0xa0] sm:$0xff]
      %v1771 = vld [vmem:[%s13 + $0xa8] sm:$0xff]
      %v1772 = vld [vmem:[%s13 + $0xb0] sm:$0xff]
      %v1773 = vld [vmem:[%s13 + $0xb8] sm:$0xff]
      %v1774 = vld [vmem:[%s13 + $0xc0] sm:$0xff]
      %v1775 = vld [vmem:[%s13 + $0xc8] sm:$0xff]
      %v1776 = vld [vmem:[%s13 + $0xd0] sm:$0xff]
      %v1777 = vld [vmem:[%s13 + $0xd8] sm:$0xff]
      %v1778 = vld [vmem:[%s13 + $0xe0] sm:$0xff]
      %v1779 = vld [vmem:[%s13 + $0xe8] sm:$0xff]
      %v1780 = vld [vmem:[%s13 + $0xf0] sm:$0xff]
      %v1781 = vld [vmem:[%s13 + $0xf8] sm:$0xff]
      %v1782 = vld [vmem:[%s14] sm:$0xf]
      %v1784 = vlaneseq
      %v1785 = vshrl.u32 %v1784, 7
      %v1786 = vsub.s32 0, %v1785
      %v1787 = vrot.slane %v1782, %v1786
      %v1788 = vlaneseq
      %v1789 = vshrl.u32 %v1788, 7
      %v1790 = vsub.s32 1, %v1789
      %v1791 = vrot.slane %v1782, %v1790
      %v1792 = vlaneseq
      %v1793 = vshrl.u32 %v1792, 7
      %v1794 = vsub.s32 2, %v1793
      %v1795 = vrot.slane %v1782, %v1794
      %v1796 = vlaneseq
      %v1797 = vshrl.u32 %v1796, 7
      %v1798 = vsub.s32 3, %v1797
      %v1799 = vrot.slane %v1782, %v1798
      %v1836 = vunpack.c.l.b16 %v1750
      %v1837 = vunpack.c.h.b16 %v1750
      %v1838 = vunpack.c.l.b16 %v1751
      %v1839 = vunpack.c.h.b16 %v1751
      %v1840 = vunpack.c.l.b16 %v1752
      %v1841 = vunpack.c.h.b16 %v1752
      %v1842 = vunpack.c.l.b16 %v1753
      %v1843 = vunpack.c.h.b16 %v1753
      %v1844 = vunpack.c.l.b16 %v1754
      %v1845 = vunpack.c.h.b16 %v1754
      %v1846 = vunpack.c.l.b16 %v1755
      %v1847 = vunpack.c.h.b16 %v1755
      %v1848 = vunpack.c.l.b16 %v1756
      %v1849 = vunpack.c.h.b16 %v1756
      %v1850 = vunpack.c.l.b16 %v1757
      %v1851 = vunpack.c.h.b16 %v1757
      %v1852 = vunpack.c.l.b16 %v1758
      %v1853 = vunpack.c.h.b16 %v1758
      %v1854 = vunpack.c.l.b16 %v1759
      %v1855 = vunpack.c.h.b16 %v1759
      %v1856 = vunpack.c.l.b16 %v1760
      %v1857 = vunpack.c.h.b16 %v1760
      %v1858 = vunpack.c.l.b16 %v1761
      %v1859 = vunpack.c.h.b16 %v1761
      %v1860 = vunpack.c.l.b16 %v1762
      %v1861 = vunpack.c.h.b16 %v1762
      %v1862 = vunpack.c.l.b16 %v1763
      %v1863 = vunpack.c.h.b16 %v1763
      %v1864 = vunpack.c.l.b16 %v1764
      %v1865 = vunpack.c.h.b16 %v1764
      %v1866 = vunpack.c.l.b16 %v1765
      %v1867 = vunpack.c.h.b16 %v1765
      %v1868 = vunpack.c.l.b16 %v1766
      %v1869 = vunpack.c.h.b16 %v1766
      %v1870 = vunpack.c.l.b16 %v1767
      %v1871 = vunpack.c.h.b16 %v1767
      %v1872 = vunpack.c.l.b16 %v1768
      %v1873 = vunpack.c.h.b16 %v1768
      %v1874 = vunpack.c.l.b16 %v1769
      %v1875 = vunpack.c.h.b16 %v1769
      %v1876 = vunpack.c.l.b16 %v1770
      %v1877 = vunpack.c.h.b16 %v1770
      %v1878 = vunpack.c.l.b16 %v1771
      %v1879 = vunpack.c.h.b16 %v1771
      %v1880 = vunpack.c.l.b16 %v1772
      %v1881 = vunpack.c.h.b16 %v1772
      %v1882 = vunpack.c.l.b16 %v1773
      %v1883 = vunpack.c.h.b16 %v1773
      %v1884 = vunpack.c.l.b16 %v1774
      %v1885 = vunpack.c.h.b16 %v1774
      %v1886 = vunpack.c.l.b16 %v1775
      %v1887 = vunpack.c.h.b16 %v1775
      %v1888 = vunpack.c.l.b16 %v1776
      %v1889 = vunpack.c.h.b16 %v1776
      %v1890 = vunpack.c.l.b16 %v1777
      %v1891 = vunpack.c.h.b16 %v1777
      %v1892 = vunpack.c.l.b16 %v1778
      %v1893 = vunpack.c.h.b16 %v1778
      %v1894 = vunpack.c.l.b16 %v1779
      %v1895 = vunpack.c.h.b16 %v1779
      %v1896 = vunpack.c.l.b16 %v1780
      %v1897 = vunpack.c.h.b16 %v1780
      %v1898 = vunpack.c.l.b16 %v1781
      %v1899 = vunpack.c.h.b16 %v1781
      %v1900 = vpack.c.b16 %v1840, %v1836
      %v1901 = vpack.c.b16 %v1841, %v1837
      %v1902 = vpack.c.b16 %v1842, %v1838
      %v1903 = vpack.c.b16 %v1843, %v1839
      %v1904 = vpack.c.b16 %v1848, %v1844
      %v1905 = vpack.c.b16 %v1849, %v1845
      %v1906 = vpack.c.b16 %v1850, %v1846
      %v1907 = vpack.c.b16 %v1851, %v1847
      %v1908 = vpack.c.b16 %v1856, %v1852
      %v1909 = vpack.c.b16 %v1857, %v1853
      %v1910 = vpack.c.b16 %v1858, %v1854
      %v1911 = vpack.c.b16 %v1859, %v1855
      %v1912 = vpack.c.b16 %v1864, %v1860
      %v1913 = vpack.c.b16 %v1865, %v1861
      %v1914 = vpack.c.b16 %v1866, %v1862
      %v1915 = vpack.c.b16 %v1867, %v1863
      %v1916 = vpack.c.b16 %v1872, %v1868
      %v1917 = vpack.c.b16 %v1873, %v1869
      %v1918 = vpack.c.b16 %v1874, %v1870
      %v1919 = vpack.c.b16 %v1875, %v1871
      %v1920 = vpack.c.b16 %v1880, %v1876
      %v1921 = vpack.c.b16 %v1881, %v1877
      %v1922 = vpack.c.b16 %v1882, %v1878
      %v1923 = vpack.c.b16 %v1883, %v1879
      %v1924 = vpack.c.b16 %v1888, %v1884
      %v1925 = vpack.c.b16 %v1889, %v1885
      %v1926 = vpack.c.b16 %v1890, %v1886
      %v1927 = vpack.c.b16 %v1891, %v1887
      %v1928 = vpack.c.b16 %v1896, %v1892
      %v1929 = vpack.c.b16 %v1897, %v1893
      %v1930 = vpack.c.b16 %v1898, %v1894
      %v1931 = vpack.c.b16 %v1899, %v1895
      %1964 = vmatprep.subr.bf16.mxu0 %v1929
      %1965 = vmatpush1.bf16.msra.mxu0 %v1928
      %1966 = vmatprep.subr.bf16.mxu0 %v1925
      %1967 = vmatpush1.bf16.msra.mxu0 %v1924
      %1968 = vmatprep.subr.bf16.mxu0 %v1921
      %1969 = vmatpush1.bf16.msra.mxu0 %v1920
      %1970 = vmatprep.subr.bf16.mxu0 %v1917
      %1971 = vmatpush1.bf16.msra.mxu0 %v1916
      %1972 = vmatprep.subr.bf16.mxu0 %v1913
      %1973 = vmatpush1.bf16.msra.mxu0 %v1912
      %1974 = vmatprep.subr.bf16.mxu0 %v1909
      %1975 = vmatpush1.bf16.msra.mxu0 %v1908
      %1976 = vmatprep.subr.bf16.mxu0 %v1905
      %1977 = vmatpush1.bf16.msra.mxu0 %v1904
      %1978 = vmatprep.subr.bf16.mxu0 %v1901
      %1979 = vmatpush1.bf16.msra.mxu0 %v1900
      %1980 = vmatprep.subr.bf16.mxu0 0
      %1981 = vmatpush2.bf16.msra.mxu0 0
      %1982 = vmatprep.subr.bf16.mxu0 0
      %1983 = vmatpush2.bf16.msra.mxu0 0
      %1984 = vmatprep.subr.bf16.mxu0 0
      %1985 = vmatpush2.bf16.msra.mxu0 0
      %1986 = vmatprep.subr.bf16.mxu0 0
      %1987 = vmatpush2.bf16.msra.mxu0 0
      %1988 = vmatprep.subr.bf16.mxu0 0
      %1989 = vmatpush2.bf16.msra.mxu0 0
      %1990 = vmatprep.subr.bf16.mxu0 0
      %1991 = vmatpush2.bf16.msra.mxu0 0
      %1992 = vmatprep.subr.bf16.mxu0 0
      %1993 = vmatpush2.bf16.msra.mxu0 0
      %1994 = vmatprep.subr.bf16.mxu0 0
      %1995 = vmatpush2.bf16.msra.mxu0 0
      %1996 = vmatprep.mubr.bf16.mxu0 0
      %1997 = vmatmul.mubr.bf16.gmra.mxu0 %v1749
      %v1998 = vpop.f32.mrf.mxu0
      %v1999 = vadd.f32 %v1787, %v1998
      %v2000 = vpop.f32.mrf.mxu0
      %v2001 = vadd.f32 %v1791, %v2000
      %v2002 = vpop.f32.mrf.mxu0
      %v2003 = vadd.f32 %v1787, %v2002
      %v2004 = vpop.f32.mrf.mxu0
      %v2005 = vadd.f32 %v1791, %v2004
      %2006 = vdwg.mxu0
      %2007 = vmatprep.subr.bf16.mxu0 %v1931
      %2008 = vmatpush1.bf16.msra.mxu0 %v1930
      %2009 = vmatprep.subr.bf16.mxu0 %v1927
      %2010 = vmatpush1.bf16.msra.mxu0 %v1926
      %2011 = vmatprep.subr.bf16.mxu0 %v1923
      %2012 = vmatpush1.bf16.msra.mxu0 %v1922
      %2013 = vmatprep.subr.bf16.mxu0 %v1919
      %2014 = vmatpush1.bf16.msra.mxu0 %v1918
      %2015 = vmatprep.subr.bf16.mxu0 %v1915
      %2016 = vmatpush1.bf16.msra.mxu0 %v1914
      %2017 = vmatprep.subr.bf16.mxu0 %v1911
      %2018 = vmatpush1.bf16.msra.mxu0 %v1910
      %2019 = vmatprep.subr.bf16.mxu0 %v1907
      %2020 = vmatpush1.bf16.msra.mxu0 %v1906
      %2021 = vmatprep.subr.bf16.mxu0 %v1903
      %2022 = vmatpush1.bf16.msra.mxu0 %v1902
      %2023 = vmatprep.subr.bf16.mxu0 0
      %2024 = vmatpush2.bf16.msra.mxu0 0
      %2025 = vmatprep.subr.bf16.mxu0 0
      %2026 = vmatpush2.bf16.msra.mxu0 0
      %2027 = vmatprep.subr.bf16.mxu0 0
      %2028 = vmatpush2.bf16.msra.mxu0 0
      %2029 = vmatprep.subr.bf16.mxu0 0
      %2030 = vmatpush2.bf16.msra.mxu0 0
      %2031 = vmatprep.subr.bf16.mxu0 0
      %2032 = vmatpush2.bf16.msra.mxu0 0
      %2033 = vmatprep.subr.bf16.mxu0 0
      %2034 = vmatpush2.bf16.msra.mxu0 0
      %2035 = vmatprep.subr.bf16.mxu0 0
      %2036 = vmatpush2.bf16.msra.mxu0 0
      %2037 = vmatprep.subr.bf16.mxu0 0
      %2038 = vmatpush2.bf16.msra.mxu0 0
      %2039 = vmatprep.mubr.bf16.mxu0 0
      %2040 = vmatmul.mubr.bf16.gmra.mxu0 %v1749
      %v2041 = vpop.f32.mrf.mxu0
      %v2042 = vadd.f32 %v1795, %v2041
      %v2043 = vpop.f32.mrf.mxu0
      %v2044 = vadd.f32 %v1799, %v2043
      %v2045 = vpop.f32.mrf.mxu0
      %v2046 = vadd.f32 %v1795, %v2045
      %v2047 = vpop.f32.mrf.mxu0
      %v2048 = vadd.f32 %v1799, %v2047
      %2049 = vdwg.mxu0
      %v2050 = vmax.f32 %v1999, 0.0
      %v2051 = vmax.f32 %v2001, 0.0
      %v2052 = vmax.f32 %v2042, 0.0
      %v2053 = vmax.f32 %v2044, 0.0
      %v2054 = vmax.f32 %v2003, 0.0
      %v2055 = vmax.f32 %v2005, 0.0
      %v2056 = vmax.f32 %v2046, 0.0
      %v2057 = vmax.f32 %v2048, 0.0
      %v2058 = vpack.c.bf16 %v2054, %v2050
      %v2059 = vpack.c.bf16 %v2055, %v2051
      %v2060 = vpack.c.bf16 %v2056, %v2052
      %v2061 = vpack.c.bf16 %v2057, %v2053
      %v2062 = vld [vmem:[%s15] sm:$0xf]
      %v2063 = vld [vmem:[%s15 + $0x4] sm:$0xf]
      %v2064 = vld [vmem:[%s15 + $0x8] sm:$0xf]
      %v2065 = vld [vmem:[%s15 + $0xc] sm:$0xf]
      %v2066 = vld [vmem:[%s15 + $0x10] sm:$0xf]
      %v2067 = vld [vmem:[%s15 + $0x14] sm:$0xf]
      %v2068 = vld [vmem:[%s15 + $0x18] sm:$0xf]
      %v2069 = vld [vmem:[%s15 + $0x1c] sm:$0xf]
      %v2070 = vld [vmem:[%s15 + $0x20] sm:$0xf]
      %v2071 = vld [vmem:[%s15 + $0x24] sm:$0xf]
      %v2072 = vld [vmem:[%s15 + $0x28] sm:$0xf]
      %v2073 = vld [vmem:[%s15 + $0x2c] sm:$0xf]
      %v2074 = vld [vmem:[%s15 + $0x30] sm:$0xf]
      %v2075 = vld [vmem:[%s15 + $0x34] sm:$0xf]
      %v2076 = vld [vmem:[%s15 + $0x38] sm:$0xf]
      %v2077 = vld [vmem:[%s15 + $0x3c] sm:$0xf]
      %v2078 = vld [vmem:[%s15 + $0x40] sm:$0xf]
      %v2079 = vld [vmem:[%s15 + $0x44] sm:$0xf]
      %v2080 = vld [vmem:[%s15 + $0x48] sm:$0xf]
      %v2081 = vld [vmem:[%s15 + $0x4c] sm:$0xf]
      %v2082 = vld [vmem:[%s15 + $0x50] sm:$0xf]
      %v2083 = vld [vmem:[%s15 + $0x54] sm:$0xf]
      %v2084 = vld [vmem:[%s15 + $0x58] sm:$0xf]
      %v2085 = vld [vmem:[%s15 + $0x5c] sm:$0xf]
      %v2086 = vld [vmem:[%s15 + $0x60] sm:$0xf]
      %v2087 = vld [vmem:[%s15 + $0x64] sm:$0xf]
      %v2088 = vld [vmem:[%s15 + $0x68] sm:$0xf]
      %v2089 = vld [vmem:[%s15 + $0x6c] sm:$0xf]
      %v2090 = vld [vmem:[%s15 + $0x70] sm:$0xf]
      %v2091 = vld [vmem:[%s15 + $0x74] sm:$0xf]
      %v2092 = vld [vmem:[%s15 + $0x78] sm:$0xf]
      %v2093 = vld [vmem:[%s15 + $0x7c] sm:$0xf]
      %v2094 = vld [vmem:[%s15 + $0x80] sm:$0xf]
      %v2095 = vld [vmem:[%s15 + $0x84] sm:$0xf]
      %v2096 = vld [vmem:[%s15 + $0x88] sm:$0xf]
      %v2097 = vld [vmem:[%s15 + $0x8c] sm:$0xf]
      %v2098 = vld [vmem:[%s15 + $0x90] sm:$0xf]
      %v2099 = vld [vmem:[%s15 + $0x94] sm:$0xf]
      %v2100 = vld [vmem:[%s15 + $0x98] sm:$0xf]
      %v2101 = vld [vmem:[%s15 + $0x9c] sm:$0xf]
      %v2102 = vld [vmem:[%s15 + $0xa0] sm:$0xf]
      %v2103 = vld [vmem:[%s15 + $0xa4] sm:$0xf]
      %v2104 = vld [vmem:[%s15 + $0xa8] sm:$0xf]
      %v2105 = vld [vmem:[%s15 + $0xac] sm:$0xf]
      %v2106 = vld [vmem:[%s15 + $0xb0] sm:$0xf]
      %v2107 = vld [vmem:[%s15 + $0xb4] sm:$0xf]
      %v2108 = vld [vmem:[%s15 + $0xb8] sm:$0xf]
      %v2109 = vld [vmem:[%s15 + $0xbc] sm:$0xf]
      %v2110 = vld [vmem:[%s15 + $0xc0] sm:$0xf]
      %v2111 = vld [vmem:[%s15 + $0xc4] sm:$0xf]
      %v2112 = vld [vmem:[%s15 + $0xc8] sm:$0xf]
      %v2113 = vld [vmem:[%s15 + $0xcc] sm:$0xf]
      %v2114 = vld [vmem:[%s15 + $0xd0] sm:$0xf]
      %v2115 = vld [vmem:[%s15 + $0xd4] sm:$0xf]
      %v2116 = vld [vmem:[%s15 + $0xd8] sm:$0xf]
      %v2117 = vld [vmem:[%s15 + $0xdc] sm:$0xf]
      %v2118 = vld [vmem:[%s15 + $0xe0] sm:$0xf]
      %v2119 = vld [vmem:[%s15 + $0xe4] sm:$0xf]
      %v2120 = vld [vmem:[%s15 + $0xe8] sm:$0xf]
      %v2121 = vld [vmem:[%s15 + $0xec] sm:$0xf]
      %v2122 = vld [vmem:[%s15 + $0xf0] sm:$0xf]
      %v2123 = vld [vmem:[%s15 + $0xf4] sm:$0xf]
      %v2124 = vld [vmem:[%s15 + $0xf8] sm:$0xf]
      %v2125 = vld [vmem:[%s15 + $0xfc] sm:$0xf]
      %v2126 = vld [vmem:[%s16] sm:$0x1]
      %v2128 = vlaneseq
      %v2129 = vshrl.u32 %v2128, 7
      %v2130 = vsub.s32 0, %v2129
      %v2131 = vrot.slane %v2126, %v2130
      %v2197 = vunpack.c.l.b16 %v2062
      %v2198 = vunpack.c.l.b16 %v2063
      %v2199 = vunpack.c.l.b16 %v2064
      %v2200 = vunpack.c.l.b16 %v2065
      %v2201 = vunpack.c.l.b16 %v2066
      %v2202 = vunpack.c.l.b16 %v2067
      %v2203 = vunpack.c.l.b16 %v2068
      %v2204 = vunpack.c.l.b16 %v2069
      %v2205 = vunpack.c.l.b16 %v2070
      %v2206 = vunpack.c.l.b16 %v2071
      %v2207 = vunpack.c.l.b16 %v2072
      %v2208 = vunpack.c.l.b16 %v2073
      %v2209 = vunpack.c.l.b16 %v2074
      %v2210 = vunpack.c.l.b16 %v2075
      %v2211 = vunpack.c.l.b16 %v2076
      %v2212 = vunpack.c.l.b16 %v2077
      %v2213 = vunpack.c.l.b16 %v2078
      %v2214 = vunpack.c.l.b16 %v2079
      %v2215 = vunpack.c.l.b16 %v2080
      %v2216 = vunpack.c.l.b16 %v2081
      %v2217 = vunpack.c.l.b16 %v2082
      %v2218 = vunpack.c.l.b16 %v2083
      %v2219 = vunpack.c.l.b16 %v2084
      %v2220 = vunpack.c.l.b16 %v2085
      %v2221 = vunpack.c.l.b16 %v2086
      %v2222 = vunpack.c.l.b16 %v2087
      %v2223 = vunpack.c.l.b16 %v2088
      %v2224 = vunpack.c.l.b16 %v2089
      %v2225 = vunpack.c.l.b16 %v2090
      %v2226 = vunpack.c.l.b16 %v2091
      %v2227 = vunpack.c.l.b16 %v2092
      %v2228 = vunpack.c.l.b16 %v2093
      %v2229 = vunpack.c.l.b16 %v2094
      %v2230 = vunpack.c.l.b16 %v2095
      %v2231 = vunpack.c.l.b16 %v2096
      %v2232 = vunpack.c.l.b16 %v2097
      %v2233 = vunpack.c.l.b16 %v2098
      %v2234 = vunpack.c.l.b16 %v2099
      %v2235 = vunpack.c.l.b16 %v2100
      %v2236 = vunpack.c.l.b16 %v2101
      %v2237 = vunpack.c.l.b16 %v2102
      %v2238 = vunpack.c.l.b16 %v2103
      %v2239 = vunpack.c.l.b16 %v2104
      %v2240 = vunpack.c.l.b16 %v2105
      %v2241 = vunpack.c.l.b16 %v2106
      %v2242 = vunpack.c.l.b16 %v2107
      %v2243 = vunpack.c.l.b16 %v2108
      %v2244 = vunpack.c.l.b16 %v2109
      %v2245 = vunpack.c.l.b16 %v2110
      %v2246 = vunpack.c.l.b16 %v2111
      %v2247 = vunpack.c.l.b16 %v2112
      %v2248 = vunpack.c.l.b16 %v2113
      %v2249 = vunpack.c.l.b16 %v2114
      %v2250 = vunpack.c.l.b16 %v2115
      %v2251 = vunpack.c.l.b16 %v2116
      %v2252 = vunpack.c.l.b16 %v2117
      %v2253 = vunpack.c.l.b16 %v2118
      %v2254 = vunpack.c.l.b16 %v2119
      %v2255 = vunpack.c.l.b16 %v2120
      %v2256 = vunpack.c.l.b16 %v2121
      %v2257 = vunpack.c.l.b16 %v2122
      %v2258 = vunpack.c.l.b16 %v2123
      %v2259 = vunpack.c.l.b16 %v2124
      %v2260 = vunpack.c.l.b16 %v2125
      %v2261 = vpack.c.b16 %v2198, %v2197
      %v2262 = vpack.c.b16 %v2200, %v2199
      %v2263 = vpack.c.b16 %v2202, %v2201
      %v2264 = vpack.c.b16 %v2204, %v2203
      %v2265 = vpack.c.b16 %v2206, %v2205
      %v2266 = vpack.c.b16 %v2208, %v2207
      %v2267 = vpack.c.b16 %v2210, %v2209
      %v2268 = vpack.c.b16 %v2212, %v2211
      %v2269 = vpack.c.b16 %v2214, %v2213
      %v2270 = vpack.c.b16 %v2216, %v2215
      %v2271 = vpack.c.b16 %v2218, %v2217
      %v2272 = vpack.c.b16 %v2220, %v2219
      %v2273 = vpack.c.b16 %v2222, %v2221
      %v2274 = vpack.c.b16 %v2224, %v2223
      %v2275 = vpack.c.b16 %v2226, %v2225
      %v2276 = vpack.c.b16 %v2228, %v2227
      %v2277 = vpack.c.b16 %v2230, %v2229
      %v2278 = vpack.c.b16 %v2232, %v2231
      %v2279 = vpack.c.b16 %v2234, %v2233
      %v2280 = vpack.c.b16 %v2236, %v2235
      %v2281 = vpack.c.b16 %v2238, %v2237
      %v2282 = vpack.c.b16 %v2240, %v2239
      %v2283 = vpack.c.b16 %v2242, %v2241
      %v2284 = vpack.c.b16 %v2244, %v2243
      %v2285 = vpack.c.b16 %v2246, %v2245
      %v2286 = vpack.c.b16 %v2248, %v2247
      %v2287 = vpack.c.b16 %v2250, %v2249
      %v2288 = vpack.c.b16 %v2252, %v2251
      %v2289 = vpack.c.b16 %v2254, %v2253
      %v2290 = vpack.c.b16 %v2256, %v2255
      %v2291 = vpack.c.b16 %v2258, %v2257
      %v2292 = vpack.c.b16 %v2260, %v2259
      %2325 = vmatprep.subr.bf16.mxu0 0
      %2326 = vmatpush1.bf16.msra.mxu0 %v2268
      %2327 = vmatprep.subr.bf16.mxu0 0
      %2328 = vmatpush1.bf16.msra.mxu0 %v2267
      %2329 = vmatprep.subr.bf16.mxu0 0
      %2330 = vmatpush1.bf16.msra.mxu0 %v2266
      %2331 = vmatprep.subr.bf16.mxu0 0
      %2332 = vmatpush1.bf16.msra.mxu0 %v2265
      %2333 = vmatprep.subr.bf16.mxu0 0
      %2334 = vmatpush1.bf16.msra.mxu0 %v2264
      %2335 = vmatprep.subr.bf16.mxu0 0
      %2336 = vmatpush1.bf16.msra.mxu0 %v2263
      %2337 = vmatprep.subr.bf16.mxu0 0
      %2338 = vmatpush1.bf16.msra.mxu0 %v2262
      %2339 = vmatprep.subr.bf16.mxu0 0
      %2340 = vmatpush1.bf16.msra.mxu0 %v2261
      %2341 = vmatprep.subr.bf16.mxu0 0
      %2342 = vmatpush2.bf16.msra.mxu0 %v2276
      %2343 = vmatprep.subr.bf16.mxu0 0
      %2344 = vmatpush2.bf16.msra.mxu0 %v2275
      %2345 = vmatprep.subr.bf16.mxu0 0
      %2346 = vmatpush2.bf16.msra.mxu0 %v2274
      %2347 = vmatprep.subr.bf16.mxu0 0
      %2348 = vmatpush2.bf16.msra.mxu0 %v2273
      %2349 = vmatprep.subr.bf16.mxu0 0
      %2350 = vmatpush2.bf16.msra.mxu0 %v2272
      %2351 = vmatprep.subr.bf16.mxu0 0
      %2352 = vmatpush2.bf16.msra.mxu0 %v2271
      %2353 = vmatprep.subr.bf16.mxu0 0
      %2354 = vmatpush2.bf16.msra.mxu0 %v2270
      %2355 = vmatprep.subr.bf16.mxu0 0
      %2356 = vmatpush2.bf16.msra.mxu0 %v2269
      %2357 = vmatprep.mubr.bf16.mxu0 %v2059
      %2358 = vmatmul.mubr.bf16.gmra.mxu0 %v2058
      %v2359 = vpop.f32.mrf.mxu0
      %v2360 = vadd.f32 %v2131, %v2359
      %v2361 = vpop.f32.mrf.mxu0
      %v2362 = vpop.f32.mrf.mxu0
      %v2363 = vadd.f32 %v2131, %v2362
      %v2364 = vpop.f32.mrf.mxu0
      %2365 = vdwg.mxu0
      %2366 = vmatprep.subr.bf16.mxu0 0
      %2367 = vmatpush1.bf16.msra.mxu0 %v2284
      %2368 = vmatprep.subr.bf16.mxu0 0
      %2369 = vmatpush1.bf16.msra.mxu0 %v2283
      %2370 = vmatprep.subr.bf16.mxu0 0
      %2371 = vmatpush1.bf16.msra.mxu0 %v2282
      %2372 = vmatprep.subr.bf16.mxu0 0
      %2373 = vmatpush1.bf16.msra.mxu0 %v2281
      %2374 = vmatprep.subr.bf16.mxu0 0
      %2375 = vmatpush1.bf16.msra.mxu0 %v2280
      %2376 = vmatprep.subr.bf16.mxu0 0
      %2377 = vmatpush1.bf16.msra.mxu0 %v2279
      %2378 = vmatprep.subr.bf16.mxu0 0
      %2379 = vmatpush1.bf16.msra.mxu0 %v2278
      %2380 = vmatprep.subr.bf16.mxu0 0
      %2381 = vmatpush1.bf16.msra.mxu0 %v2277
      %2382 = vmatprep.subr.bf16.mxu0 0
      %2383 = vmatpush2.bf16.msra.mxu0 %v2292
      %2384 = vmatprep.subr.bf16.mxu0 0
      %2385 = vmatpush2.bf16.msra.mxu0 %v2291
      %2386 = vmatprep.subr.bf16.mxu0 0
      %2387 = vmatpush2.bf16.msra.mxu0 %v2290
      %2388 = vmatprep.subr.bf16.mxu0 0
      %2389 = vmatpush2.bf16.msra.mxu0 %v2289
      %2390 = vmatprep.subr.bf16.mxu0 0
      %2391 = vmatpush2.bf16.msra.mxu0 %v2288
      %2392 = vmatprep.subr.bf16.mxu0 0
      %2393 = vmatpush2.bf16.msra.mxu0 %v2287
      %2394 = vmatprep.subr.bf16.mxu0 0
      %2395 = vmatpush2.bf16.msra.mxu0 %v2286
      %2396 = vmatprep.subr.bf16.mxu0 0
      %2397 = vmatpush2.bf16.msra.mxu0 %v2285
      %2398 = vmatprep.mubr.bf16.mxu0 %v2061
      %2399 = vmatmul.mubr.bf16.gmra.mxu0 %v2060
      %v2400 = vpop.f32.mrf.mxu0
      %v2401 = vadd.f32 %v2360, %v2400
      %v2402 = vpop.f32.mrf.mxu0
      %v2403 = vpop.f32.mrf.mxu0
      %v2404 = vadd.f32 %v2363, %v2403
      %v2405 = vpop.f32.mrf.mxu0
      %2406 = vdwg.mxu0
      %v2407 = vadd.f32 %v1747, %v2401
      %v2408 = vadd.f32 %v1748, %v2404
      %2409 = vst [vmem:[%s570] sm:$0xff] %v2407
      %2410 = vst [vmem:[%s570 + $0x8] sm:$0xff] %v2408
      %s2411 = smul.u32 2, %s33
      %p2412 = scmp.lt.s32.totalorder %s32, 1
      %s2413 = scalar_select %p2412, %s32, 1
      %p2414 = scmp.lt.s32.totalorder %s2411, 3
      %s2415 = scalar_select %p2414, %s2411, 3
      %s2416 = smul.addr %s2413, 4
      %s2417 = sadd.s32 %s2415, %s2416
      %s2418 = smul.addr %s2417, 8
      %s2419 = scalar_lea.vmem %s17, %s2418
      // Predicated region
      $region89: #{lm_transformer_forward.3} parent=87 // pred_check
        %p2420 = pneg %p422
      $region90: #{lm_transformer_forward.3} parent=87 // pred_check_branch
        %2422 = sbr.rel (%p2420) target = $region92
      $region91: #{lm_transformer_forward.3} parent=87 // pred_region
        %s2423 = smul.u32 2, %s33
      $region92: #{lm_transformer_forward.3} parent=87 // pred_fallthru
        _
    $region88: #{lm_transformer_forward.3} parent=5 // pred_fallthru
      _
    %p2424 = scmp.le.s32.totalorder 2, %s23
    // Predicated region
    $region93: #{lm_transformer_forward.3} parent=5 // pred_check
      %p2425 = pneg %p2424
    $region94: #{lm_transformer_forward.3} parent=5 // pred_check_branch
      %2427 = sbr.rel (%p2425) target = $region96
    $region95: #{lm_transformer_forward.3} parent=5 // pred_region
      %s2428 = ssub.s32 %s23, 2
      // Predicated region
      $region97: #{lm_transformer_forward.3} parent=95 // pred_check
        %p2429 = pneg %p428
      $region98: #{lm_transformer_forward.3} parent=95 // pred_check_branch
        %2431 = sbr.rel (%p2429) target = $region100
      $region99: #{lm_transformer_forward.3} parent=95 // pred_region
        %s2432 = smul.u32 2, %s35
        %p2433 = scmp.lt.s32.totalorder %s34, 1
        %s2434 = scalar_select %p2433, %s34, 1
        %p2435 = scmp.lt.s32.totalorder %s2432, 3
        %s2436 = scalar_select %p2435, %s2432, 3
        %s2437 = smul.addr %s2434, 4
        %s2438 = sadd.s32 %s2436, %s2437
        %s2439 = smul.addr %s2438, 8
        %s2440 = scalar_lea.vmem %s17, %s2439
      $region100: #{lm_transformer_forward.3} parent=95 // pred_fallthru
        _
    $region96: #{lm_transformer_forward.3} parent=5 // pred_fallthru
      _
  $region6: #{lm_transformer_forward.3} parent=0 // loop_footer
    %s27 = sadd.s32 1, %s23
  $region7: #{lm_transformer_forward.3} parent=0 // loop_footer_branch
    %22 = sbr.rel target = $region3
  $region8: #{lm_transformer_forward.3} parent=0 // loop_exit
    _

</llo_original>
